<compile_context>
chip_gen: v5e
topology: v5e:2x2
jax: 0.10.0
libtpu: 0.0.40
codegen_flags: <defaults>
</compile_context>

<pallas_src>
import functools

import numpy as np
import jax
import jax.numpy as jnp
from jax.experimental import pallas as pl
from jax.experimental.pallas import tpu as pltpu


_TB_MAX = 256  # upper bound on images per grid step


def _choose_tb(batch):
    # Multiple of 8 (sublane-aligned row slices).  Prefer >= 2 grid steps so
    # dimension_semantics=("parallel",) can use both v7x TensorCores.
    half = -(-batch // 2)
    tb = -(-half // 8) * 8
    return int(max(8, min(_TB_MAX, tb)))


# --------------------------------------------------------------------------
# Static index/mask tables that fold the conv taps (and the pool's column
# offset dj) into dense matmul weight matrices.  Built once with numpy.
# --------------------------------------------------------------------------

def _build_conv1_tables():
    # A[kh, rw*14+jj, dj*128 + pw*10 + c] = w1[c, 0, kh, kw]
    #   with kw = 2*(jj - pw) + rw - dj  (valid iff 0 <= kw < 5)
    idx = np.zeros((5, 28, 256), np.int32)
    msk = np.zeros((5, 28, 256), np.float32)
    for kh in range(5):
        for rw in range(2):
            for jj in range(14):
                for dj in range(2):
                    for pw in range(12):
                        kw = 2 * (jj - pw) + rw - dj
                        if 0 <= kw < 5:
                            for c in range(10):
                                col = dj * 128 + pw * 10 + c
                                idx[kh, rw * 14 + jj, col] = c * 25 + kh * 5 + kw
                                msk[kh, rw * 14 + jj, col] = 1.0
    return idx, msk


def _build_conv2_tables():
    # B[kh2, pw*10 + c, ow*20 + c2] = w2[c2, c, kh2, kw2]
    #   with kw2 = pw - ow  (valid iff 0 <= kw2 < 3)
    idx = np.zeros((3, 120, 200), np.int32)
    msk = np.zeros((3, 120, 200), np.float32)
    for kh2 in range(3):
        for pw in range(12):
            for ow in range(10):
                kw2 = pw - ow
                if 0 <= kw2 < 3:
                    for c in range(10):
                        for c2 in range(20):
                            idx[kh2, pw * 10 + c, ow * 20 + c2] = (
                                c2 * 90 + c * 9 + kh2 * 3 + kw2)
                            msk[kh2, pw * 10 + c, ow * 20 + c2] = 1.0
    return idx, msk


_A_IDX, _A_MSK = _build_conv1_tables()
_B_IDX, _B_MSK = _build_conv2_tables()


# --------------------------------------------------------------------------
# One-time weight preparation (hoisted out of the forward path).
# --------------------------------------------------------------------------

def prepare_weights(params, dtype=jnp.bfloat16):
    w1, b1, w2, b2, wf1, bf1, wf2, bf2 = params

    # conv1 folded taps (5, 28, 256); merge the two pool row offsets into one
    # (6, 28, 512) matrix per row tap m = di + kh:
    #   a2[m, :, 0:256]   = a[m]   (di=0 branch, kh=m,   zero at m=5)
    #   a2[m, :, 256:512] = a[m-1] (di=1 branch, kh=m-1, zero at m=0)
    a_mat = w1.reshape(-1)[_A_IDX] * _A_MSK
    zero = jnp.zeros((1, 28, 256), a_mat.dtype)
    a2 = jnp.concatenate([jnp.concatenate([a_mat, zero], axis=0),
                          jnp.concatenate([zero, a_mat], axis=0)], axis=2)

    w2m = w2.reshape(-1)[_B_IDX] * _B_MSK                 # (3, 120, 200)

    # fc1 rows permuted from PyTorch (c2, oh, ow) flatten order to (oh, ow, c2)
    wf1p = wf1.reshape(20, 10, 10, 500).transpose(1, 2, 0, 3).reshape(10, 200, 500)

    return (a2.astype(dtype),
            jnp.tile(b1, 12).reshape(1, 120).astype(jnp.float32),   # col = pw*10+c
            w2m.astype(dtype),
            jnp.tile(b2, 10).reshape(1, 200).astype(jnp.float32),   # col = ow*20+c2
            wf1p.astype(dtype),
            bf1.reshape(1, 500).astype(jnp.float32),
            wf2.astype(dtype),
            bf2.reshape(1, 10).astype(jnp.float32))


# --------------------------------------------------------------------------
# Fused Pallas kernel: one grid step processes TB images end-to-end.
#
# Input image block layout (built by the wrapper, zero HBM expansion):
#   x[(rh*14 + i)*TB + b, rw*14 + jj] = img[b, 2i+rh, 2jj+rw]
# Activation layouts inside the kernel (rows are position-major, batch-minor):
#   h1[ph*TB + b, pw*10 + c ]  pooled conv1 output (12x12x10)
#   h2[oh*TB + b, ow*20 + c2]  conv2 output        (10x10x20)
# --------------------------------------------------------------------------

def convnet_kernel(x_ref, a2_ref, b1_ref, w2m_ref, b2_ref, wf1_ref, bf1_ref,
                   wf2_ref, bf2_ref, o_ref, *, tb):
    x = x_ref[0]                                          # (28*tb, 28) bf16

    # ---- conv1 (+ bias + ReLU + 2x2 maxpool): 6 MXU pushes, pool row
    #      offsets live in the left/right 256-column halves of a2 ----
    acc = None
    for m in range(6):                                    # m = di + kh
        rh, qh = m % 2, m // 2
        s = (rh * 14 + qh) * tb
        t = jnp.dot(x[s:s + 12 * tb, :], a2_ref[m],
                    preferred_element_type=jnp.float32)   # (12*tb, 512) f32
        acc = t if acc is None else acc + t
    pooled = jnp.maximum(
        jnp.maximum(acc[:, 0:120], acc[:, 128:248]),      # di=0, dj=0/1
        jnp.maximum(acc[:, 256:376], acc[:, 384:504]))    # di=1, dj=0/1
    # relu(max_k(conv_k) + b) == maxpool(relu(conv + b)): shared bias, relu monotone
    h1 = jnp.maximum(pooled + b1_ref[...], 0.0)           # (12*tb, 120) f32
    h1b = h1.astype(jnp.bfloat16)

    # ---- conv2 + ReLU: row taps kh2 via slices, (kw2, cin) folded in w2m ----
    acc2 = None
    for kh2 in range(3):
        t = jnp.dot(h1b[kh2 * tb:(kh2 + 10) * tb, :], w2m_ref[kh2],
                    preferred_element_type=jnp.float32)   # (10*tb, 200)
        acc2 = t if acc2 is None else acc2 + t
    h2 = jnp.maximum(acc2 + b2_ref[...], 0.0)             # (10*tb, 200) f32
    h2b = h2.astype(jnp.bfloat16)

    # ---- fc1 + ReLU: contract over oh by accumulation; wf1 rows were
    #      pre-permuted so no activation transpose / flatten is needed ----
    accf = None
    for oh in range(10):
        t = jnp.dot(h2b[oh * tb:(oh + 1) * tb, :], wf1_ref[oh],
                    preferred_element_type=jnp.float32)   # (tb, 500)
        accf = t if accf is None else accf + t
    z1 = jnp.maximum(accf + bf1_ref[...], 0.0)            # (tb, 500) f32
    z1b = z1.astype(jnp.bfloat16)

    # ---- fc2 + log_softmax (f32) ----
    logits = jnp.dot(z1b, wf2_ref[...],
                     preferred_element_type=jnp.float32) + bf2_ref[...]
    mx = jnp.max(logits, axis=1, keepdims=True)
    lse = mx + jnp.log(jnp.sum(jnp.exp(logits - mx), axis=1, keepdims=True))
    o_ref[0] = logits - lse                               # (tb, 10)


# --------------------------------------------------------------------------
# Wrapper (params must already be prepared by prepare_weights)
# --------------------------------------------------------------------------

def convnet_forward(x, prep):
    a2, b1r, w2m, b2r, wf1p, bf1r, wf2b, bf2r = prep
    B = x.shape[0]
    tb = _choose_tb(B)
    G = pl.cdiv(B, tb)
    Bp = G * tb

    # ---- input: space-to-depth (both axes) + batch-block with batch-minor
    #      rows.  Pure permutation -> zero HBM expansion; cast to bf16. ----
    img = x[:, 0]                                         # (B, 28, 28)
    if Bp != B:
        img = jnp.concatenate(
            [img, jnp.zeros((Bp - B, 28, 28), img.dtype)], axis=0)
    sd = img.reshape(Bp, 14, 2, 14, 2).transpose(0, 2, 1, 4, 3)
    sd = sd.reshape(Bp, 28, 28)                           # [b, rh*14+i, rw*14+j]
    xb = sd.reshape(G, tb, 28, 28).transpose(0, 2, 1, 3)
    xb = xb.reshape(G, 28 * tb, 28).astype(jnp.bfloat16)  # [g, m*TB+b, n]

    kernel = functools.partial(convnet_kernel, tb=tb)
    out = pl.pallas_call(
        kernel,
        out_shape=jax.ShapeDtypeStruct((G, tb, 10), jnp.float32),
        grid=(G,),
        in_specs=[
            pl.BlockSpec((1, 28 * tb, 28), lambda g: (g, 0, 0)),
            pl.BlockSpec((6, 28, 512), lambda g: (0, 0, 0)),
            pl.BlockSpec((1, 120), lambda g: (0, 0)),
            pl.BlockSpec((3, 120, 200), lambda g: (0, 0, 0)),
            pl.BlockSpec((1, 200), lambda g: (0, 0)),
            pl.BlockSpec((10, 200, 500), lambda g: (0, 0, 0)),
            pl.BlockSpec((1, 500), lambda g: (0, 0)),
            pl.BlockSpec((500, 10), lambda g: (0, 0)),
            pl.BlockSpec((1, 10), lambda g: (0, 0)),
        ],
        out_specs=pl.BlockSpec((1, tb, 10), lambda g: (g, 0, 0)),
        compiler_params=pltpu.CompilerParams(
            dimension_semantics=("parallel",),
            vmem_limit_bytes=48 * 1024 * 1024,
        ),
    )(xb, a2, b1r, w2m, b2r, wf1p, bf1r, wf2b, bf2r)

    return out.reshape(Bp, 10)[:B]


# --------------------------------------------------------------------------
# Pure-JAX reference (mirrors the PyTorch module) + synthetic params
# --------------------------------------------------------------------------

def convnet_reference(x, params):
    w1, b1, w2, b2, wf1, bf1, wf2, bf2 = params
    B = x.shape[0]
    dn = ('NCHW', 'OIHW', 'NCHW')
    y = jax.lax.conv_general_dilated(x, w1, (1, 1), 'VALID',
                                     dimension_numbers=dn)
    y = jnp.maximum(y + b1[None, :, None, None], 0.0)     # (B, 10, 24, 24)
    y = y.reshape(B, 10, 12, 2, 12, 2).max(axis=(3, 5))   # (B, 10, 12, 12)
    y = jax.lax.conv_general_dilated(y, w2, (1, 1), 'VALID',
                                     dimension_numbers=dn)
    y = jnp.maximum(y + b2[None, :, None, None], 0.0)     # (B, 20, 10, 10)
    flat = y.reshape(B, 2000)
    z = jnp.maximum(flat @ wf1 + bf1, 0.0)
    logits = z @ wf2 + bf2
    return jax.nn.log_softmax(logits, axis=1)


def init_params(key):
    ks = jax.random.split(key, 8)
    w1 = jax.random.normal(ks[0], (10, 1, 5, 5), jnp.float32) * 0.1   # conv1.w
    b1 = jax.random.normal(ks[1], (10,), jnp.float32) * 0.1           # conv1.b
    w2 = jax.random.normal(ks[2], (20, 10, 3, 3), jnp.float32) * 0.1  # conv2.w
    b2 = jax.random.normal(ks[3], (20,), jnp.float32) * 0.1           # conv2.b
    wf1 = jax.random.normal(ks[4], (2000, 500), jnp.float32) * 0.02   # fc1 (in,out)
    bf1 = jax.random.normal(ks[5], (500,), jnp.float32) * 0.02
    wf2 = jax.random.normal(ks[6], (500, 10), jnp.float32) * 0.05     # fc2 (in,out)
    bf2 = jax.random.normal(ks[7], (10,), jnp.float32) * 0.05
    return (w1, b1, w2, b2, wf1, bf1, wf2, bf2)


if __name__ == "__main__":
    key = jax.random.PRNGKey(0)
    pkey, xkey = jax.random.split(key)
    params = init_params(pkey)
    # 28x28 input is forced by fc1's 20*10*10 input dim; small batch = 2.
    x = jax.random.normal(xkey, (2, 1, 28, 28), jnp.float32)

    prep = prepare_weights(params)          # one-time weight prep (hoisted)
    fwd = jax.jit(convnet_forward)

    out = fwd(x, prep)
    out = jax.block_until_ready(out)

    ref = convnet_reference(x, params)
    assert out.shape == (2, 10)
    assert bool(jnp.all(jnp.isfinite(out)))
    # bf16 matmul operands (f32 accumulation) -> slightly looser tolerance
    # than exact-f32 equivalence.
    max_err = float(jnp.max(jnp.abs(out - ref)))
    assert bool(jnp.allclose(out, ref, atol=2.5e-2, rtol=2.5e-2)), max_err
    print("KERNEL_OK")
</pallas_src>

<mosaic_0001>
module attributes {stable_mosaic.version = 11 : i64} {
  func.func @convnet_kernel(%arg0: i32, %arg1: memref<1x224x28xbf16, #tpu.memory_space<vmem>>, %arg2: memref<6x28x512xbf16, #tpu.memory_space<vmem>>, %arg3: memref<1x120xf32, #tpu.memory_space<vmem>>, %arg4: memref<3x120x200xbf16, #tpu.memory_space<vmem>>, %arg5: memref<1x200xf32, #tpu.memory_space<vmem>>, %arg6: memref<10x200x500xbf16, #tpu.memory_space<vmem>>, %arg7: memref<1x500xf32, #tpu.memory_space<vmem>>, %arg8: memref<500x10xbf16, #tpu.memory_space<vmem>>, %arg9: memref<1x10xf32, #tpu.memory_space<vmem>>, %arg10: memref<1x8x10xf32, #tpu.memory_space<vmem>>) attributes {dimension_semantics = [#tpu.dimension_semantics<parallel>], iteration_bounds = array<i64: 1>, scalar_prefetch = 0 : i64, scratch_operands = 0 : i64, tpu.core_type = #tpu.core_type<tc>, window_params = [{transform_indices = @transform_0, window_bounds = array<i64: 1, 224, 28>}, {pipeline_mode = #tpu.pipeline_mode<synchronous>, transform_indices = @transform_1, window_bounds = array<i64: 6, 28, 512>}, {pipeline_mode = #tpu.pipeline_mode<synchronous>, transform_indices = @transform_2, window_bounds = array<i64: 1, 120>}, {pipeline_mode = #tpu.pipeline_mode<synchronous>, transform_indices = @transform_3, window_bounds = array<i64: 3, 120, 200>}, {pipeline_mode = #tpu.pipeline_mode<synchronous>, transform_indices = @transform_4, window_bounds = array<i64: 1, 200>}, {pipeline_mode = #tpu.pipeline_mode<synchronous>, transform_indices = @transform_5, window_bounds = array<i64: 10, 200, 500>}, {pipeline_mode = #tpu.pipeline_mode<synchronous>, transform_indices = @transform_6, window_bounds = array<i64: 1, 500>}, {pipeline_mode = #tpu.pipeline_mode<synchronous>, transform_indices = @transform_7, window_bounds = array<i64: 500, 10>}, {pipeline_mode = #tpu.pipeline_mode<synchronous>, transform_indices = @transform_8, window_bounds = array<i64: 1, 10>}, {transform_indices = @transform_9, window_bounds = array<i64: 1, 8, 10>}]} {
    %c0 = arith.constant 0 : index
    %c0_0 = arith.constant 0 : index
    %c0_1 = arith.constant 0 : index
    %0 = vector.load %arg1[%c0, %c0_0, %c0_1] : memref<1x224x28xbf16, #tpu.memory_space<vmem>>, vector<1x224x28xbf16>
    %1 = vector.shape_cast %0 : vector<1x224x28xbf16> to vector<224x28xbf16>
    %2 = vector.extract_strided_slice %1 {offsets = [0, 0], sizes = [96, 28], strides = [1, 1]} : vector<224x28xbf16> to vector<96x28xbf16>
    %c0_2 = arith.constant 0 : index
    %c0_3 = arith.constant 0 : index
    %c0_4 = arith.constant 0 : index
    %3 = vector.load %arg2[%c0_2, %c0_3, %c0_4] : memref<6x28x512xbf16, #tpu.memory_space<vmem>>, vector<1x28x512xbf16>
    %4 = vector.shape_cast %3 : vector<1x28x512xbf16> to vector<28x512xbf16>
    %cst = arith.constant dense<0.000000e+00> : vector<96x512xf32>
    %5 = tpu.matmul %2, %4, %cst {dimension_numbers = #tpu.dot_dimension_numbers<[1], [0], [0], [1], [0, 0, 1, 1], [], []>} : vector<96x28xbf16>, vector<28x512xbf16>, vector<96x512xf32> -> vector<96x512xf32>
    %6 = vector.extract_strided_slice %1 {offsets = [112, 0], sizes = [96, 28], strides = [1, 1]} : vector<224x28xbf16> to vector<96x28xbf16>
    %c1 = arith.constant 1 : index
    %c0_5 = arith.constant 0 : index
    %c0_6 = arith.constant 0 : index
    %7 = vector.load %arg2[%c1, %c0_5, %c0_6] : memref<6x28x512xbf16, #tpu.memory_space<vmem>>, vector<1x28x512xbf16>
    %8 = vector.shape_cast %7 : vector<1x28x512xbf16> to vector<28x512xbf16>
    %cst_7 = arith.constant dense<0.000000e+00> : vector<96x512xf32>
    %9 = tpu.matmul %6, %8, %cst_7 {dimension_numbers = #tpu.dot_dimension_numbers<[1], [0], [0], [1], [0, 0, 1, 1], [], []>} : vector<96x28xbf16>, vector<28x512xbf16>, vector<96x512xf32> -> vector<96x512xf32>
    %10 = arith.addf %5, %9 : vector<96x512xf32>
    %11 = vector.extract_strided_slice %1 {offsets = [8, 0], sizes = [96, 28], strides = [1, 1]} : vector<224x28xbf16> to vector<96x28xbf16>
    %c2 = arith.constant 2 : index
    %c0_8 = arith.constant 0 : index
    %c0_9 = arith.constant 0 : index
    %12 = vector.load %arg2[%c2, %c0_8, %c0_9] : memref<6x28x512xbf16, #tpu.memory_space<vmem>>, vector<1x28x512xbf16>
    %13 = vector.shape_cast %12 : vector<1x28x512xbf16> to vector<28x512xbf16>
    %cst_10 = arith.constant dense<0.000000e+00> : vector<96x512xf32>
    %14 = tpu.matmul %11, %13, %cst_10 {dimension_numbers = #tpu.dot_dimension_numbers<[1], [0], [0], [1], [0, 0, 1, 1], [], []>} : vector<96x28xbf16>, vector<28x512xbf16>, vector<96x512xf32> -> vector<96x512xf32>
    %15 = arith.addf %10, %14 : vector<96x512xf32>
    %16 = vector.extract_strided_slice %1 {offsets = [120, 0], sizes = [96, 28], strides = [1, 1]} : vector<224x28xbf16> to vector<96x28xbf16>
    %c3 = arith.constant 3 : index
    %c0_11 = arith.constant 0 : index
    %c0_12 = arith.constant 0 : index
    %17 = vector.load %arg2[%c3, %c0_11, %c0_12] : memref<6x28x512xbf16, #tpu.memory_space<vmem>>, vector<1x28x512xbf16>
    %18 = vector.shape_cast %17 : vector<1x28x512xbf16> to vector<28x512xbf16>
    %cst_13 = arith.constant dense<0.000000e+00> : vector<96x512xf32>
    %19 = tpu.matmul %16, %18, %cst_13 {dimension_numbers = #tpu.dot_dimension_numbers<[1], [0], [0], [1], [0, 0, 1, 1], [], []>} : vector<96x28xbf16>, vector<28x512xbf16>, vector<96x512xf32> -> vector<96x512xf32>
    %20 = arith.addf %15, %19 : vector<96x512xf32>
    %21 = vector.extract_strided_slice %1 {offsets = [16, 0], sizes = [96, 28], strides = [1, 1]} : vector<224x28xbf16> to vector<96x28xbf16>
    %c4 = arith.constant 4 : index
    %c0_14 = arith.constant 0 : index
    %c0_15 = arith.constant 0 : index
    %22 = vector.load %arg2[%c4, %c0_14, %c0_15] : memref<6x28x512xbf16, #tpu.memory_space<vmem>>, vector<1x28x512xbf16>
    %23 = vector.shape_cast %22 : vector<1x28x512xbf16> to vector<28x512xbf16>
    %cst_16 = arith.constant dense<0.000000e+00> : vector<96x512xf32>
    %24 = tpu.matmul %21, %23, %cst_16 {dimension_numbers = #tpu.dot_dimension_numbers<[1], [0], [0], [1], [0, 0, 1, 1], [], []>} : vector<96x28xbf16>, vector<28x512xbf16>, vector<96x512xf32> -> vector<96x512xf32>
    %25 = arith.addf %20, %24 : vector<96x512xf32>
    %26 = vector.extract_strided_slice %1 {offsets = [128, 0], sizes = [96, 28], strides = [1, 1]} : vector<224x28xbf16> to vector<96x28xbf16>
    %c5 = arith.constant 5 : index
    %c0_17 = arith.constant 0 : index
    %c0_18 = arith.constant 0 : index
    %27 = vector.load %arg2[%c5, %c0_17, %c0_18] : memref<6x28x512xbf16, #tpu.memory_space<vmem>>, vector<1x28x512xbf16>
    %28 = vector.shape_cast %27 : vector<1x28x512xbf16> to vector<28x512xbf16>
    %cst_19 = arith.constant dense<0.000000e+00> : vector<96x512xf32>
    %29 = tpu.matmul %26, %28, %cst_19 {dimension_numbers = #tpu.dot_dimension_numbers<[1], [0], [0], [1], [0, 0, 1, 1], [], []>} : vector<96x28xbf16>, vector<28x512xbf16>, vector<96x512xf32> -> vector<96x512xf32>
    %30 = arith.addf %25, %29 : vector<96x512xf32>
    %31 = vector.extract_strided_slice %30 {offsets = [0, 0], sizes = [96, 120], strides = [1, 1]} : vector<96x512xf32> to vector<96x120xf32>
    %32 = vector.extract_strided_slice %30 {offsets = [0, 128], sizes = [96, 120], strides = [1, 1]} : vector<96x512xf32> to vector<96x120xf32>
    %33 = arith.maximumf %31, %32 : vector<96x120xf32>
    %34 = vector.extract_strided_slice %30 {offsets = [0, 256], sizes = [96, 120], strides = [1, 1]} : vector<96x512xf32> to vector<96x120xf32>
    %35 = vector.extract_strided_slice %30 {offsets = [0, 384], sizes = [96, 120], strides = [1, 1]} : vector<96x512xf32> to vector<96x120xf32>
    %36 = arith.maximumf %34, %35 : vector<96x120xf32>
    %37 = arith.maximumf %33, %36 : vector<96x120xf32>
    %c0_20 = arith.constant 0 : index
    %c0_21 = arith.constant 0 : index
    %38 = vector.load %arg3[%c0_20, %c0_21] : memref<1x120xf32, #tpu.memory_space<vmem>>, vector<1x120xf32>
    %39 = vector.broadcast %38 : vector<1x120xf32> to vector<96x120xf32>
    %40 = arith.addf %37, %39 : vector<96x120xf32>
    %cst_22 = arith.constant 0.000000e+00 : f32
    %41 = vector.broadcast %cst_22 : f32 to vector<96x120xf32>
    %42 = arith.maximumf %40, %41 : vector<96x120xf32>
    %43 = arith.truncf %42 : vector<96x120xf32> to vector<96x120xbf16>
    %44 = vector.extract_strided_slice %43 {offsets = [0, 0], sizes = [80, 120], strides = [1, 1]} : vector<96x120xbf16> to vector<80x120xbf16>
    %c0_23 = arith.constant 0 : index
    %c0_24 = arith.constant 0 : index
    %c0_25 = arith.constant 0 : index
    %45 = vector.load %arg4[%c0_23, %c0_24, %c0_25] : memref<3x120x200xbf16, #tpu.memory_space<vmem>>, vector<1x120x200xbf16>
    %46 = vector.shape_cast %45 : vector<1x120x200xbf16> to vector<120x200xbf16>
    %cst_26 = arith.constant dense<0.000000e+00> : vector<80x200xf32>
    %47 = tpu.matmul %44, %46, %cst_26 {dimension_numbers = #tpu.dot_dimension_numbers<[1], [0], [0], [1], [0, 0, 1, 1], [], []>} : vector<80x120xbf16>, vector<120x200xbf16>, vector<80x200xf32> -> vector<80x200xf32>
    %48 = vector.extract_strided_slice %43 {offsets = [8, 0], sizes = [80, 120], strides = [1, 1]} : vector<96x120xbf16> to vector<80x120xbf16>
    %c1_27 = arith.constant 1 : index
    %c0_28 = arith.constant 0 : index
    %c0_29 = arith.constant 0 : index
    %49 = vector.load %arg4[%c1_27, %c0_28, %c0_29] : memref<3x120x200xbf16, #tpu.memory_space<vmem>>, vector<1x120x200xbf16>
    %50 = vector.shape_cast %49 : vector<1x120x200xbf16> to vector<120x200xbf16>
    %cst_30 = arith.constant dense<0.000000e+00> : vector<80x200xf32>
    %51 = tpu.matmul %48, %50, %cst_30 {dimension_numbers = #tpu.dot_dimension_numbers<[1], [0], [0], [1], [0, 0, 1, 1], [], []>} : vector<80x120xbf16>, vector<120x200xbf16>, vector<80x200xf32> -> vector<80x200xf32>
    %52 = arith.addf %47, %51 : vector<80x200xf32>
    %53 = vector.extract_strided_slice %43 {offsets = [16, 0], sizes = [80, 120], strides = [1, 1]} : vector<96x120xbf16> to vector<80x120xbf16>
    %c2_31 = arith.constant 2 : index
    %c0_32 = arith.constant 0 : index
    %c0_33 = arith.constant 0 : index
    %54 = vector.load %arg4[%c2_31, %c0_32, %c0_33] : memref<3x120x200xbf16, #tpu.memory_space<vmem>>, vector<1x120x200xbf16>
    %55 = vector.shape_cast %54 : vector<1x120x200xbf16> to vector<120x200xbf16>
    %cst_34 = arith.constant dense<0.000000e+00> : vector<80x200xf32>
    %56 = tpu.matmul %53, %55, %cst_34 {dimension_numbers = #tpu.dot_dimension_numbers<[1], [0], [0], [1], [0, 0, 1, 1], [], []>} : vector<80x120xbf16>, vector<120x200xbf16>, vector<80x200xf32> -> vector<80x200xf32>
    %57 = arith.addf %52, %56 : vector<80x200xf32>
    %c0_35 = arith.constant 0 : index
    %c0_36 = arith.constant 0 : index
    %58 = vector.load %arg5[%c0_35, %c0_36] : memref<1x200xf32, #tpu.memory_space<vmem>>, vector<1x200xf32>
    %59 = vector.broadcast %58 : vector<1x200xf32> to vector<80x200xf32>
    %60 = arith.addf %57, %59 : vector<80x200xf32>
    %cst_37 = arith.constant 0.000000e+00 : f32
    %61 = vector.broadcast %cst_37 : f32 to vector<80x200xf32>
    %62 = arith.maximumf %60, %61 : vector<80x200xf32>
    %63 = arith.truncf %62 : vector<80x200xf32> to vector<80x200xbf16>
    %64 = vector.extract_strided_slice %63 {offsets = [0, 0], sizes = [8, 200], strides = [1, 1]} : vector<80x200xbf16> to vector<8x200xbf16>
    %c0_38 = arith.constant 0 : index
    %c0_39 = arith.constant 0 : index
    %c0_40 = arith.constant 0 : index
    %65 = vector.load %arg6[%c0_38, %c0_39, %c0_40] : memref<10x200x500xbf16, #tpu.memory_space<vmem>>, vector<1x200x500xbf16>
    %66 = vector.shape_cast %65 : vector<1x200x500xbf16> to vector<200x500xbf16>
    %cst_41 = arith.constant dense<0.000000e+00> : vector<8x500xf32>
    %67 = tpu.matmul %64, %66, %cst_41 {dimension_numbers = #tpu.dot_dimension_numbers<[1], [0], [0], [1], [0, 0, 1, 1], [], []>} : vector<8x200xbf16>, vector<200x500xbf16>, vector<8x500xf32> -> vector<8x500xf32>
    %68 = vector.extract_strided_slice %63 {offsets = [8, 0], sizes = [8, 200], strides = [1, 1]} : vector<80x200xbf16> to vector<8x200xbf16>
    %c1_42 = arith.constant 1 : index
    %c0_43 = arith.constant 0 : index
    %c0_44 = arith.constant 0 : index
    %69 = vector.load %arg6[%c1_42, %c0_43, %c0_44] : memref<10x200x500xbf16, #tpu.memory_space<vmem>>, vector<1x200x500xbf16>
    %70 = vector.shape_cast %69 : vector<1x200x500xbf16> to vector<200x500xbf16>
    %cst_45 = arith.constant dense<0.000000e+00> : vector<8x500xf32>
    %71 = tpu.matmul %68, %70, %cst_45 {dimension_numbers = #tpu.dot_dimension_numbers<[1], [0], [0], [1], [0, 0, 1, 1], [], []>} : vector<8x200xbf16>, vector<200x500xbf16>, vector<8x500xf32> -> vector<8x500xf32>
    %72 = arith.addf %67, %71 : vector<8x500xf32>
    %73 = vector.extract_strided_slice %63 {offsets = [16, 0], sizes = [8, 200], strides = [1, 1]} : vector<80x200xbf16> to vector<8x200xbf16>
    %c2_46 = arith.constant 2 : index
    %c0_47 = arith.constant 0 : index
    %c0_48 = arith.constant 0 : index
    %74 = vector.load %arg6[%c2_46, %c0_47, %c0_48] : memref<10x200x500xbf16, #tpu.memory_space<vmem>>, vector<1x200x500xbf16>
    %75 = vector.shape_cast %74 : vector<1x200x500xbf16> to vector<200x500xbf16>
    %cst_49 = arith.constant dense<0.000000e+00> : vector<8x500xf32>
    %76 = tpu.matmul %73, %75, %cst_49 {dimension_numbers = #tpu.dot_dimension_numbers<[1], [0], [0], [1], [0, 0, 1, 1], [], []>} : vector<8x200xbf16>, vector<200x500xbf16>, vector<8x500xf32> -> vector<8x500xf32>
    %77 = arith.addf %72, %76 : vector<8x500xf32>
    %78 = vector.extract_strided_slice %63 {offsets = [24, 0], sizes = [8, 200], strides = [1, 1]} : vector<80x200xbf16> to vector<8x200xbf16>
    %c3_50 = arith.constant 3 : index
    %c0_51 = arith.constant 0 : index
    %c0_52 = arith.constant 0 : index
    %79 = vector.load %arg6[%c3_50, %c0_51, %c0_52] : memref<10x200x500xbf16, #tpu.memory_space<vmem>>, vector<1x200x500xbf16>
    %80 = vector.shape_cast %79 : vector<1x200x500xbf16> to vector<200x500xbf16>
    %cst_53 = arith.constant dense<0.000000e+00> : vector<8x500xf32>
    %81 = tpu.matmul %78, %80, %cst_53 {dimension_numbers = #tpu.dot_dimension_numbers<[1], [0], [0], [1], [0, 0, 1, 1], [], []>} : vector<8x200xbf16>, vector<200x500xbf16>, vector<8x500xf32> -> vector<8x500xf32>
    %82 = arith.addf %77, %81 : vector<8x500xf32>
    %83 = vector.extract_strided_slice %63 {offsets = [32, 0], sizes = [8, 200], strides = [1, 1]} : vector<80x200xbf16> to vector<8x200xbf16>
    %c4_54 = arith.constant 4 : index
    %c0_55 = arith.constant 0 : index
    %c0_56 = arith.constant 0 : index
    %84 = vector.load %arg6[%c4_54, %c0_55, %c0_56] : memref<10x200x500xbf16, #tpu.memory_space<vmem>>, vector<1x200x500xbf16>
    %85 = vector.shape_cast %84 : vector<1x200x500xbf16> to vector<200x500xbf16>
    %cst_57 = arith.constant dense<0.000000e+00> : vector<8x500xf32>
    %86 = tpu.matmul %83, %85, %cst_57 {dimension_numbers = #tpu.dot_dimension_numbers<[1], [0], [0], [1], [0, 0, 1, 1], [], []>} : vector<8x200xbf16>, vector<200x500xbf16>, vector<8x500xf32> -> vector<8x500xf32>
    %87 = arith.addf %82, %86 : vector<8x500xf32>
    %88 = vector.extract_strided_slice %63 {offsets = [40, 0], sizes = [8, 200], strides = [1, 1]} : vector<80x200xbf16> to vector<8x200xbf16>
    %c5_58 = arith.constant 5 : index
    %c0_59 = arith.constant 0 : index
    %c0_60 = arith.constant 0 : index
    %89 = vector.load %arg6[%c5_58, %c0_59, %c0_60] : memref<10x200x500xbf16, #tpu.memory_space<vmem>>, vector<1x200x500xbf16>
    %90 = vector.shape_cast %89 : vector<1x200x500xbf16> to vector<200x500xbf16>
    %cst_61 = arith.constant dense<0.000000e+00> : vector<8x500xf32>
    %91 = tpu.matmul %88, %90, %cst_61 {dimension_numbers = #tpu.dot_dimension_numbers<[1], [0], [0], [1], [0, 0, 1, 1], [], []>} : vector<8x200xbf16>, vector<200x500xbf16>, vector<8x500xf32> -> vector<8x500xf32>
    %92 = arith.addf %87, %91 : vector<8x500xf32>
    %93 = vector.extract_strided_slice %63 {offsets = [48, 0], sizes = [8, 200], strides = [1, 1]} : vector<80x200xbf16> to vector<8x200xbf16>
    %c6 = arith.constant 6 : index
    %c0_62 = arith.constant 0 : index
    %c0_63 = arith.constant 0 : index
    %94 = vector.load %arg6[%c6, %c0_62, %c0_63] : memref<10x200x500xbf16, #tpu.memory_space<vmem>>, vector<1x200x500xbf16>
    %95 = vector.shape_cast %94 : vector<1x200x500xbf16> to vector<200x500xbf16>
    %cst_64 = arith.constant dense<0.000000e+00> : vector<8x500xf32>
    %96 = tpu.matmul %93, %95, %cst_64 {dimension_numbers = #tpu.dot_dimension_numbers<[1], [0], [0], [1], [0, 0, 1, 1], [], []>} : vector<8x200xbf16>, vector<200x500xbf16>, vector<8x500xf32> -> vector<8x500xf32>
    %97 = arith.addf %92, %96 : vector<8x500xf32>
    %98 = vector.extract_strided_slice %63 {offsets = [56, 0], sizes = [8, 200], strides = [1, 1]} : vector<80x200xbf16> to vector<8x200xbf16>
    %c7 = arith.constant 7 : index
    %c0_65 = arith.constant 0 : index
    %c0_66 = arith.constant 0 : index
    %99 = vector.load %arg6[%c7, %c0_65, %c0_66] : memref<10x200x500xbf16, #tpu.memory_space<vmem>>, vector<1x200x500xbf16>
    %100 = vector.shape_cast %99 : vector<1x200x500xbf16> to vector<200x500xbf16>
    %cst_67 = arith.constant dense<0.000000e+00> : vector<8x500xf32>
    %101 = tpu.matmul %98, %100, %cst_67 {dimension_numbers = #tpu.dot_dimension_numbers<[1], [0], [0], [1], [0, 0, 1, 1], [], []>} : vector<8x200xbf16>, vector<200x500xbf16>, vector<8x500xf32> -> vector<8x500xf32>
    %102 = arith.addf %97, %101 : vector<8x500xf32>
    %103 = vector.extract_strided_slice %63 {offsets = [64, 0], sizes = [8, 200], strides = [1, 1]} : vector<80x200xbf16> to vector<8x200xbf16>
    %c8 = arith.constant 8 : index
    %c0_68 = arith.constant 0 : index
    %c0_69 = arith.constant 0 : index
    %104 = vector.load %arg6[%c8, %c0_68, %c0_69] : memref<10x200x500xbf16, #tpu.memory_space<vmem>>, vector<1x200x500xbf16>
    %105 = vector.shape_cast %104 : vector<1x200x500xbf16> to vector<200x500xbf16>
    %cst_70 = arith.constant dense<0.000000e+00> : vector<8x500xf32>
    %106 = tpu.matmul %103, %105, %cst_70 {dimension_numbers = #tpu.dot_dimension_numbers<[1], [0], [0], [1], [0, 0, 1, 1], [], []>} : vector<8x200xbf16>, vector<200x500xbf16>, vector<8x500xf32> -> vector<8x500xf32>
    %107 = arith.addf %102, %106 : vector<8x500xf32>
    %108 = vector.extract_strided_slice %63 {offsets = [72, 0], sizes = [8, 200], strides = [1, 1]} : vector<80x200xbf16> to vector<8x200xbf16>
    %c9 = arith.constant 9 : index
    %c0_71 = arith.constant 0 : index
    %c0_72 = arith.constant 0 : index
    %109 = vector.load %arg6[%c9, %c0_71, %c0_72] : memref<10x200x500xbf16, #tpu.memory_space<vmem>>, vector<1x200x500xbf16>
    %110 = vector.shape_cast %109 : vector<1x200x500xbf16> to vector<200x500xbf16>
    %cst_73 = arith.constant dense<0.000000e+00> : vector<8x500xf32>
    %111 = tpu.matmul %108, %110, %cst_73 {dimension_numbers = #tpu.dot_dimension_numbers<[1], [0], [0], [1], [0, 0, 1, 1], [], []>} : vector<8x200xbf16>, vector<200x500xbf16>, vector<8x500xf32> -> vector<8x500xf32>
    %112 = arith.addf %107, %111 : vector<8x500xf32>
    %c0_74 = arith.constant 0 : index
    %c0_75 = arith.constant 0 : index
    %113 = vector.load %arg7[%c0_74, %c0_75] : memref<1x500xf32, #tpu.memory_space<vmem>>, vector<1x500xf32>
    %114 = vector.broadcast %113 : vector<1x500xf32> to vector<8x500xf32>
    %115 = arith.addf %112, %114 : vector<8x500xf32>
    %cst_76 = arith.constant 0.000000e+00 : f32
    %116 = vector.broadcast %cst_76 : f32 to vector<8x500xf32>
    %117 = arith.maximumf %115, %116 : vector<8x500xf32>
    %118 = arith.truncf %117 : vector<8x500xf32> to vector<8x500xbf16>
    %c0_77 = arith.constant 0 : index
    %c0_78 = arith.constant 0 : index
    %119 = vector.load %arg8[%c0_77, %c0_78] : memref<500x10xbf16, #tpu.memory_space<vmem>>, vector<500x10xbf16>
    %cst_79 = arith.constant dense<0.000000e+00> : vector<8x10xf32>
    %120 = tpu.matmul %118, %119, %cst_79 {dimension_numbers = #tpu.dot_dimension_numbers<[1], [0], [0], [1], [0, 0, 1, 1], [], []>} : vector<8x500xbf16>, vector<500x10xbf16>, vector<8x10xf32> -> vector<8x10xf32>
    %c0_80 = arith.constant 0 : index
    %c0_81 = arith.constant 0 : index
    %121 = vector.load %arg9[%c0_80, %c0_81] : memref<1x10xf32, #tpu.memory_space<vmem>>, vector<1x10xf32>
    %122 = vector.broadcast %121 : vector<1x10xf32> to vector<8x10xf32>
    %123 = arith.addf %120, %122 : vector<8x10xf32>
    %cst_82 = arith.constant dense<0xFF800000> : vector<8xf32>
    %124 = vector.multi_reduction <maximumf>, %123, %cst_82 [1] : vector<8x10xf32> to vector<8xf32>
    %125 = vector.shape_cast %124 : vector<8xf32> to vector<8x1xf32>
    %126 = vector.broadcast %125 : vector<8x1xf32> to vector<8x10xf32>
    %127 = arith.subf %123, %126 : vector<8x10xf32>
    %128 = math.exp %127 : vector<8x10xf32>
    %cst_83 = arith.constant dense<0.000000e+00> : vector<8xf32>
    %129 = vector.multi_reduction <add>, %128, %cst_83 [1] : vector<8x10xf32> to vector<8xf32>
    %130 = vector.shape_cast %129 : vector<8xf32> to vector<8x1xf32>
    %131 = math.log %130 : vector<8x1xf32>
    %132 = arith.addf %125, %131 : vector<8x1xf32>
    %133 = vector.broadcast %132 : vector<8x1xf32> to vector<8x10xf32>
    %134 = arith.subf %123, %133 : vector<8x10xf32>
    %c0_84 = arith.constant 0 : index
    %c0_85 = arith.constant 0 : index
    %c0_86 = arith.constant 0 : index
    %135 = vector.load %arg10[%c0_84, %c0_85, %c0_86] : memref<1x8x10xf32, #tpu.memory_space<vmem>>, vector<1x8x10xf32>
    %136 = vector.shape_cast %135 : vector<1x8x10xf32> to vector<8x10xf32>
    %137 = vector.shape_cast %134 : vector<8x10xf32> to vector<1x8x10xf32>
    tpu.vector_store %arg10[%c0_84, %c0_85, %c0_86], %137 {strides = array<i32>} : memref<1x8x10xf32, #tpu.memory_space<vmem>>, vector<1x8x10xf32>,
    return
  }
  func.func @transform_0(%arg0: i32) -> (i32, i32, i32) {
    %c0_i32 = arith.constant 0 : i32
    %c0_i32_0 = arith.constant 0 : i32
    %c0_i32_1 = arith.constant 0 : i32
    return %arg0, %c0_i32, %c0_i32_0 : i32, i32, i32
  }
  func.func @transform_1(%arg0: i32) -> (i32, i32, i32) {
    %c0_i32 = arith.constant 0 : i32
    %c0_i32_0 = arith.constant 0 : i32
    %c0_i32_1 = arith.constant 0 : i32
    %c0_i32_2 = arith.constant 0 : i32
    return %c0_i32, %c0_i32_0, %c0_i32_1 : i32, i32, i32
  }
  func.func @transform_2(%arg0: i32) -> (i32, i32) {
    %c0_i32 = arith.constant 0 : i32
    %c0_i32_0 = arith.constant 0 : i32
    %c0_i32_1 = arith.constant 0 : i32
    return %c0_i32, %c0_i32_0 : i32, i32
  }
  func.func @transform_3(%arg0: i32) -> (i32, i32, i32) {
    %c0_i32 = arith.constant 0 : i32
    %c0_i32_0 = arith.constant 0 : i32
    %c0_i32_1 = arith.constant 0 : i32
    %c0_i32_2 = arith.constant 0 : i32
    return %c0_i32, %c0_i32_0, %c0_i32_1 : i32, i32, i32
  }
  func.func @transform_4(%arg0: i32) -> (i32, i32) {
    %c0_i32 = arith.constant 0 : i32
    %c0_i32_0 = arith.constant 0 : i32
    %c0_i32_1 = arith.constant 0 : i32
    return %c0_i32, %c0_i32_0 : i32, i32
  }
  func.func @transform_5(%arg0: i32) -> (i32, i32, i32) {
    %c0_i32 = arith.constant 0 : i32
    %c0_i32_0 = arith.constant 0 : i32
    %c0_i32_1 = arith.constant 0 : i32
    %c0_i32_2 = arith.constant 0 : i32
    return %c0_i32, %c0_i32_0, %c0_i32_1 : i32, i32, i32
  }
  func.func @transform_6(%arg0: i32) -> (i32, i32) {
    %c0_i32 = arith.constant 0 : i32
    %c0_i32_0 = arith.constant 0 : i32
    %c0_i32_1 = arith.constant 0 : i32
    return %c0_i32, %c0_i32_0 : i32, i32
  }
  func.func @transform_7(%arg0: i32) -> (i32, i32) {
    %c0_i32 = arith.constant 0 : i32
    %c0_i32_0 = arith.constant 0 : i32
    %c0_i32_1 = arith.constant 0 : i32
    return %c0_i32, %c0_i32_0 : i32, i32
  }
  func.func @transform_8(%arg0: i32) -> (i32, i32) {
    %c0_i32 = arith.constant 0 : i32
    %c0_i32_0 = arith.constant 0 : i32
    %c0_i32_1 = arith.constant 0 : i32
    return %c0_i32, %c0_i32_0 : i32, i32
  }
  func.func @transform_9(%arg0: i32) -> (i32, i32, i32) {
    %c0_i32 = arith.constant 0 : i32
    %c0_i32_0 = arith.constant 0 : i32
    %c0_i32_1 = arith.constant 0 : i32
    return %arg0, %c0_i32, %c0_i32_0 : i32, i32, i32
  }
}

</mosaic_0001>

<llo_original>
// kernel: convnet_forward.1
$region0: #{convnet_forward.1}
  #allocation0 [shape = 'u32[]', space=smem, size = 0x4, offset = 0x4, fixed_abs, tag = 'smem constant byte address 0x4 - core index']
  #allocation1 [shape = 'u32[72,128]{1,0:T(1,128)}', space=vmem, size = 0x9000, scoped, tag = 'internal scratch']
  %s0 = inlined_call_operand.vmem [shape: bf16[1,224,28], index: 0, kind: input, shape index: {}]
  %s1 = inlined_call_operand.hbm [shape: bf16[6,28,512], index: 1, kind: input, shape index: {}]
  %s2 = inlined_call_operand.vmem [shape: f32[1,120], index: 2, kind: input, shape index: {}]
  %s3 = inlined_call_operand.vmem [shape: bf16[3,120,200], index: 3, kind: input, shape index: {}]
  %s4 = inlined_call_operand.vmem [shape: f32[1,200], index: 4, kind: input, shape index: {}]
  %s5 = inlined_call_operand.vmem [shape: bf16[10,200,500], index: 5, kind: input, shape index: {}]
  %s6 = inlined_call_operand.vmem [shape: f32[1,500], index: 6, kind: input, shape index: {}]
  %s7 = inlined_call_operand.vmem [shape: bf16[500,10], index: 7, kind: input, shape index: {}]
  %s8 = inlined_call_operand.vmem [shape: f32[1,10], index: 8, kind: input, shape index: {}]
  %s9 = inlined_call_operand.vmem [shape: f32[1,8,10], index: 9, kind: output, shape index: {}]
  %s10 = sld [smem:[#allocation0]]
  $region50: #{convnet_forward.1} parent=0
    _
  %s12 = ssub.s32 1, %s10
  %s13 = scalar_select 0, %s12, %s10
  $region1: #{convnet_forward.1} parent=0
    #allocation2 [shape = 'u8[196608]{0}', space=vmem, size = 0x30000, scoped, tag = 'input window, operand 1, single buffered']
    #allocation3 [shape = 's32[1]{0}', space=sflag, size = 0x4, scoped, tag = 'scoped memory for convnet_forward.1']
    %14 = vsyncpa [#allocation3], 0
    // Predicated region
    $region2: #{convnet_forward.1} parent=1 // pred_check
      _
    $region3: #{convnet_forward.1} parent=1 // pred_check_branch
      %16 = sbr.rel (0) target = $region5
    $region4: #{convnet_forward.1} parent=1 // pred_region
      _
    $region5: #{convnet_forward.1} parent=1 // pred_fallthru
      _
    // Predicated region
    $region6: #{convnet_forward.1} parent=1 // pred_check
      _
    $region7: #{convnet_forward.1} parent=1 // pred_check_branch
      %18 = sbr.rel (0) target = $region9
    $region8: #{convnet_forward.1} parent=1 // pred_region
      %20 = vsyncadd [#allocation3], 0
      %s21 = sshll.u32 %s1, 4
      %s22 = int_to_ptr.hbm [resolvable:$true] %s21
      %s23 = sshll.u32 [#allocation2], 4
      %s24 = int_to_ptr.vmem [resolvable:$true] %s23
      %29 = dma.hbm_to_vmem [thread:$0]  %s22, 6144, %s24, [#allocation3], 256, 256, 16
    $region9: #{convnet_forward.1} parent=1 // pred_fallthru
      _
    // Predicated region
    $region10: #{convnet_forward.1} parent=1 // pred_check
      _
    $region11: #{convnet_forward.1} parent=1 // pred_check_branch
      %31 = sbr.rel (0) target = $region13
    $region12: #{convnet_forward.1} parent=1 // pred_region
      _
    $region13: #{convnet_forward.1} parent=1 // pred_fallthru
      _
    // Predicated region
    $region14: #{convnet_forward.1} parent=1 // pred_check
      _
    $region15: #{convnet_forward.1} parent=1 // pred_check_branch
      %33 = sbr.rel (0) target = $region17
    $region16: #{convnet_forward.1} parent=1 // pred_region
      _
    $region17: #{convnet_forward.1} parent=1 // pred_fallthru
      _
    // Predicated region
    $region18: #{convnet_forward.1} parent=1 // pred_check
      _
    $region19: #{convnet_forward.1} parent=1 // pred_check_branch
      %35 = sbr.rel (0) target = $region21
    $region20: #{convnet_forward.1} parent=1 // pred_region
      _
    $region21: #{convnet_forward.1} parent=1 // pred_fallthru
      _
    // Predicated region
    $region22: #{convnet_forward.1} parent=1 // pred_check
      _
    $region23: #{convnet_forward.1} parent=1 // pred_check_branch
      %37 = sbr.rel (0) target = $region25
    $region24: #{convnet_forward.1} parent=1 // pred_region
      _
    $region25: #{convnet_forward.1} parent=1 // pred_fallthru
      _
    // Predicated region
    $region26: #{convnet_forward.1} parent=1 // pred_check
      _
    $region27: #{convnet_forward.1} parent=1 // pred_check_branch
      %39 = sbr.rel (0) target = $region29
    $region28: #{convnet_forward.1} parent=1 // pred_region
      _
    $region29: #{convnet_forward.1} parent=1 // pred_fallthru
      _
    // Predicated region
    $region30: #{convnet_forward.1} parent=1 // pred_check
      _
    $region31: #{convnet_forward.1} parent=1 // pred_check_branch
      %41 = sbr.rel (0) target = $region33
    $region32: #{convnet_forward.1} parent=1 // pred_region
      _
    $region33: #{convnet_forward.1} parent=1 // pred_fallthru
      _
    // Predicated region
    $region34: #{convnet_forward.1} parent=1 // pred_check
      _
    $region35: #{convnet_forward.1} parent=1 // pred_check_branch
      %43 = sbr.rel (0) target = $region37
    $region36: #{convnet_forward.1} parent=1 // pred_region
      _
    $region37: #{convnet_forward.1} parent=1 // pred_fallthru
      _
    // Predicated region
    $region38: #{convnet_forward.1} parent=1 // pred_check
      _
    $region39: #{convnet_forward.1} parent=1 // pred_check_branch
      %45 = sbr.rel (0) target = $region41
    $region40: #{convnet_forward.1} parent=1 // pred_region
      %47 = dma.done [#allocation3], 6144
    $region41: #{convnet_forward.1} parent=1 // pred_fallthru
      _
    %v49 = vld [vmem:[%s0] sm:$0xf]
    %v50 = vld [vmem:[%s0 + $0x4] sm:$0xf]
    %v51 = vld [vmem:[%s0 + $0x8] sm:$0xf]
    %v52 = vld [vmem:[%s0 + $0xc] sm:$0xf]
    %v53 = vld [vmem:[%s0 + $0x10] sm:$0xf]
    %v54 = vld [vmem:[%s0 + $0x14] sm:$0xf]
    %v55 = vld [vmem:[%s0 + $0x18] sm:$0xf]
    %v56 = vld [vmem:[%s0 + $0x1c] sm:$0xf]
    %v57 = vld [vmem:[%s0 + $0x20] sm:$0xf]
    %v58 = vld [vmem:[%s0 + $0x24] sm:$0xf]
    %v59 = vld [vmem:[%s0 + $0x28] sm:$0xf]
    %v60 = vld [vmem:[%s0 + $0x2c] sm:$0xf]
    %v61 = vld [vmem:[%s0 + $0x30] sm:$0xf]
    %v62 = vld [vmem:[%s0 + $0x34] sm:$0xf]
    %v63 = vld [vmem:[%s0 + $0x38] sm:$0xf]
    %v64 = vld [vmem:[%s0 + $0x3c] sm:$0xf]
    %v65 = vld [vmem:[%s0 + $0x40] sm:$0xf]
    %v66 = vld [vmem:[%s0 + $0x44] sm:$0xf]
    %v67 = vld [vmem:[%s0 + $0x48] sm:$0xf]
    %v68 = vld [vmem:[%s0 + $0x4c] sm:$0xf]
    %v69 = vld [vmem:[%s0 + $0x50] sm:$0xf]
    %v70 = vld [vmem:[%s0 + $0x54] sm:$0xf]
    %v71 = vld [vmem:[%s0 + $0x58] sm:$0xf]
    %v72 = vld [vmem:[%s0 + $0x5c] sm:$0xf]
    %v73 = vld [vmem:[%s0 + $0x60] sm:$0xf]
    %v74 = vld [vmem:[%s0 + $0x64] sm:$0xf]
    %v75 = vld [vmem:[%s0 + $0x68] sm:$0xf]
    %v76 = vld [vmem:[%s0 + $0x6c] sm:$0xf]
    %v77 = vld [vmem:[#allocation2] sm:$0xff]
    %v78 = vld [vmem:[#allocation2 + $0x8] sm:$0xff]
    %v79 = vld [vmem:[#allocation2 + $0x10] sm:$0xff]
    %v80 = vld [vmem:[#allocation2 + $0x18] sm:$0xff]
    %v81 = vld [vmem:[#allocation2 + $0x20] sm:$0xff]
    %v82 = vld [vmem:[#allocation2 + $0x28] sm:$0xff]
    %v83 = vld [vmem:[#allocation2 + $0x30] sm:$0x33]
    %v84 = vld [vmem:[#allocation2 + $0x38] sm:$0x33]
    %s85 = scalar_lea.vmem [#allocation2], 64
    %v86 = vld [vmem:[%s85] sm:$0xff]
    %v87 = vld [vmem:[%s85 + $0x8] sm:$0xff]
    %v88 = vld [vmem:[%s85 + $0x10] sm:$0xff]
    %v89 = vld [vmem:[%s85 + $0x18] sm:$0xff]
    %v90 = vld [vmem:[%s85 + $0x20] sm:$0xff]
    %v91 = vld [vmem:[%s85 + $0x28] sm:$0xff]
    %v92 = vld [vmem:[%s85 + $0x30] sm:$0x33]
    %v93 = vld [vmem:[%s85 + $0x38] sm:$0x33]
    %v106 = vunpack.c.l.b16 %v63
    %v107 = vunpack.c.l.b16 %v64
    %v108 = vunpack.c.l.b16 %v65
    %v109 = vunpack.c.l.b16 %v66
    %v110 = vunpack.c.l.b16 %v67
    %v111 = vunpack.c.l.b16 %v68
    %v112 = vunpack.c.l.b16 %v69
    %v113 = vunpack.c.l.b16 %v70
    %v114 = vunpack.c.l.b16 %v71
    %v115 = vunpack.c.l.b16 %v72
    %v116 = vunpack.c.l.b16 %v73
    %v117 = vunpack.c.l.b16 %v74
    %v118 = vpack.c.b16 %v107, %v106
    %v119 = vpack.c.b16 %v109, %v108
    %v120 = vpack.c.b16 %v111, %v110
    %v121 = vpack.c.b16 %v113, %v112
    %v122 = vpack.c.b16 %v115, %v114
    %v123 = vpack.c.b16 %v117, %v116
    %v132 = vunpack.c.l.b16 %v86
    %v133 = vunpack.c.h.b16 %v86
    %v134 = vunpack.c.l.b16 %v87
    %v135 = vunpack.c.h.b16 %v87
    %v136 = vunpack.c.l.b16 %v88
    %v137 = vunpack.c.h.b16 %v88
    %v138 = vunpack.c.l.b16 %v89
    %v139 = vunpack.c.h.b16 %v89
    %v140 = vunpack.c.l.b16 %v90
    %v141 = vunpack.c.h.b16 %v90
    %v142 = vunpack.c.l.b16 %v91
    %v143 = vunpack.c.h.b16 %v91
    %v144 = vunpack.c.l.b16 %v92
    %v145 = vunpack.c.h.b16 %v92
    %v146 = vunpack.c.l.b16 %v93
    %v147 = vunpack.c.h.b16 %v93
    %v148 = vpack.c.b16 %v136, %v132
    %v149 = vpack.c.b16 %v137, %v133
    %v150 = vpack.c.b16 %v138, %v134
    %v151 = vpack.c.b16 %v139, %v135
    %v152 = vpack.c.b16 %v144, %v140
    %v153 = vpack.c.b16 %v145, %v141
    %v154 = vpack.c.b16 %v146, %v142
    %v155 = vpack.c.b16 %v147, %v143
    %vm160 = vcmask 228352
    %v162 = vsel %vm160, %v118, 0
    %v165 = vsel %vm160, %v119, 0
    %v168 = vsel %vm160, %v120, 0
    %v171 = vsel %vm160, %v121, 0
    %v174 = vsel %vm160, %v122, 0
    %v177 = vsel %vm160, %v123, 0
    %vm179 = vcmask 1045504
    %v181 = vsel %vm179, %v152, 0
    %v184 = vsel %vm179, %v153, 0
    %v187 = vsel %vm179, %v154, 0
    %v190 = vsel %vm179, %v155, 0
    %192 = vmatpush.bf16.msra.mxu0 0
    %193 = vmatpush.bf16.msra.mxu0 0
    %194 = vmatpush.bf16.msra.mxu0 0
    %195 = vmatpush.bf16.msra.mxu0 0
    %196 = vmatpush.bf16.msra.mxu0 0
    %197 = vmatpush.bf16.msra.mxu0 0
    %198 = vmatpush.bf16.msra.mxu0 %v181
    %199 = vmatpush.bf16.msra.mxu0 %v148
    %200 = vmatmul.bf16.gmra.mxu0 %v162
    %v201 = vpop.f32.mrf.mxu0
    %v202 = vadd.f32 0.0, %v201
    %v203 = vpop.f32.mrf.mxu0
    %v204 = vadd.f32 0.0, %v203
    %205 = vmatmul.bf16.gmra.mxu0 %v165
    %v206 = vpop.f32.mrf.mxu0
    %v207 = vadd.f32 0.0, %v206
    %v208 = vpop.f32.mrf.mxu0
    %v209 = vadd.f32 0.0, %v208
    %210 = vmatmul.bf16.gmra.mxu0 %v168
    %v211 = vpop.f32.mrf.mxu0
    %v212 = vadd.f32 0.0, %v211
    %v213 = vpop.f32.mrf.mxu0
    %v214 = vadd.f32 0.0, %v213
    %215 = vmatmul.bf16.gmra.mxu0 %v171
    %v216 = vpop.f32.mrf.mxu0
    %v217 = vadd.f32 0.0, %v216
    %v218 = vpop.f32.mrf.mxu0
    %v219 = vadd.f32 0.0, %v218
    %220 = vmatmul.bf16.gmra.mxu0 %v174
    %v221 = vpop.f32.mrf.mxu0
    %v222 = vadd.f32 0.0, %v221
    %v223 = vpop.f32.mrf.mxu0
    %v224 = vadd.f32 0.0, %v223
    %225 = vmatmul.bf16.gmra.mxu0 %v177
    %v226 = vpop.f32.mrf.mxu0
    %v227 = vadd.f32 0.0, %v226
    %v228 = vpop.f32.mrf.mxu0
    %v229 = vadd.f32 0.0, %v228
    %230 = vdwg.mxu0
    %231 = vmatpush.bf16.msra.mxu0 0
    %232 = vmatpush.bf16.msra.mxu0 0
    %233 = vmatpush.bf16.msra.mxu0 0
    %234 = vmatpush.bf16.msra.mxu0 0
    %235 = vmatpush.bf16.msra.mxu0 0
    %236 = vmatpush.bf16.msra.mxu0 0
    %237 = vmatpush.bf16.msra.mxu0 %v184
    %238 = vmatpush.bf16.msra.mxu0 %v149
    %239 = vmatmul.bf16.gmra.mxu0 %v162
    %v240 = vpop.f32.mrf.mxu0
    %v241 = vadd.f32 0.0, %v240
    %v242 = vpop.f32.mrf.mxu0
    %v243 = vadd.f32 0.0, %v242
    %244 = vmatmul.bf16.gmra.mxu0 %v165
    %v245 = vpop.f32.mrf.mxu0
    %v246 = vadd.f32 0.0, %v245
    %v247 = vpop.f32.mrf.mxu0
    %v248 = vadd.f32 0.0, %v247
    %249 = vmatmul.bf16.gmra.mxu0 %v168
    %v250 = vpop.f32.mrf.mxu0
    %v251 = vadd.f32 0.0, %v250
    %v252 = vpop.f32.mrf.mxu0
    %v253 = vadd.f32 0.0, %v252
    %254 = vmatmul.bf16.gmra.mxu0 %v171
    %v255 = vpop.f32.mrf.mxu0
    %v256 = vadd.f32 0.0, %v255
    %v257 = vpop.f32.mrf.mxu0
    %v258 = vadd.f32 0.0, %v257
    %259 = vmatmul.bf16.gmra.mxu0 %v174
    %v260 = vpop.f32.mrf.mxu0
    %v261 = vadd.f32 0.0, %v260
    %v262 = vpop.f32.mrf.mxu0
    %v263 = vadd.f32 0.0, %v262
    %264 = vmatmul.bf16.gmra.mxu0 %v177
    %v265 = vpop.f32.mrf.mxu0
    %v266 = vadd.f32 0.0, %v265
    %v267 = vpop.f32.mrf.mxu0
    %v268 = vadd.f32 0.0, %v267
    %269 = vdwg.mxu0
    %270 = vmatpush.bf16.msra.mxu0 0
    %271 = vmatpush.bf16.msra.mxu0 0
    %272 = vmatpush.bf16.msra.mxu0 0
    %273 = vmatpush.bf16.msra.mxu0 0
    %274 = vmatpush.bf16.msra.mxu0 0
    %275 = vmatpush.bf16.msra.mxu0 0
    %276 = vmatpush.bf16.msra.mxu0 %v187
    %277 = vmatpush.bf16.msra.mxu0 %v150
    %278 = vmatmul.bf16.gmra.mxu0 %v162
    %v279 = vpop.f32.mrf.mxu0
    %v280 = vadd.f32 0.0, %v279
    %v281 = vpop.f32.mrf.mxu0
    %v282 = vadd.f32 0.0, %v281
    %283 = vmatmul.bf16.gmra.mxu0 %v165
    %v284 = vpop.f32.mrf.mxu0
    %v285 = vadd.f32 0.0, %v284
    %v286 = vpop.f32.mrf.mxu0
    %v287 = vadd.f32 0.0, %v286
    %288 = vmatmul.bf16.gmra.mxu0 %v168
    %v289 = vpop.f32.mrf.mxu0
    %v290 = vadd.f32 0.0, %v289
    %v291 = vpop.f32.mrf.mxu0
    %v292 = vadd.f32 0.0, %v291
    %293 = vmatmul.bf16.gmra.mxu0 %v171
    %v294 = vpop.f32.mrf.mxu0
    %v295 = vadd.f32 0.0, %v294
    %v296 = vpop.f32.mrf.mxu0
    %v297 = vadd.f32 0.0, %v296
    %298 = vmatmul.bf16.gmra.mxu0 %v174
    %v299 = vpop.f32.mrf.mxu0
    %v300 = vadd.f32 0.0, %v299
    %v301 = vpop.f32.mrf.mxu0
    %v302 = vadd.f32 0.0, %v301
    %303 = vmatmul.bf16.gmra.mxu0 %v177
    %v304 = vpop.f32.mrf.mxu0
    %v305 = vadd.f32 0.0, %v304
    %v306 = vpop.f32.mrf.mxu0
    %v307 = vadd.f32 0.0, %v306
    %308 = vdwg.mxu0
    %309 = vmatpush.bf16.msra.mxu0 0
    %310 = vmatpush.bf16.msra.mxu0 0
    %311 = vmatpush.bf16.msra.mxu0 0
    %312 = vmatpush.bf16.msra.mxu0 0
    %313 = vmatpush.bf16.msra.mxu0 0
    %314 = vmatpush.bf16.msra.mxu0 0
    %315 = vmatpush.bf16.msra.mxu0 %v190
    %316 = vmatpush.bf16.msra.mxu0 %v151
    %317 = vmatmul.bf16.gmra.mxu0 %v162
    %v318 = vpop.f32.mrf.mxu0
    %v319 = vadd.f32 0.0, %v318
    %v320 = vpop.f32.mrf.mxu0
    %v321 = vadd.f32 0.0, %v320
    %322 = vmatmul.bf16.gmra.mxu0 %v165
    %v323 = vpop.f32.mrf.mxu0
    %v324 = vadd.f32 0.0, %v323
    %v325 = vpop.f32.mrf.mxu0
    %v326 = vadd.f32 0.0, %v325
    %327 = vmatmul.bf16.gmra.mxu0 %v168
    %v328 = vpop.f32.mrf.mxu0
    %v329 = vadd.f32 0.0, %v328
    %v330 = vpop.f32.mrf.mxu0
    %v331 = vadd.f32 0.0, %v330
    %332 = vmatmul.bf16.gmra.mxu0 %v171
    %v333 = vpop.f32.mrf.mxu0
    %v334 = vadd.f32 0.0, %v333
    %v335 = vpop.f32.mrf.mxu0
    %v336 = vadd.f32 0.0, %v335
    %337 = vmatmul.bf16.gmra.mxu0 %v174
    %v338 = vpop.f32.mrf.mxu0
    %v339 = vadd.f32 0.0, %v338
    %v340 = vpop.f32.mrf.mxu0
    %v341 = vadd.f32 0.0, %v340
    %342 = vmatmul.bf16.gmra.mxu0 %v177
    %v343 = vpop.f32.mrf.mxu0
    %v344 = vadd.f32 0.0, %v343
    %v345 = vpop.f32.mrf.mxu0
    %v346 = vadd.f32 0.0, %v345
    %347 = vdwg.mxu0
    %v360 = vunpack.c.l.b16 %v49
    %v361 = vunpack.c.l.b16 %v50
    %v362 = vunpack.c.l.b16 %v51
    %v363 = vunpack.c.l.b16 %v52
    %v364 = vunpack.c.l.b16 %v53
    %v365 = vunpack.c.l.b16 %v54
    %v366 = vunpack.c.l.b16 %v55
    %v367 = vunpack.c.l.b16 %v56
    %v368 = vunpack.c.l.b16 %v57
    %v369 = vunpack.c.l.b16 %v58
    %v370 = vunpack.c.l.b16 %v59
    %v371 = vunpack.c.l.b16 %v60
    %v372 = vpack.c.b16 %v361, %v360
    %v373 = vpack.c.b16 %v363, %v362
    %v374 = vpack.c.b16 %v365, %v364
    %v375 = vpack.c.b16 %v367, %v366
    %v376 = vpack.c.b16 %v369, %v368
    %v377 = vpack.c.b16 %v371, %v370
    %v386 = vunpack.c.l.b16 %v77
    %v387 = vunpack.c.h.b16 %v77
    %v388 = vunpack.c.l.b16 %v78
    %v389 = vunpack.c.h.b16 %v78
    %v390 = vunpack.c.l.b16 %v79
    %v391 = vunpack.c.h.b16 %v79
    %v392 = vunpack.c.l.b16 %v80
    %v393 = vunpack.c.h.b16 %v80
    %v394 = vunpack.c.l.b16 %v81
    %v395 = vunpack.c.h.b16 %v81
    %v396 = vunpack.c.l.b16 %v82
    %v397 = vunpack.c.h.b16 %v82
    %v398 = vunpack.c.l.b16 %v83
    %v399 = vunpack.c.h.b16 %v83
    %v400 = vunpack.c.l.b16 %v84
    %v401 = vunpack.c.h.b16 %v84
    %v402 = vpack.c.b16 %v390, %v386
    %v403 = vpack.c.b16 %v391, %v387
    %v404 = vpack.c.b16 %v392, %v388
    %v405 = vpack.c.b16 %v393, %v389
    %v406 = vpack.c.b16 %v398, %v394
    %v407 = vpack.c.b16 %v399, %v395
    %v408 = vpack.c.b16 %v400, %v396
    %v409 = vpack.c.b16 %v401, %v397
    %v415 = vsel %vm160, %v372, 0
    %v418 = vsel %vm160, %v373, 0
    %v421 = vsel %vm160, %v374, 0
    %v424 = vsel %vm160, %v375, 0
    %v427 = vsel %vm160, %v376, 0
    %v430 = vsel %vm160, %v377, 0
    %v433 = vsel %vm179, %v406, 0
    %v436 = vsel %vm179, %v407, 0
    %v439 = vsel %vm179, %v408, 0
    %v442 = vsel %vm179, %v409, 0
    %444 = vmatpush.bf16.msra.mxu0 0
    %445 = vmatpush.bf16.msra.mxu0 0
    %446 = vmatpush.bf16.msra.mxu0 0
    %447 = vmatpush.bf16.msra.mxu0 0
    %448 = vmatpush.bf16.msra.mxu0 0
    %449 = vmatpush.bf16.msra.mxu0 0
    %450 = vmatpush.bf16.msra.mxu0 %v433
    %451 = vmatpush.bf16.msra.mxu0 %v402
    %452 = vmatmul.bf16.gmra.mxu0 %v415
    %v453 = vpop.f32.mrf.mxu0
    %v454 = vadd.f32 %v202, %v453
    %v455 = vpop.f32.mrf.mxu0
    %v456 = vadd.f32 %v204, %v455
    %457 = vmatmul.bf16.gmra.mxu0 %v418
    %v458 = vpop.f32.mrf.mxu0
    %v459 = vadd.f32 %v207, %v458
    %v460 = vpop.f32.mrf.mxu0
    %v461 = vadd.f32 %v209, %v460
    %462 = vmatmul.bf16.gmra.mxu0 %v421
    %v463 = vpop.f32.mrf.mxu0
    %v464 = vadd.f32 %v212, %v463
    %v465 = vpop.f32.mrf.mxu0
    %v466 = vadd.f32 %v214, %v465
    %467 = vmatmul.bf16.gmra.mxu0 %v424
    %v468 = vpop.f32.mrf.mxu0
    %v469 = vadd.f32 %v217, %v468
    %v470 = vpop.f32.mrf.mxu0
    %v471 = vadd.f32 %v219, %v470
    %472 = vmatmul.bf16.gmra.mxu0 %v427
    %v473 = vpop.f32.mrf.mxu0
    %v474 = vadd.f32 %v222, %v473
    %v475 = vpop.f32.mrf.mxu0
    %v476 = vadd.f32 %v224, %v475
    %477 = vmatmul.bf16.gmra.mxu0 %v430
    %v478 = vpop.f32.mrf.mxu0
    %v479 = vadd.f32 %v227, %v478
    %v480 = vpop.f32.mrf.mxu0
    %v481 = vadd.f32 %v229, %v480
    %482 = vdwg.mxu0
    %483 = vmatpush.bf16.msra.mxu0 0
    %484 = vmatpush.bf16.msra.mxu0 0
    %485 = vmatpush.bf16.msra.mxu0 0
    %486 = vmatpush.bf16.msra.mxu0 0
    %487 = vmatpush.bf16.msra.mxu0 0
    %488 = vmatpush.bf16.msra.mxu0 0
    %489 = vmatpush.bf16.msra.mxu0 %v436
    %490 = vmatpush.bf16.msra.mxu0 %v403
    %491 = vmatmul.bf16.gmra.mxu0 %v415
    %v492 = vpop.f32.mrf.mxu0
    %v493 = vadd.f32 %v241, %v492
    %v494 = vpop.f32.mrf.mxu0
    %v495 = vadd.f32 %v243, %v494
    %496 = vmatmul.bf16.gmra.mxu0 %v418
    %v497 = vpop.f32.mrf.mxu0
    %v498 = vadd.f32 %v246, %v497
    %v499 = vpop.f32.mrf.mxu0
    %v500 = vadd.f32 %v248, %v499
    %501 = vmatmul.bf16.gmra.mxu0 %v421
    %v502 = vpop.f32.mrf.mxu0
    %v503 = vadd.f32 %v251, %v502
    %v504 = vpop.f32.mrf.mxu0
    %v505 = vadd.f32 %v253, %v504
    %506 = vmatmul.bf16.gmra.mxu0 %v424
    %v507 = vpop.f32.mrf.mxu0
    %v508 = vadd.f32 %v256, %v507
    %v509 = vpop.f32.mrf.mxu0
    %v510 = vadd.f32 %v258, %v509
    %511 = vmatmul.bf16.gmra.mxu0 %v427
    %v512 = vpop.f32.mrf.mxu0
    %v513 = vadd.f32 %v261, %v512
    %v514 = vpop.f32.mrf.mxu0
    %v515 = vadd.f32 %v263, %v514
    %516 = vmatmul.bf16.gmra.mxu0 %v430
    %v517 = vpop.f32.mrf.mxu0
    %v518 = vadd.f32 %v266, %v517
    %v519 = vpop.f32.mrf.mxu0
    %v520 = vadd.f32 %v268, %v519
    %521 = vdwg.mxu0
    %522 = vmatpush.bf16.msra.mxu0 0
    %523 = vmatpush.bf16.msra.mxu0 0
    %524 = vmatpush.bf16.msra.mxu0 0
    %525 = vmatpush.bf16.msra.mxu0 0
    %526 = vmatpush.bf16.msra.mxu0 0
    %527 = vmatpush.bf16.msra.mxu0 0
    %528 = vmatpush.bf16.msra.mxu0 %v439
    %529 = vmatpush.bf16.msra.mxu0 %v404
    %530 = vmatmul.bf16.gmra.mxu0 %v415
    %v531 = vpop.f32.mrf.mxu0
    %v532 = vadd.f32 %v280, %v531
    %v533 = vpop.f32.mrf.mxu0
    %v534 = vadd.f32 %v282, %v533
    %535 = vmatmul.bf16.gmra.mxu0 %v418
    %v536 = vpop.f32.mrf.mxu0
    %v537 = vadd.f32 %v285, %v536
    %v538 = vpop.f32.mrf.mxu0
    %v539 = vadd.f32 %v287, %v538
    %540 = vmatmul.bf16.gmra.mxu0 %v421
    %v541 = vpop.f32.mrf.mxu0
    %v542 = vadd.f32 %v290, %v541
    %v543 = vpop.f32.mrf.mxu0
    %v544 = vadd.f32 %v292, %v543
    %545 = vmatmul.bf16.gmra.mxu0 %v424
    %v546 = vpop.f32.mrf.mxu0
    %v547 = vadd.f32 %v295, %v546
    %v548 = vpop.f32.mrf.mxu0
    %v549 = vadd.f32 %v297, %v548
    %550 = vmatmul.bf16.gmra.mxu0 %v427
    %v551 = vpop.f32.mrf.mxu0
    %v552 = vadd.f32 %v300, %v551
    %v553 = vpop.f32.mrf.mxu0
    %v554 = vadd.f32 %v302, %v553
    %555 = vmatmul.bf16.gmra.mxu0 %v430
    %v556 = vpop.f32.mrf.mxu0
    %v557 = vadd.f32 %v305, %v556
    %v558 = vpop.f32.mrf.mxu0
    %v559 = vadd.f32 %v307, %v558
    %560 = vdwg.mxu0
    %561 = vmatpush.bf16.msra.mxu0 0
    %562 = vmatpush.bf16.msra.mxu0 0
    %563 = vmatpush.bf16.msra.mxu0 0
    %564 = vmatpush.bf16.msra.mxu0 0
    %565 = vmatpush.bf16.msra.mxu0 0
    %566 = vmatpush.bf16.msra.mxu0 0
    %567 = vmatpush.bf16.msra.mxu0 %v442
    %568 = vmatpush.bf16.msra.mxu0 %v405
    %569 = vmatmul.bf16.gmra.mxu0 %v415
    %v570 = vpop.f32.mrf.mxu0
    %v571 = vadd.f32 %v319, %v570
    %v572 = vpop.f32.mrf.mxu0
    %v573 = vadd.f32 %v321, %v572
    %574 = vmatmul.bf16.gmra.mxu0 %v418
    %v575 = vpop.f32.mrf.mxu0
    %v576 = vadd.f32 %v324, %v575
    %v577 = vpop.f32.mrf.mxu0
    %v578 = vadd.f32 %v326, %v577
    %579 = vmatmul.bf16.gmra.mxu0 %v421
    %v580 = vpop.f32.mrf.mxu0
    %v581 = vadd.f32 %v329, %v580
    %v582 = vpop.f32.mrf.mxu0
    %v583 = vadd.f32 %v331, %v582
    %584 = vmatmul.bf16.gmra.mxu0 %v424
    %v585 = vpop.f32.mrf.mxu0
    %v586 = vadd.f32 %v334, %v585
    %v587 = vpop.f32.mrf.mxu0
    %v588 = vadd.f32 %v336, %v587
    %589 = vmatmul.bf16.gmra.mxu0 %v427
    %v590 = vpop.f32.mrf.mxu0
    %v591 = vadd.f32 %v339, %v590
    %v592 = vpop.f32.mrf.mxu0
    %v593 = vadd.f32 %v341, %v592
    %594 = vmatmul.bf16.gmra.mxu0 %v430
    %v595 = vpop.f32.mrf.mxu0
    %v596 = vadd.f32 %v344, %v595
    %v597 = vpop.f32.mrf.mxu0
    %v598 = vadd.f32 %v346, %v597
    %599 = vdwg.mxu0
    %s600 = scalar_lea.vmem [#allocation2], 128
    %v601 = vld [vmem:[%s600] sm:$0xff]
    %v602 = vld [vmem:[%s600 + $0x8] sm:$0xff]
    %v603 = vld [vmem:[%s600 + $0x10] sm:$0xff]
    %v604 = vld [vmem:[%s600 + $0x18] sm:$0xff]
    %v605 = vld [vmem:[%s600 + $0x20] sm:$0xff]
    %v606 = vld [vmem:[%s600 + $0x28] sm:$0xff]
    %v607 = vld [vmem:[%s600 + $0x30] sm:$0x33]
    %v608 = vld [vmem:[%s600 + $0x38] sm:$0x33]
    %v610 = vunpack.c.l.b16 %v61
    %v611 = vpack.c.b16 %v362, %v361
    %v612 = vpack.c.b16 %v364, %v363
    %v613 = vpack.c.b16 %v366, %v365
    %v614 = vpack.c.b16 %v368, %v367
    %v615 = vpack.c.b16 %v370, %v369
    %v616 = vpack.c.b16 %v610, %v371
    %v625 = vunpack.c.l.b16 %v601
    %v626 = vunpack.c.h.b16 %v601
    %v627 = vunpack.c.l.b16 %v602
    %v628 = vunpack.c.h.b16 %v602
    %v629 = vunpack.c.l.b16 %v603
    %v630 = vunpack.c.h.b16 %v603
    %v631 = vunpack.c.l.b16 %v604
    %v632 = vunpack.c.h.b16 %v604
    %v633 = vunpack.c.l.b16 %v605
    %v634 = vunpack.c.h.b16 %v605
    %v635 = vunpack.c.l.b16 %v606
    %v636 = vunpack.c.h.b16 %v606
    %v637 = vunpack.c.l.b16 %v607
    %v638 = vunpack.c.h.b16 %v607
    %v639 = vunpack.c.l.b16 %v608
    %v640 = vunpack.c.h.b16 %v608
    %v641 = vpack.c.b16 %v629, %v625
    %v642 = vpack.c.b16 %v630, %v626
    %v643 = vpack.c.b16 %v631, %v627
    %v644 = vpack.c.b16 %v632, %v628
    %v645 = vpack.c.b16 %v637, %v633
    %v646 = vpack.c.b16 %v638, %v634
    %v647 = vpack.c.b16 %v639, %v635
    %v648 = vpack.c.b16 %v640, %v636
    %v654 = vsel %vm160, %v611, 0
    %v657 = vsel %vm160, %v612, 0
    %v660 = vsel %vm160, %v613, 0
    %v663 = vsel %vm160, %v614, 0
    %v666 = vsel %vm160, %v615, 0
    %v669 = vsel %vm160, %v616, 0
    %v672 = vsel %vm179, %v645, 0
    %v675 = vsel %vm179, %v646, 0
    %v678 = vsel %vm179, %v647, 0
    %v681 = vsel %vm179, %v648, 0
    %683 = vmatpush.bf16.msra.mxu0 0
    %684 = vmatpush.bf16.msra.mxu0 0
    %685 = vmatpush.bf16.msra.mxu0 0
    %686 = vmatpush.bf16.msra.mxu0 0
    %687 = vmatpush.bf16.msra.mxu0 0
    %688 = vmatpush.bf16.msra.mxu0 0
    %689 = vmatpush.bf16.msra.mxu0 %v672
    %690 = vmatpush.bf16.msra.mxu0 %v641
    %691 = vmatmul.bf16.gmra.mxu0 %v654
    %v692 = vpop.f32.mrf.mxu0
    %v693 = vadd.f32 0.0, %v692
    %v694 = vpop.f32.mrf.mxu0
    %v695 = vadd.f32 0.0, %v694
    %696 = vmatmul.bf16.gmra.mxu0 %v657
    %v697 = vpop.f32.mrf.mxu0
    %v698 = vadd.f32 0.0, %v697
    %v699 = vpop.f32.mrf.mxu0
    %v700 = vadd.f32 0.0, %v699
    %701 = vmatmul.bf16.gmra.mxu0 %v660
    %v702 = vpop.f32.mrf.mxu0
    %v703 = vadd.f32 0.0, %v702
    %v704 = vpop.f32.mrf.mxu0
    %v705 = vadd.f32 0.0, %v704
    %706 = vmatmul.bf16.gmra.mxu0 %v663
    %v707 = vpop.f32.mrf.mxu0
    %v708 = vadd.f32 0.0, %v707
    %v709 = vpop.f32.mrf.mxu0
    %v710 = vadd.f32 0.0, %v709
    %711 = vmatmul.bf16.gmra.mxu0 %v666
    %v712 = vpop.f32.mrf.mxu0
    %v713 = vadd.f32 0.0, %v712
    %v714 = vpop.f32.mrf.mxu0
    %v715 = vadd.f32 0.0, %v714
    %716 = vmatmul.bf16.gmra.mxu0 %v669
    %v717 = vpop.f32.mrf.mxu0
    %v718 = vadd.f32 0.0, %v717
    %v719 = vpop.f32.mrf.mxu0
    %v720 = vadd.f32 0.0, %v719
    %721 = vdwg.mxu0
    %722 = vmatpush.bf16.msra.mxu0 0
    %723 = vmatpush.bf16.msra.mxu0 0
    %724 = vmatpush.bf16.msra.mxu0 0
    %725 = vmatpush.bf16.msra.mxu0 0
    %726 = vmatpush.bf16.msra.mxu0 0
    %727 = vmatpush.bf16.msra.mxu0 0
    %728 = vmatpush.bf16.msra.mxu0 %v675
    %729 = vmatpush.bf16.msra.mxu0 %v642
    %730 = vmatmul.bf16.gmra.mxu0 %v654
    %v731 = vpop.f32.mrf.mxu0
    %v732 = vadd.f32 0.0, %v731
    %v733 = vpop.f32.mrf.mxu0
    %v734 = vadd.f32 0.0, %v733
    %735 = vmatmul.bf16.gmra.mxu0 %v657
    %v736 = vpop.f32.mrf.mxu0
    %v737 = vadd.f32 0.0, %v736
    %v738 = vpop.f32.mrf.mxu0
    %v739 = vadd.f32 0.0, %v738
    %740 = vmatmul.bf16.gmra.mxu0 %v660
    %v741 = vpop.f32.mrf.mxu0
    %v742 = vadd.f32 0.0, %v741
    %v743 = vpop.f32.mrf.mxu0
    %v744 = vadd.f32 0.0, %v743
    %745 = vmatmul.bf16.gmra.mxu0 %v663
    %v746 = vpop.f32.mrf.mxu0
    %v747 = vadd.f32 0.0, %v746
    %v748 = vpop.f32.mrf.mxu0
    %v749 = vadd.f32 0.0, %v748
    %750 = vmatmul.bf16.gmra.mxu0 %v666
    %v751 = vpop.f32.mrf.mxu0
    %v752 = vadd.f32 0.0, %v751
    %v753 = vpop.f32.mrf.mxu0
    %v754 = vadd.f32 0.0, %v753
    %755 = vmatmul.bf16.gmra.mxu0 %v669
    %v756 = vpop.f32.mrf.mxu0
    %v757 = vadd.f32 0.0, %v756
    %v758 = vpop.f32.mrf.mxu0
    %v759 = vadd.f32 0.0, %v758
    %760 = vdwg.mxu0
    %761 = vmatpush.bf16.msra.mxu0 0
    %762 = vmatpush.bf16.msra.mxu0 0
    %763 = vmatpush.bf16.msra.mxu0 0
    %764 = vmatpush.bf16.msra.mxu0 0
    %765 = vmatpush.bf16.msra.mxu0 0
    %766 = vmatpush.bf16.msra.mxu0 0
    %767 = vmatpush.bf16.msra.mxu0 %v678
    %768 = vmatpush.bf16.msra.mxu0 %v643
    %769 = vmatmul.bf16.gmra.mxu0 %v654
    %v770 = vpop.f32.mrf.mxu0
    %v771 = vadd.f32 0.0, %v770
    %v772 = vpop.f32.mrf.mxu0
    %v773 = vadd.f32 0.0, %v772
    %774 = vmatmul.bf16.gmra.mxu0 %v657
    %v775 = vpop.f32.mrf.mxu0
    %v776 = vadd.f32 0.0, %v775
    %v777 = vpop.f32.mrf.mxu0
    %v778 = vadd.f32 0.0, %v777
    %779 = vmatmul.bf16.gmra.mxu0 %v660
    %v780 = vpop.f32.mrf.mxu0
    %v781 = vadd.f32 0.0, %v780
    %v782 = vpop.f32.mrf.mxu0
    %v783 = vadd.f32 0.0, %v782
    %784 = vmatmul.bf16.gmra.mxu0 %v663
    %v785 = vpop.f32.mrf.mxu0
    %v786 = vadd.f32 0.0, %v785
    %v787 = vpop.f32.mrf.mxu0
    %v788 = vadd.f32 0.0, %v787
    %789 = vmatmul.bf16.gmra.mxu0 %v666
    %v790 = vpop.f32.mrf.mxu0
    %v791 = vadd.f32 0.0, %v790
    %v792 = vpop.f32.mrf.mxu0
    %v793 = vadd.f32 0.0, %v792
    %794 = vmatmul.bf16.gmra.mxu0 %v669
    %v795 = vpop.f32.mrf.mxu0
    %v796 = vadd.f32 0.0, %v795
    %v797 = vpop.f32.mrf.mxu0
    %v798 = vadd.f32 0.0, %v797
    %799 = vdwg.mxu0
    %800 = vmatpush.bf16.msra.mxu0 0
    %801 = vmatpush.bf16.msra.mxu0 0
    %802 = vmatpush.bf16.msra.mxu0 0
    %803 = vmatpush.bf16.msra.mxu0 0
    %804 = vmatpush.bf16.msra.mxu0 0
    %805 = vmatpush.bf16.msra.mxu0 0
    %806 = vmatpush.bf16.msra.mxu0 %v681
    %807 = vmatpush.bf16.msra.mxu0 %v644
    %808 = vmatmul.bf16.gmra.mxu0 %v654
    %v809 = vpop.f32.mrf.mxu0
    %v810 = vadd.f32 0.0, %v809
    %v811 = vpop.f32.mrf.mxu0
    %v812 = vadd.f32 0.0, %v811
    %813 = vmatmul.bf16.gmra.mxu0 %v657
    %v814 = vpop.f32.mrf.mxu0
    %v815 = vadd.f32 0.0, %v814
    %v816 = vpop.f32.mrf.mxu0
    %v817 = vadd.f32 0.0, %v816
    %818 = vmatmul.bf16.gmra.mxu0 %v660
    %v819 = vpop.f32.mrf.mxu0
    %v820 = vadd.f32 0.0, %v819
    %v821 = vpop.f32.mrf.mxu0
    %v822 = vadd.f32 0.0, %v821
    %823 = vmatmul.bf16.gmra.mxu0 %v663
    %v824 = vpop.f32.mrf.mxu0
    %v825 = vadd.f32 0.0, %v824
    %v826 = vpop.f32.mrf.mxu0
    %v827 = vadd.f32 0.0, %v826
    %828 = vmatmul.bf16.gmra.mxu0 %v666
    %v829 = vpop.f32.mrf.mxu0
    %v830 = vadd.f32 0.0, %v829
    %v831 = vpop.f32.mrf.mxu0
    %v832 = vadd.f32 0.0, %v831
    %833 = vmatmul.bf16.gmra.mxu0 %v669
    %v834 = vpop.f32.mrf.mxu0
    %v835 = vadd.f32 0.0, %v834
    %v836 = vpop.f32.mrf.mxu0
    %v837 = vadd.f32 0.0, %v836
    %838 = vdwg.mxu0
    %v839 = vadd.f32 %v454, %v693
    %v840 = vadd.f32 %v493, %v732
    %v841 = vadd.f32 %v532, %v771
    %v842 = vadd.f32 %v571, %v810
    %v843 = vadd.f32 %v456, %v695
    %v844 = vadd.f32 %v495, %v734
    %v845 = vadd.f32 %v534, %v773
    %v846 = vadd.f32 %v573, %v812
    %v847 = vadd.f32 %v459, %v698
    %v848 = vadd.f32 %v498, %v737
    %v849 = vadd.f32 %v537, %v776
    %v850 = vadd.f32 %v576, %v815
    %v851 = vadd.f32 %v461, %v700
    %v852 = vadd.f32 %v500, %v739
    %v853 = vadd.f32 %v539, %v778
    %v854 = vadd.f32 %v578, %v817
    %v855 = vadd.f32 %v464, %v703
    %v856 = vadd.f32 %v503, %v742
    %v857 = vadd.f32 %v542, %v781
    %v858 = vadd.f32 %v581, %v820
    %v859 = vadd.f32 %v466, %v705
    %v860 = vadd.f32 %v505, %v744
    %v861 = vadd.f32 %v544, %v783
    %v862 = vadd.f32 %v583, %v822
    %v863 = vadd.f32 %v469, %v708
    %v864 = vadd.f32 %v508, %v747
    %v865 = vadd.f32 %v547, %v786
    %v866 = vadd.f32 %v586, %v825
    %v867 = vadd.f32 %v471, %v710
    %v868 = vadd.f32 %v510, %v749
    %v869 = vadd.f32 %v549, %v788
    %v870 = vadd.f32 %v588, %v827
    %v871 = vadd.f32 %v474, %v713
    %v872 = vadd.f32 %v513, %v752
    %v873 = vadd.f32 %v552, %v791
    %v874 = vadd.f32 %v591, %v830
    %v875 = vadd.f32 %v476, %v715
    %v876 = vadd.f32 %v515, %v754
    %v877 = vadd.f32 %v554, %v793
    %v878 = vadd.f32 %v593, %v832
    %v879 = vadd.f32 %v479, %v718
    %v880 = vadd.f32 %v518, %v757
    %v881 = vadd.f32 %v557, %v796
    %v882 = vadd.f32 %v596, %v835
    %v883 = vadd.f32 %v481, %v720
    %v884 = vadd.f32 %v520, %v759
    %v885 = vadd.f32 %v559, %v798
    %v886 = vadd.f32 %v598, %v837
    %s887 = scalar_lea.vmem [#allocation2], 192
    %v888 = vld [vmem:[%s887] sm:$0xff]
    %v889 = vld [vmem:[%s887 + $0x8] sm:$0xff]
    %v890 = vld [vmem:[%s887 + $0x10] sm:$0xff]
    %v891 = vld [vmem:[%s887 + $0x18] sm:$0xff]
    %v892 = vld [vmem:[%s887 + $0x20] sm:$0xff]
    %v893 = vld [vmem:[%s887 + $0x28] sm:$0xff]
    %v894 = vld [vmem:[%s887 + $0x30] sm:$0x33]
    %v895 = vld [vmem:[%s887 + $0x38] sm:$0x33]
    %v897 = vunpack.c.l.b16 %v75
    %v898 = vpack.c.b16 %v108, %v107
    %v899 = vpack.c.b16 %v110, %v109
    %v900 = vpack.c.b16 %v112, %v111
    %v901 = vpack.c.b16 %v114, %v113
    %v902 = vpack.c.b16 %v116, %v115
    %v903 = vpack.c.b16 %v897, %v117
    %v912 = vunpack.c.l.b16 %v888
    %v913 = vunpack.c.h.b16 %v888
    %v914 = vunpack.c.l.b16 %v889
    %v915 = vunpack.c.h.b16 %v889
    %v916 = vunpack.c.l.b16 %v890
    %v917 = vunpack.c.h.b16 %v890
    %v918 = vunpack.c.l.b16 %v891
    %v919 = vunpack.c.h.b16 %v891
    %v920 = vunpack.c.l.b16 %v892
    %v921 = vunpack.c.h.b16 %v892
    %v922 = vunpack.c.l.b16 %v893
    %v923 = vunpack.c.h.b16 %v893
    %v924 = vunpack.c.l.b16 %v894
    %v925 = vunpack.c.h.b16 %v894
    %v926 = vunpack.c.l.b16 %v895
    %v927 = vunpack.c.h.b16 %v895
    %v928 = vpack.c.b16 %v916, %v912
    %v929 = vpack.c.b16 %v917, %v913
    %v930 = vpack.c.b16 %v918, %v914
    %v931 = vpack.c.b16 %v919, %v915
    %v932 = vpack.c.b16 %v924, %v920
    %v933 = vpack.c.b16 %v925, %v921
    %v934 = vpack.c.b16 %v926, %v922
    %v935 = vpack.c.b16 %v927, %v923
    %v941 = vsel %vm160, %v898, 0
    %v944 = vsel %vm160, %v899, 0
    %v947 = vsel %vm160, %v900, 0
    %v950 = vsel %vm160, %v901, 0
    %v953 = vsel %vm160, %v902, 0
    %v956 = vsel %vm160, %v903, 0
    %v959 = vsel %vm179, %v932, 0
    %v962 = vsel %vm179, %v933, 0
    %v965 = vsel %vm179, %v934, 0
    %v968 = vsel %vm179, %v935, 0
    %970 = vmatpush.bf16.msra.mxu0 0
    %971 = vmatpush.bf16.msra.mxu0 0
    %972 = vmatpush.bf16.msra.mxu0 0
    %973 = vmatpush.bf16.msra.mxu0 0
    %974 = vmatpush.bf16.msra.mxu0 0
    %975 = vmatpush.bf16.msra.mxu0 0
    %976 = vmatpush.bf16.msra.mxu0 %v959
    %977 = vmatpush.bf16.msra.mxu0 %v928
    %978 = vmatmul.bf16.gmra.mxu0 %v941
    %v979 = vpop.f32.mrf.mxu0
    %v980 = vadd.f32 0.0, %v979
    %v981 = vpop.f32.mrf.mxu0
    %v982 = vadd.f32 0.0, %v981
    %983 = vmatmul.bf16.gmra.mxu0 %v944
    %v984 = vpop.f32.mrf.mxu0
    %v985 = vadd.f32 0.0, %v984
    %v986 = vpop.f32.mrf.mxu0
    %v987 = vadd.f32 0.0, %v986
    %988 = vmatmul.bf16.gmra.mxu0 %v947
    %v989 = vpop.f32.mrf.mxu0
    %v990 = vadd.f32 0.0, %v989
    %v991 = vpop.f32.mrf.mxu0
    %v992 = vadd.f32 0.0, %v991
    %993 = vmatmul.bf16.gmra.mxu0 %v950
    %v994 = vpop.f32.mrf.mxu0
    %v995 = vadd.f32 0.0, %v994
    %v996 = vpop.f32.mrf.mxu0
    %v997 = vadd.f32 0.0, %v996
    %998 = vmatmul.bf16.gmra.mxu0 %v953
    %v999 = vpop.f32.mrf.mxu0
    %v1000 = vadd.f32 0.0, %v999
    %v1001 = vpop.f32.mrf.mxu0
    %v1002 = vadd.f32 0.0, %v1001
    %1003 = vmatmul.bf16.gmra.mxu0 %v956
    %v1004 = vpop.f32.mrf.mxu0
    %v1005 = vadd.f32 0.0, %v1004
    %v1006 = vpop.f32.mrf.mxu0
    %v1007 = vadd.f32 0.0, %v1006
    %1008 = vdwg.mxu0
    %1009 = vmatpush.bf16.msra.mxu0 0
    %1010 = vmatpush.bf16.msra.mxu0 0
    %1011 = vmatpush.bf16.msra.mxu0 0
    %1012 = vmatpush.bf16.msra.mxu0 0
    %1013 = vmatpush.bf16.msra.mxu0 0
    %1014 = vmatpush.bf16.msra.mxu0 0
    %1015 = vmatpush.bf16.msra.mxu0 %v962
    %1016 = vmatpush.bf16.msra.mxu0 %v929
    %1017 = vmatmul.bf16.gmra.mxu0 %v941
    %v1018 = vpop.f32.mrf.mxu0
    %v1019 = vadd.f32 0.0, %v1018
    %v1020 = vpop.f32.mrf.mxu0
    %v1021 = vadd.f32 0.0, %v1020
    %1022 = vmatmul.bf16.gmra.mxu0 %v944
    %v1023 = vpop.f32.mrf.mxu0
    %v1024 = vadd.f32 0.0, %v1023
    %v1025 = vpop.f32.mrf.mxu0
    %v1026 = vadd.f32 0.0, %v1025
    %1027 = vmatmul.bf16.gmra.mxu0 %v947
    %v1028 = vpop.f32.mrf.mxu0
    %v1029 = vadd.f32 0.0, %v1028
    %v1030 = vpop.f32.mrf.mxu0
    %v1031 = vadd.f32 0.0, %v1030
    %1032 = vmatmul.bf16.gmra.mxu0 %v950
    %v1033 = vpop.f32.mrf.mxu0
    %v1034 = vadd.f32 0.0, %v1033
    %v1035 = vpop.f32.mrf.mxu0
    %v1036 = vadd.f32 0.0, %v1035
    %1037 = vmatmul.bf16.gmra.mxu0 %v953
    %v1038 = vpop.f32.mrf.mxu0
    %v1039 = vadd.f32 0.0, %v1038
    %v1040 = vpop.f32.mrf.mxu0
    %v1041 = vadd.f32 0.0, %v1040
    %1042 = vmatmul.bf16.gmra.mxu0 %v956
    %v1043 = vpop.f32.mrf.mxu0
    %v1044 = vadd.f32 0.0, %v1043
    %v1045 = vpop.f32.mrf.mxu0
    %v1046 = vadd.f32 0.0, %v1045
    %1047 = vdwg.mxu0
    %1048 = vmatpush.bf16.msra.mxu0 0
    %1049 = vmatpush.bf16.msra.mxu0 0
    %1050 = vmatpush.bf16.msra.mxu0 0
    %1051 = vmatpush.bf16.msra.mxu0 0
    %1052 = vmatpush.bf16.msra.mxu0 0
    %1053 = vmatpush.bf16.msra.mxu0 0
    %1054 = vmatpush.bf16.msra.mxu0 %v965
    %1055 = vmatpush.bf16.msra.mxu0 %v930
    %1056 = vmatmul.bf16.gmra.mxu0 %v941
    %v1057 = vpop.f32.mrf.mxu0
    %v1058 = vadd.f32 0.0, %v1057
    %v1059 = vpop.f32.mrf.mxu0
    %v1060 = vadd.f32 0.0, %v1059
    %1061 = vmatmul.bf16.gmra.mxu0 %v944
    %v1062 = vpop.f32.mrf.mxu0
    %v1063 = vadd.f32 0.0, %v1062
    %v1064 = vpop.f32.mrf.mxu0
    %v1065 = vadd.f32 0.0, %v1064
    %1066 = vmatmul.bf16.gmra.mxu0 %v947
    %v1067 = vpop.f32.mrf.mxu0
    %v1068 = vadd.f32 0.0, %v1067
    %v1069 = vpop.f32.mrf.mxu0
    %v1070 = vadd.f32 0.0, %v1069
    %1071 = vmatmul.bf16.gmra.mxu0 %v950
    %v1072 = vpop.f32.mrf.mxu0
    %v1073 = vadd.f32 0.0, %v1072
    %v1074 = vpop.f32.mrf.mxu0
    %v1075 = vadd.f32 0.0, %v1074
    %1076 = vmatmul.bf16.gmra.mxu0 %v953
    %v1077 = vpop.f32.mrf.mxu0
    %v1078 = vadd.f32 0.0, %v1077
    %v1079 = vpop.f32.mrf.mxu0
    %v1080 = vadd.f32 0.0, %v1079
    %1081 = vmatmul.bf16.gmra.mxu0 %v956
    %v1082 = vpop.f32.mrf.mxu0
    %v1083 = vadd.f32 0.0, %v1082
    %v1084 = vpop.f32.mrf.mxu0
    %v1085 = vadd.f32 0.0, %v1084
    %1086 = vdwg.mxu0
    %1087 = vmatpush.bf16.msra.mxu0 0
    %1088 = vmatpush.bf16.msra.mxu0 0
    %1089 = vmatpush.bf16.msra.mxu0 0
    %1090 = vmatpush.bf16.msra.mxu0 0
    %1091 = vmatpush.bf16.msra.mxu0 0
    %1092 = vmatpush.bf16.msra.mxu0 0
    %1093 = vmatpush.bf16.msra.mxu0 %v968
    %1094 = vmatpush.bf16.msra.mxu0 %v931
    %1095 = vmatmul.bf16.gmra.mxu0 %v941
    %v1096 = vpop.f32.mrf.mxu0
    %v1097 = vadd.f32 0.0, %v1096
    %v1098 = vpop.f32.mrf.mxu0
    %v1099 = vadd.f32 0.0, %v1098
    %1100 = vmatmul.bf16.gmra.mxu0 %v944
    %v1101 = vpop.f32.mrf.mxu0
    %v1102 = vadd.f32 0.0, %v1101
    %v1103 = vpop.f32.mrf.mxu0
    %v1104 = vadd.f32 0.0, %v1103
    %1105 = vmatmul.bf16.gmra.mxu0 %v947
    %v1106 = vpop.f32.mrf.mxu0
    %v1107 = vadd.f32 0.0, %v1106
    %v1108 = vpop.f32.mrf.mxu0
    %v1109 = vadd.f32 0.0, %v1108
    %1110 = vmatmul.bf16.gmra.mxu0 %v950
    %v1111 = vpop.f32.mrf.mxu0
    %v1112 = vadd.f32 0.0, %v1111
    %v1113 = vpop.f32.mrf.mxu0
    %v1114 = vadd.f32 0.0, %v1113
    %1115 = vmatmul.bf16.gmra.mxu0 %v953
    %v1116 = vpop.f32.mrf.mxu0
    %v1117 = vadd.f32 0.0, %v1116
    %v1118 = vpop.f32.mrf.mxu0
    %v1119 = vadd.f32 0.0, %v1118
    %1120 = vmatmul.bf16.gmra.mxu0 %v956
    %v1121 = vpop.f32.mrf.mxu0
    %v1122 = vadd.f32 0.0, %v1121
    %v1123 = vpop.f32.mrf.mxu0
    %v1124 = vadd.f32 0.0, %v1123
    %1125 = vdwg.mxu0
    %v1126 = vadd.f32 %v839, %v980
    %v1127 = vadd.f32 %v840, %v1019
    %v1128 = vadd.f32 %v841, %v1058
    %v1129 = vadd.f32 %v842, %v1097
    %v1130 = vadd.f32 %v843, %v982
    %v1131 = vadd.f32 %v844, %v1021
    %v1132 = vadd.f32 %v845, %v1060
    %v1133 = vadd.f32 %v846, %v1099
    %v1134 = vadd.f32 %v847, %v985
    %v1135 = vadd.f32 %v848, %v1024
    %v1136 = vadd.f32 %v849, %v1063
    %v1137 = vadd.f32 %v850, %v1102
    %v1138 = vadd.f32 %v851, %v987
    %v1139 = vadd.f32 %v852, %v1026
    %v1140 = vadd.f32 %v853, %v1065
    %v1141 = vadd.f32 %v854, %v1104
    %v1142 = vadd.f32 %v855, %v990
    %v1143 = vadd.f32 %v856, %v1029
    %v1144 = vadd.f32 %v857, %v1068
    %v1145 = vadd.f32 %v858, %v1107
    %v1146 = vadd.f32 %v859, %v992
    %v1147 = vadd.f32 %v860, %v1031
    %v1148 = vadd.f32 %v861, %v1070
    %v1149 = vadd.f32 %v862, %v1109
    %v1150 = vadd.f32 %v863, %v995
    %v1151 = vadd.f32 %v864, %v1034
    %v1152 = vadd.f32 %v865, %v1073
    %v1153 = vadd.f32 %v866, %v1112
    %v1154 = vadd.f32 %v867, %v997
    %v1155 = vadd.f32 %v868, %v1036
    %v1156 = vadd.f32 %v869, %v1075
    %v1157 = vadd.f32 %v870, %v1114
    %v1158 = vadd.f32 %v871, %v1000
    %v1159 = vadd.f32 %v872, %v1039
    %v1160 = vadd.f32 %v873, %v1078
    %v1161 = vadd.f32 %v874, %v1117
    %v1162 = vadd.f32 %v875, %v1002
    %v1163 = vadd.f32 %v876, %v1041
    %v1164 = vadd.f32 %v877, %v1080
    %v1165 = vadd.f32 %v878, %v1119
    %v1166 = vadd.f32 %v879, %v1005
    %v1167 = vadd.f32 %v880, %v1044
    %v1168 = vadd.f32 %v881, %v1083
    %v1169 = vadd.f32 %v882, %v1122
    %v1170 = vadd.f32 %v883, %v1007
    %v1171 = vadd.f32 %v884, %v1046
    %v1172 = vadd.f32 %v885, %v1085
    %v1173 = vadd.f32 %v886, %v1124
    %s1174 = scalar_lea.vmem [#allocation2], 256
    %v1175 = vld [vmem:[%s1174] sm:$0xff]
    %v1176 = vld [vmem:[%s1174 + $0x8] sm:$0xff]
    %v1177 = vld [vmem:[%s1174 + $0x10] sm:$0xff]
    %v1178 = vld [vmem:[%s1174 + $0x18] sm:$0xff]
    %v1179 = vld [vmem:[%s1174 + $0x20] sm:$0xff]
    %v1180 = vld [vmem:[%s1174 + $0x28] sm:$0xff]
    %v1181 = vld [vmem:[%s1174 + $0x30] sm:$0x33]
    %v1182 = vld [vmem:[%s1174 + $0x38] sm:$0x33]
    %v1184 = vunpack.c.l.b16 %v62
    %v1185 = vpack.c.b16 %v1184, %v610
    %v1194 = vunpack.c.l.b16 %v1175
    %v1195 = vunpack.c.h.b16 %v1175
    %v1196 = vunpack.c.l.b16 %v1176
    %v1197 = vunpack.c.h.b16 %v1176
    %v1198 = vunpack.c.l.b16 %v1177
    %v1199 = vunpack.c.h.b16 %v1177
    %v1200 = vunpack.c.l.b16 %v1178
    %v1201 = vunpack.c.h.b16 %v1178
    %v1202 = vunpack.c.l.b16 %v1179
    %v1203 = vunpack.c.h.b16 %v1179
    %v1204 = vunpack.c.l.b16 %v1180
    %v1205 = vunpack.c.h.b16 %v1180
    %v1206 = vunpack.c.l.b16 %v1181
    %v1207 = vunpack.c.h.b16 %v1181
    %v1208 = vunpack.c.l.b16 %v1182
    %v1209 = vunpack.c.h.b16 %v1182
    %v1210 = vpack.c.b16 %v1198, %v1194
    %v1211 = vpack.c.b16 %v1199, %v1195
    %v1212 = vpack.c.b16 %v1200, %v1196
    %v1213 = vpack.c.b16 %v1201, %v1197
    %v1214 = vpack.c.b16 %v1206, %v1202
    %v1215 = vpack.c.b16 %v1207, %v1203
    %v1216 = vpack.c.b16 %v1208, %v1204
    %v1217 = vpack.c.b16 %v1209, %v1205
    %v1223 = vsel %vm160, %v1185, 0
    %v1226 = vsel %vm179, %v1214, 0
    %v1229 = vsel %vm179, %v1215, 0
    %v1232 = vsel %vm179, %v1216, 0
    %v1235 = vsel %vm179, %v1217, 0
    %1237 = vmatpush.bf16.msra.mxu0 0
    %1238 = vmatpush.bf16.msra.mxu0 0
    %1239 = vmatpush.bf16.msra.mxu0 0
    %1240 = vmatpush.bf16.msra.mxu0 0
    %1241 = vmatpush.bf16.msra.mxu0 0
    %1242 = vmatpush.bf16.msra.mxu0 0
    %1243 = vmatpush.bf16.msra.mxu0 %v1226
    %1244 = vmatpush.bf16.msra.mxu0 %v1210
    %1245 = vmatmul.bf16.gmra.mxu0 %v418
    %v1246 = vpop.f32.mrf.mxu0
    %v1247 = vadd.f32 0.0, %v1246
    %v1248 = vpop.f32.mrf.mxu0
    %v1249 = vadd.f32 0.0, %v1248
    %1250 = vmatmul.bf16.gmra.mxu0 %v421
    %v1251 = vpop.f32.mrf.mxu0
    %v1252 = vadd.f32 0.0, %v1251
    %v1253 = vpop.f32.mrf.mxu0
    %v1254 = vadd.f32 0.0, %v1253
    %1255 = vmatmul.bf16.gmra.mxu0 %v424
    %v1256 = vpop.f32.mrf.mxu0
    %v1257 = vadd.f32 0.0, %v1256
    %v1258 = vpop.f32.mrf.mxu0
    %v1259 = vadd.f32 0.0, %v1258
    %1260 = vmatmul.bf16.gmra.mxu0 %v427
    %v1261 = vpop.f32.mrf.mxu0
    %v1262 = vadd.f32 0.0, %v1261
    %v1263 = vpop.f32.mrf.mxu0
    %v1264 = vadd.f32 0.0, %v1263
    %1265 = vmatmul.bf16.gmra.mxu0 %v430
    %v1266 = vpop.f32.mrf.mxu0
    %v1267 = vadd.f32 0.0, %v1266
    %v1268 = vpop.f32.mrf.mxu0
    %v1269 = vadd.f32 0.0, %v1268
    %1270 = vmatmul.bf16.gmra.mxu0 %v1223
    %v1271 = vpop.f32.mrf.mxu0
    %v1272 = vadd.f32 0.0, %v1271
    %v1273 = vpop.f32.mrf.mxu0
    %v1274 = vadd.f32 0.0, %v1273
    %1275 = vdwg.mxu0
    %1276 = vmatpush.bf16.msra.mxu0 0
    %1277 = vmatpush.bf16.msra.mxu0 0
    %1278 = vmatpush.bf16.msra.mxu0 0
    %1279 = vmatpush.bf16.msra.mxu0 0
    %1280 = vmatpush.bf16.msra.mxu0 0
    %1281 = vmatpush.bf16.msra.mxu0 0
    %1282 = vmatpush.bf16.msra.mxu0 %v1229
    %1283 = vmatpush.bf16.msra.mxu0 %v1211
    %1284 = vmatmul.bf16.gmra.mxu0 %v418
    %v1285 = vpop.f32.mrf.mxu0
    %v1286 = vadd.f32 0.0, %v1285
    %v1287 = vpop.f32.mrf.mxu0
    %v1288 = vadd.f32 0.0, %v1287
    %1289 = vmatmul.bf16.gmra.mxu0 %v421
    %v1290 = vpop.f32.mrf.mxu0
    %v1291 = vadd.f32 0.0, %v1290
    %v1292 = vpop.f32.mrf.mxu0
    %v1293 = vadd.f32 0.0, %v1292
    %1294 = vmatmul.bf16.gmra.mxu0 %v424
    %v1295 = vpop.f32.mrf.mxu0
    %v1296 = vadd.f32 0.0, %v1295
    %v1297 = vpop.f32.mrf.mxu0
    %v1298 = vadd.f32 0.0, %v1297
    %1299 = vmatmul.bf16.gmra.mxu0 %v427
    %v1300 = vpop.f32.mrf.mxu0
    %v1301 = vadd.f32 0.0, %v1300
    %v1302 = vpop.f32.mrf.mxu0
    %v1303 = vadd.f32 0.0, %v1302
    %1304 = vmatmul.bf16.gmra.mxu0 %v430
    %v1305 = vpop.f32.mrf.mxu0
    %v1306 = vadd.f32 0.0, %v1305
    %v1307 = vpop.f32.mrf.mxu0
    %v1308 = vadd.f32 0.0, %v1307
    %1309 = vmatmul.bf16.gmra.mxu0 %v1223
    %v1310 = vpop.f32.mrf.mxu0
    %v1311 = vadd.f32 0.0, %v1310
    %v1312 = vpop.f32.mrf.mxu0
    %v1313 = vadd.f32 0.0, %v1312
    %1314 = vdwg.mxu0
    %1315 = vmatpush.bf16.msra.mxu0 0
    %1316 = vmatpush.bf16.msra.mxu0 0
    %1317 = vmatpush.bf16.msra.mxu0 0
    %1318 = vmatpush.bf16.msra.mxu0 0
    %1319 = vmatpush.bf16.msra.mxu0 0
    %1320 = vmatpush.bf16.msra.mxu0 0
    %1321 = vmatpush.bf16.msra.mxu0 %v1232
    %1322 = vmatpush.bf16.msra.mxu0 %v1212
    %1323 = vmatmul.bf16.gmra.mxu0 %v418
    %v1324 = vpop.f32.mrf.mxu0
    %v1325 = vadd.f32 0.0, %v1324
    %v1326 = vpop.f32.mrf.mxu0
    %v1327 = vadd.f32 0.0, %v1326
    %1328 = vmatmul.bf16.gmra.mxu0 %v421
    %v1329 = vpop.f32.mrf.mxu0
    %v1330 = vadd.f32 0.0, %v1329
    %v1331 = vpop.f32.mrf.mxu0
    %v1332 = vadd.f32 0.0, %v1331
    %1333 = vmatmul.bf16.gmra.mxu0 %v424
    %v1334 = vpop.f32.mrf.mxu0
    %v1335 = vadd.f32 0.0, %v1334
    %v1336 = vpop.f32.mrf.mxu0
    %v1337 = vadd.f32 0.0, %v1336
    %1338 = vmatmul.bf16.gmra.mxu0 %v427
    %v1339 = vpop.f32.mrf.mxu0
    %v1340 = vadd.f32 0.0, %v1339
    %v1341 = vpop.f32.mrf.mxu0
    %v1342 = vadd.f32 0.0, %v1341
    %1343 = vmatmul.bf16.gmra.mxu0 %v430
    %v1344 = vpop.f32.mrf.mxu0
    %v1345 = vadd.f32 0.0, %v1344
    %v1346 = vpop.f32.mrf.mxu0
    %v1347 = vadd.f32 0.0, %v1346
    %1348 = vmatmul.bf16.gmra.mxu0 %v1223
    %v1349 = vpop.f32.mrf.mxu0
    %v1350 = vadd.f32 0.0, %v1349
    %v1351 = vpop.f32.mrf.mxu0
    %v1352 = vadd.f32 0.0, %v1351
    %1353 = vdwg.mxu0
    %1354 = vmatpush.bf16.msra.mxu0 0
    %1355 = vmatpush.bf16.msra.mxu0 0
    %1356 = vmatpush.bf16.msra.mxu0 0
    %1357 = vmatpush.bf16.msra.mxu0 0
    %1358 = vmatpush.bf16.msra.mxu0 0
    %1359 = vmatpush.bf16.msra.mxu0 0
    %1360 = vmatpush.bf16.msra.mxu0 %v1235
    %1361 = vmatpush.bf16.msra.mxu0 %v1213
    %1362 = vmatmul.bf16.gmra.mxu0 %v418
    %v1363 = vpop.f32.mrf.mxu0
    %v1364 = vadd.f32 0.0, %v1363
    %v1365 = vpop.f32.mrf.mxu0
    %v1366 = vadd.f32 0.0, %v1365
    %1367 = vmatmul.bf16.gmra.mxu0 %v421
    %v1368 = vpop.f32.mrf.mxu0
    %v1369 = vadd.f32 0.0, %v1368
    %v1370 = vpop.f32.mrf.mxu0
    %v1371 = vadd.f32 0.0, %v1370
    %1372 = vmatmul.bf16.gmra.mxu0 %v424
    %v1373 = vpop.f32.mrf.mxu0
    %v1374 = vadd.f32 0.0, %v1373
    %v1375 = vpop.f32.mrf.mxu0
    %v1376 = vadd.f32 0.0, %v1375
    %1377 = vmatmul.bf16.gmra.mxu0 %v427
    %v1378 = vpop.f32.mrf.mxu0
    %v1379 = vadd.f32 0.0, %v1378
    %v1380 = vpop.f32.mrf.mxu0
    %v1381 = vadd.f32 0.0, %v1380
    %1382 = vmatmul.bf16.gmra.mxu0 %v430
    %v1383 = vpop.f32.mrf.mxu0
    %v1384 = vadd.f32 0.0, %v1383
    %v1385 = vpop.f32.mrf.mxu0
    %v1386 = vadd.f32 0.0, %v1385
    %1387 = vmatmul.bf16.gmra.mxu0 %v1223
    %v1388 = vpop.f32.mrf.mxu0
    %v1389 = vadd.f32 0.0, %v1388
    %v1390 = vpop.f32.mrf.mxu0
    %v1391 = vadd.f32 0.0, %v1390
    %1392 = vdwg.mxu0
    %v1393 = vadd.f32 %v1126, %v1247
    %v1394 = vadd.f32 %v1127, %v1286
    %v1395 = vadd.f32 %v1128, %v1325
    %v1396 = vadd.f32 %v1129, %v1364
    %v1397 = vadd.f32 %v1130, %v1249
    %v1398 = vadd.f32 %v1131, %v1288
    %v1399 = vadd.f32 %v1132, %v1327
    %v1400 = vadd.f32 %v1133, %v1366
    %v1401 = vadd.f32 %v1134, %v1252
    %v1402 = vadd.f32 %v1135, %v1291
    %v1403 = vadd.f32 %v1136, %v1330
    %v1404 = vadd.f32 %v1137, %v1369
    %v1405 = vadd.f32 %v1138, %v1254
    %v1406 = vadd.f32 %v1139, %v1293
    %v1407 = vadd.f32 %v1140, %v1332
    %v1408 = vadd.f32 %v1141, %v1371
    %v1409 = vadd.f32 %v1142, %v1257
    %v1410 = vadd.f32 %v1143, %v1296
    %v1411 = vadd.f32 %v1144, %v1335
    %v1412 = vadd.f32 %v1145, %v1374
    %v1413 = vadd.f32 %v1146, %v1259
    %v1414 = vadd.f32 %v1147, %v1298
    %v1415 = vadd.f32 %v1148, %v1337
    %v1416 = vadd.f32 %v1149, %v1376
    %v1417 = vadd.f32 %v1150, %v1262
    %v1418 = vadd.f32 %v1151, %v1301
    %v1419 = vadd.f32 %v1152, %v1340
    %v1420 = vadd.f32 %v1153, %v1379
    %v1421 = vadd.f32 %v1154, %v1264
    %v1422 = vadd.f32 %v1155, %v1303
    %v1423 = vadd.f32 %v1156, %v1342
    %v1424 = vadd.f32 %v1157, %v1381
    %v1425 = vadd.f32 %v1158, %v1267
    %v1426 = vadd.f32 %v1159, %v1306
    %v1427 = vadd.f32 %v1160, %v1345
    %v1428 = vadd.f32 %v1161, %v1384
    %v1429 = vadd.f32 %v1162, %v1269
    %v1430 = vadd.f32 %v1163, %v1308
    %v1431 = vadd.f32 %v1164, %v1347
    %v1432 = vadd.f32 %v1165, %v1386
    %v1433 = vadd.f32 %v1166, %v1272
    %v1434 = vadd.f32 %v1167, %v1311
    %v1435 = vadd.f32 %v1168, %v1350
    %v1436 = vadd.f32 %v1169, %v1389
    %v1437 = vadd.f32 %v1170, %v1274
    %v1438 = vadd.f32 %v1171, %v1313
    %v1439 = vadd.f32 %v1172, %v1352
    %v1440 = vadd.f32 %v1173, %v1391
    %s1441 = scalar_lea.vmem [#allocation2], 320
    %v1442 = vld [vmem:[%s1441] sm:$0xff]
    %v1443 = vld [vmem:[%s1441 + $0x8] sm:$0xff]
    %v1444 = vld [vmem:[%s1441 + $0x10] sm:$0xff]
    %v1445 = vld [vmem:[%s1441 + $0x18] sm:$0xff]
    %v1446 = vld [vmem:[%s1441 + $0x20] sm:$0xff]
    %v1447 = vld [vmem:[%s1441 + $0x28] sm:$0xff]
    %v1448 = vld [vmem:[%s1441 + $0x30] sm:$0x33]
    %v1449 = vld [vmem:[%s1441 + $0x38] sm:$0x33]
    %v1451 = vunpack.c.l.b16 %v76
    %v1452 = vpack.c.b16 %v1451, %v897
    %v1461 = vunpack.c.l.b16 %v1442
    %v1462 = vunpack.c.h.b16 %v1442
    %v1463 = vunpack.c.l.b16 %v1443
    %v1464 = vunpack.c.h.b16 %v1443
    %v1465 = vunpack.c.l.b16 %v1444
    %v1466 = vunpack.c.h.b16 %v1444
    %v1467 = vunpack.c.l.b16 %v1445
    %v1468 = vunpack.c.h.b16 %v1445
    %v1469 = vunpack.c.l.b16 %v1446
    %v1470 = vunpack.c.h.b16 %v1446
    %v1471 = vunpack.c.l.b16 %v1447
    %v1472 = vunpack.c.h.b16 %v1447
    %v1473 = vunpack.c.l.b16 %v1448
    %v1474 = vunpack.c.h.b16 %v1448
    %v1475 = vunpack.c.l.b16 %v1449
    %v1476 = vunpack.c.h.b16 %v1449
    %v1477 = vpack.c.b16 %v1465, %v1461
    %v1478 = vpack.c.b16 %v1466, %v1462
    %v1479 = vpack.c.b16 %v1467, %v1463
    %v1480 = vpack.c.b16 %v1468, %v1464
    %v1481 = vpack.c.b16 %v1473, %v1469
    %v1482 = vpack.c.b16 %v1474, %v1470
    %v1483 = vpack.c.b16 %v1475, %v1471
    %v1484 = vpack.c.b16 %v1476, %v1472
    %v1490 = vsel %vm160, %v1452, 0
    %v1493 = vsel %vm179, %v1481, 0
    %v1496 = vsel %vm179, %v1482, 0
    %v1499 = vsel %vm179, %v1483, 0
    %v1502 = vsel %vm179, %v1484, 0
    %1504 = vmatpush.bf16.msra.mxu0 0
    %1505 = vmatpush.bf16.msra.mxu0 0
    %1506 = vmatpush.bf16.msra.mxu0 0
    %1507 = vmatpush.bf16.msra.mxu0 0
    %1508 = vmatpush.bf16.msra.mxu0 0
    %1509 = vmatpush.bf16.msra.mxu0 0
    %1510 = vmatpush.bf16.msra.mxu0 %v1493
    %1511 = vmatpush.bf16.msra.mxu0 %v1477
    %1512 = vmatmul.bf16.gmra.mxu0 %v165
    %v1513 = vpop.f32.mrf.mxu0
    %v1514 = vadd.f32 0.0, %v1513
    %v1515 = vpop.f32.mrf.mxu0
    %v1516 = vadd.f32 0.0, %v1515
    %1517 = vmatmul.bf16.gmra.mxu0 %v168
    %v1518 = vpop.f32.mrf.mxu0
    %v1519 = vadd.f32 0.0, %v1518
    %v1520 = vpop.f32.mrf.mxu0
    %v1521 = vadd.f32 0.0, %v1520
    %1522 = vmatmul.bf16.gmra.mxu0 %v171
    %v1523 = vpop.f32.mrf.mxu0
    %v1524 = vadd.f32 0.0, %v1523
    %v1525 = vpop.f32.mrf.mxu0
    %v1526 = vadd.f32 0.0, %v1525
    %1527 = vmatmul.bf16.gmra.mxu0 %v174
    %v1528 = vpop.f32.mrf.mxu0
    %v1529 = vadd.f32 0.0, %v1528
    %v1530 = vpop.f32.mrf.mxu0
    %v1531 = vadd.f32 0.0, %v1530
    %1532 = vmatmul.bf16.gmra.mxu0 %v177
    %v1533 = vpop.f32.mrf.mxu0
    %v1534 = vadd.f32 0.0, %v1533
    %v1535 = vpop.f32.mrf.mxu0
    %v1536 = vadd.f32 0.0, %v1535
    %1537 = vmatmul.bf16.gmra.mxu0 %v1490
    %v1538 = vpop.f32.mrf.mxu0
    %v1539 = vadd.f32 0.0, %v1538
    %v1540 = vpop.f32.mrf.mxu0
    %v1541 = vadd.f32 0.0, %v1540
    %1542 = vdwg.mxu0
    %1543 = vmatpush.bf16.msra.mxu0 0
    %1544 = vmatpush.bf16.msra.mxu0 0
    %1545 = vmatpush.bf16.msra.mxu0 0
    %1546 = vmatpush.bf16.msra.mxu0 0
    %1547 = vmatpush.bf16.msra.mxu0 0
    %1548 = vmatpush.bf16.msra.mxu0 0
    %1549 = vmatpush.bf16.msra.mxu0 %v1496
    %1550 = vmatpush.bf16.msra.mxu0 %v1478
    %1551 = vmatmul.bf16.gmra.mxu0 %v165
    %v1552 = vpop.f32.mrf.mxu0
    %v1553 = vadd.f32 0.0, %v1552
    %v1554 = vpop.f32.mrf.mxu0
    %v1555 = vadd.f32 0.0, %v1554
    %1556 = vmatmul.bf16.gmra.mxu0 %v168
    %v1557 = vpop.f32.mrf.mxu0
    %v1558 = vadd.f32 0.0, %v1557
    %v1559 = vpop.f32.mrf.mxu0
    %v1560 = vadd.f32 0.0, %v1559
    %1561 = vmatmul.bf16.gmra.mxu0 %v171
    %v1562 = vpop.f32.mrf.mxu0
    %v1563 = vadd.f32 0.0, %v1562
    %v1564 = vpop.f32.mrf.mxu0
    %v1565 = vadd.f32 0.0, %v1564
    %1566 = vmatmul.bf16.gmra.mxu0 %v174
    %v1567 = vpop.f32.mrf.mxu0
    %v1568 = vadd.f32 0.0, %v1567
    %v1569 = vpop.f32.mrf.mxu0
    %v1570 = vadd.f32 0.0, %v1569
    %1571 = vmatmul.bf16.gmra.mxu0 %v177
    %v1572 = vpop.f32.mrf.mxu0
    %v1573 = vadd.f32 0.0, %v1572
    %v1574 = vpop.f32.mrf.mxu0
    %v1575 = vadd.f32 0.0, %v1574
    %1576 = vmatmul.bf16.gmra.mxu0 %v1490
    %v1577 = vpop.f32.mrf.mxu0
    %v1578 = vadd.f32 0.0, %v1577
    %v1579 = vpop.f32.mrf.mxu0
    %v1580 = vadd.f32 0.0, %v1579
    %1581 = vdwg.mxu0
    %1582 = vmatpush.bf16.msra.mxu0 0
    %1583 = vmatpush.bf16.msra.mxu0 0
    %1584 = vmatpush.bf16.msra.mxu0 0
    %1585 = vmatpush.bf16.msra.mxu0 0
    %1586 = vmatpush.bf16.msra.mxu0 0
    %1587 = vmatpush.bf16.msra.mxu0 0
    %1588 = vmatpush.bf16.msra.mxu0 %v1499
    %1589 = vmatpush.bf16.msra.mxu0 %v1479
    %1590 = vmatmul.bf16.gmra.mxu0 %v165
    %v1591 = vpop.f32.mrf.mxu0
    %v1592 = vadd.f32 0.0, %v1591
    %v1593 = vpop.f32.mrf.mxu0
    %v1594 = vadd.f32 0.0, %v1593
    %1595 = vmatmul.bf16.gmra.mxu0 %v168
    %v1596 = vpop.f32.mrf.mxu0
    %v1597 = vadd.f32 0.0, %v1596
    %v1598 = vpop.f32.mrf.mxu0
    %v1599 = vadd.f32 0.0, %v1598
    %1600 = vmatmul.bf16.gmra.mxu0 %v171
    %v1601 = vpop.f32.mrf.mxu0
    %v1602 = vadd.f32 0.0, %v1601
    %v1603 = vpop.f32.mrf.mxu0
    %v1604 = vadd.f32 0.0, %v1603
    %1605 = vmatmul.bf16.gmra.mxu0 %v174
    %v1606 = vpop.f32.mrf.mxu0
    %v1607 = vadd.f32 0.0, %v1606
    %v1608 = vpop.f32.mrf.mxu0
    %v1609 = vadd.f32 0.0, %v1608
    %1610 = vmatmul.bf16.gmra.mxu0 %v177
    %v1611 = vpop.f32.mrf.mxu0
    %v1612 = vadd.f32 0.0, %v1611
    %v1613 = vpop.f32.mrf.mxu0
    %v1614 = vadd.f32 0.0, %v1613
    %1615 = vmatmul.bf16.gmra.mxu0 %v1490
    %v1616 = vpop.f32.mrf.mxu0
    %v1617 = vadd.f32 0.0, %v1616
    %v1618 = vpop.f32.mrf.mxu0
    %v1619 = vadd.f32 0.0, %v1618
    %1620 = vdwg.mxu0
    %1621 = vmatpush.bf16.msra.mxu0 0
    %1622 = vmatpush.bf16.msra.mxu0 0
    %1623 = vmatpush.bf16.msra.mxu0 0
    %1624 = vmatpush.bf16.msra.mxu0 0
    %1625 = vmatpush.bf16.msra.mxu0 0
    %1626 = vmatpush.bf16.msra.mxu0 0
    %1627 = vmatpush.bf16.msra.mxu0 %v1502
    %1628 = vmatpush.bf16.msra.mxu0 %v1480
    %1629 = vmatmul.bf16.gmra.mxu0 %v165
    %v1630 = vpop.f32.mrf.mxu0
    %v1631 = vadd.f32 0.0, %v1630
    %v1632 = vpop.f32.mrf.mxu0
    %v1633 = vadd.f32 0.0, %v1632
    %1634 = vmatmul.bf16.gmra.mxu0 %v168
    %v1635 = vpop.f32.mrf.mxu0
    %v1636 = vadd.f32 0.0, %v1635
    %v1637 = vpop.f32.mrf.mxu0
    %v1638 = vadd.f32 0.0, %v1637
    %1639 = vmatmul.bf16.gmra.mxu0 %v171
    %v1640 = vpop.f32.mrf.mxu0
    %v1641 = vadd.f32 0.0, %v1640
    %v1642 = vpop.f32.mrf.mxu0
    %v1643 = vadd.f32 0.0, %v1642
    %1644 = vmatmul.bf16.gmra.mxu0 %v174
    %v1645 = vpop.f32.mrf.mxu0
    %v1646 = vadd.f32 0.0, %v1645
    %v1647 = vpop.f32.mrf.mxu0
    %v1648 = vadd.f32 0.0, %v1647
    %1649 = vmatmul.bf16.gmra.mxu0 %v177
    %v1650 = vpop.f32.mrf.mxu0
    %v1651 = vadd.f32 0.0, %v1650
    %v1652 = vpop.f32.mrf.mxu0
    %v1653 = vadd.f32 0.0, %v1652
    %1654 = vmatmul.bf16.gmra.mxu0 %v1490
    %v1655 = vpop.f32.mrf.mxu0
    %v1656 = vadd.f32 0.0, %v1655
    %v1657 = vpop.f32.mrf.mxu0
    %v1658 = vadd.f32 0.0, %v1657
    %1659 = vdwg.mxu0
    %v1660 = vadd.f32 %v1393, %v1514
    %v1661 = vadd.f32 %v1394, %v1553
    %v1662 = vadd.f32 %v1395, %v1592
    %v1663 = vadd.f32 %v1396, %v1631
    %v1664 = vadd.f32 %v1397, %v1516
    %v1665 = vadd.f32 %v1398, %v1555
    %v1666 = vadd.f32 %v1399, %v1594
    %v1667 = vadd.f32 %v1400, %v1633
    %v1668 = vadd.f32 %v1401, %v1519
    %v1669 = vadd.f32 %v1402, %v1558
    %v1670 = vadd.f32 %v1403, %v1597
    %v1671 = vadd.f32 %v1404, %v1636
    %v1672 = vadd.f32 %v1405, %v1521
    %v1673 = vadd.f32 %v1406, %v1560
    %v1674 = vadd.f32 %v1407, %v1599
    %v1675 = vadd.f32 %v1408, %v1638
    %v1676 = vadd.f32 %v1409, %v1524
    %v1677 = vadd.f32 %v1410, %v1563
    %v1678 = vadd.f32 %v1411, %v1602
    %v1679 = vadd.f32 %v1412, %v1641
    %v1680 = vadd.f32 %v1413, %v1526
    %v1681 = vadd.f32 %v1414, %v1565
    %v1682 = vadd.f32 %v1415, %v1604
    %v1683 = vadd.f32 %v1416, %v1643
    %v1684 = vadd.f32 %v1417, %v1529
    %v1685 = vadd.f32 %v1418, %v1568
    %v1686 = vadd.f32 %v1419, %v1607
    %v1687 = vadd.f32 %v1420, %v1646
    %v1688 = vadd.f32 %v1421, %v1531
    %v1689 = vadd.f32 %v1422, %v1570
    %v1690 = vadd.f32 %v1423, %v1609
    %v1691 = vadd.f32 %v1424, %v1648
    %v1692 = vadd.f32 %v1425, %v1534
    %v1693 = vadd.f32 %v1426, %v1573
    %v1694 = vadd.f32 %v1427, %v1612
    %v1695 = vadd.f32 %v1428, %v1651
    %v1696 = vadd.f32 %v1429, %v1536
    %v1697 = vadd.f32 %v1430, %v1575
    %v1698 = vadd.f32 %v1431, %v1614
    %v1699 = vadd.f32 %v1432, %v1653
    %v1700 = vadd.f32 %v1433, %v1539
    %v1701 = vadd.f32 %v1434, %v1578
    %v1702 = vadd.f32 %v1435, %v1617
    %v1703 = vadd.f32 %v1436, %v1656
    %v1704 = vadd.f32 %v1437, %v1541
    %v1705 = vadd.f32 %v1438, %v1580
    %v1706 = vadd.f32 %v1439, %v1619
    %v1707 = vadd.f32 %v1440, %v1658
    %v1708 = vmax.f32 %v1660, %v1661
    %v1709 = vmax.f32 %v1664, %v1665
    %v1710 = vmax.f32 %v1668, %v1669
    %v1711 = vmax.f32 %v1672, %v1673
    %v1712 = vmax.f32 %v1676, %v1677
    %v1713 = vmax.f32 %v1680, %v1681
    %v1714 = vmax.f32 %v1684, %v1685
    %v1715 = vmax.f32 %v1688, %v1689
    %v1716 = vmax.f32 %v1692, %v1693
    %v1717 = vmax.f32 %v1696, %v1697
    %v1718 = vmax.f32 %v1700, %v1701
    %v1719 = vmax.f32 %v1704, %v1705
    %v1720 = vmax.f32 %v1662, %v1663
    %v1721 = vmax.f32 %v1666, %v1667
    %v1722 = vmax.f32 %v1670, %v1671
    %v1723 = vmax.f32 %v1674, %v1675
    %v1724 = vmax.f32 %v1678, %v1679
    %v1725 = vmax.f32 %v1682, %v1683
    %v1726 = vmax.f32 %v1686, %v1687
    %v1727 = vmax.f32 %v1690, %v1691
    %v1728 = vmax.f32 %v1694, %v1695
    %v1729 = vmax.f32 %v1698, %v1699
    %v1730 = vmax.f32 %v1702, %v1703
    %v1731 = vmax.f32 %v1706, %v1707
    %v1732 = vmax.f32 %v1708, %v1720
    %v1733 = vmax.f32 %v1709, %v1721
    %v1734 = vmax.f32 %v1710, %v1722
    %v1735 = vmax.f32 %v1711, %v1723
    %v1736 = vmax.f32 %v1712, %v1724
    %v1737 = vmax.f32 %v1713, %v1725
    %v1738 = vmax.f32 %v1714, %v1726
    %v1739 = vmax.f32 %v1715, %v1727
    %v1740 = vmax.f32 %v1716, %v1728
    %v1741 = vmax.f32 %v1717, %v1729
    %v1742 = vmax.f32 %v1718, %v1730
    %v1743 = vmax.f32 %v1719, %v1731
    %v1744 = vld [vmem:[%s2] sm:$0x1]
    %v1746 = vperm.slane %v1744, 0
    %v1748 = vadd.f32 %v1732, %v1746
    %v1749 = vadd.f32 %v1733, %v1746
    %v1750 = vadd.f32 %v1734, %v1746
    %v1751 = vadd.f32 %v1735, %v1746
    %v1752 = vadd.f32 %v1736, %v1746
    %v1753 = vadd.f32 %v1737, %v1746
    %v1754 = vadd.f32 %v1738, %v1746
    %v1755 = vadd.f32 %v1739, %v1746
    %v1756 = vadd.f32 %v1740, %v1746
    %v1757 = vadd.f32 %v1741, %v1746
    %v1758 = vadd.f32 %v1742, %v1746
    %v1759 = vadd.f32 %v1743, %v1746
    %v1760 = vmax.f32 %v1748, 0.0
    %v1761 = vmax.f32 %v1749, 0.0
    %v1762 = vmax.f32 %v1750, 0.0
    %v1763 = vmax.f32 %v1751, 0.0
    %v1764 = vmax.f32 %v1752, 0.0
    %v1765 = vmax.f32 %v1753, 0.0
    %v1766 = vmax.f32 %v1754, 0.0
    %v1767 = vmax.f32 %v1755, 0.0
    %v1768 = vmax.f32 %v1756, 0.0
    %v1769 = vmax.f32 %v1757, 0.0
    %v1770 = vmax.f32 %v1758, 0.0
    %v1771 = vmax.f32 %v1759, 0.0
    %v1772 = vpack.c.bf16 %v1760, %v1760
    %v1773 = vpack.c.bf16 %v1761, %v1761
    %v1774 = vpack.c.bf16 %v1762, %v1762
    %v1775 = vpack.c.bf16 %v1763, %v1763
    %v1776 = vpack.c.bf16 %v1764, %v1764
    %v1777 = vpack.c.bf16 %v1765, %v1765
    %v1778 = vpack.c.bf16 %v1766, %v1766
    %v1779 = vpack.c.bf16 %v1767, %v1767
    %v1780 = vpack.c.bf16 %v1768, %v1768
    %v1781 = vpack.c.bf16 %v1769, %v1769
    %v1782 = vpack.c.bf16 %v1770, %v1770
    %v1783 = vpack.c.bf16 %v1771, %v1771
    %v1784 = vld [vmem:[%s3] sm:$0xff]
    %v1785 = vld [vmem:[%s3 + $0x8] sm:$0xff]
    %v1786 = vld [vmem:[%s3 + $0x10] sm:$0xff]
    %v1787 = vld [vmem:[%s3 + $0x18] sm:$0xff]
    %v1788 = vld [vmem:[%s3 + $0x20] sm:$0xff]
    %v1789 = vld [vmem:[%s3 + $0x28] sm:$0xff]
    %v1790 = vld [vmem:[%s3 + $0x30] sm:$0xff]
    %v1791 = vld [vmem:[%s3 + $0x38] sm:$0xff]
    %v1792 = vld [vmem:[%s3 + $0x40] sm:$0xff]
    %v1793 = vld [vmem:[%s3 + $0x48] sm:$0xff]
    %v1794 = vld [vmem:[%s3 + $0x50] sm:$0xff]
    %v1795 = vld [vmem:[%s3 + $0x58] sm:$0xff]
    %v1796 = vld [vmem:[%s3 + $0x60] sm:$0xff]
    %v1797 = vld [vmem:[%s3 + $0x68] sm:$0xff]
    %v1798 = vld [vmem:[%s3 + $0x70] sm:$0xff]
    %s1799 = scalar_lea.vmem %s3, 120
    %v1800 = vld [vmem:[%s1799] sm:$0xff]
    %v1801 = vld [vmem:[%s1799 + $0x8] sm:$0xff]
    %v1802 = vld [vmem:[%s1799 + $0x10] sm:$0xff]
    %v1803 = vld [vmem:[%s1799 + $0x18] sm:$0xff]
    %v1804 = vld [vmem:[%s1799 + $0x20] sm:$0xff]
    %v1805 = vld [vmem:[%s1799 + $0x28] sm:$0xff]
    %v1806 = vld [vmem:[%s1799 + $0x30] sm:$0xff]
    %v1807 = vld [vmem:[%s1799 + $0x38] sm:$0xff]
    %v1808 = vld [vmem:[%s1799 + $0x40] sm:$0xff]
    %v1809 = vld [vmem:[%s1799 + $0x48] sm:$0xff]
    %v1810 = vld [vmem:[%s1799 + $0x50] sm:$0xff]
    %v1811 = vld [vmem:[%s1799 + $0x58] sm:$0xff]
    %v1812 = vld [vmem:[%s1799 + $0x60] sm:$0xff]
    %v1813 = vld [vmem:[%s1799 + $0x68] sm:$0xff]
    %v1814 = vld [vmem:[%s1799 + $0x70] sm:$0xff]
    %v1825 = vunpack.c.l.b16 %v1773
    %v1826 = vunpack.c.l.b16 %v1774
    %v1827 = vunpack.c.l.b16 %v1775
    %v1828 = vunpack.c.l.b16 %v1776
    %v1829 = vunpack.c.l.b16 %v1777
    %v1830 = vunpack.c.l.b16 %v1778
    %v1831 = vunpack.c.l.b16 %v1779
    %v1832 = vunpack.c.l.b16 %v1780
    %v1833 = vunpack.c.l.b16 %v1781
    %v1834 = vunpack.c.l.b16 %v1782
    %v1835 = vpack.c.b16 %v1826, %v1825
    %v1836 = vpack.c.b16 %v1828, %v1827
    %v1837 = vpack.c.b16 %v1830, %v1829
    %v1838 = vpack.c.b16 %v1832, %v1831
    %v1839 = vpack.c.b16 %v1834, %v1833
    %v1855 = vunpack.c.l.b16 %v1800
    %v1856 = vunpack.c.h.b16 %v1800
    %v1857 = vunpack.c.l.b16 %v1801
    %v1858 = vunpack.c.h.b16 %v1801
    %v1859 = vunpack.c.l.b16 %v1802
    %v1860 = vunpack.c.h.b16 %v1802
    %v1861 = vunpack.c.l.b16 %v1803
    %v1862 = vunpack.c.h.b16 %v1803
    %v1863 = vunpack.c.l.b16 %v1804
    %v1864 = vunpack.c.h.b16 %v1804
    %v1865 = vunpack.c.l.b16 %v1805
    %v1866 = vunpack.c.h.b16 %v1805
    %v1867 = vunpack.c.l.b16 %v1806
    %v1868 = vunpack.c.h.b16 %v1806
    %v1869 = vunpack.c.l.b16 %v1807
    %v1870 = vunpack.c.h.b16 %v1807
    %v1871 = vunpack.c.l.b16 %v1808
    %v1872 = vunpack.c.h.b16 %v1808
    %v1873 = vunpack.c.l.b16 %v1809
    %v1874 = vunpack.c.h.b16 %v1809
    %v1875 = vunpack.c.l.b16 %v1810
    %v1876 = vunpack.c.h.b16 %v1810
    %v1877 = vunpack.c.l.b16 %v1811
    %v1878 = vunpack.c.h.b16 %v1811
    %v1879 = vunpack.c.l.b16 %v1812
    %v1880 = vunpack.c.h.b16 %v1812
    %v1881 = vunpack.c.l.b16 %v1813
    %v1882 = vunpack.c.h.b16 %v1813
    %v1883 = vunpack.c.l.b16 %v1814
    %v1884 = vunpack.c.h.b16 %v1814
    %v1885 = vpack.c.b16 %v1857, %v1855
    %v1886 = vpack.c.b16 %v1858, %v1856
    %v1887 = vpack.c.b16 %v1861, %v1859
    %v1888 = vpack.c.b16 %v1862, %v1860
    %v1889 = vpack.c.b16 %v1865, %v1863
    %v1890 = vpack.c.b16 %v1866, %v1864
    %v1891 = vpack.c.b16 %v1869, %v1867
    %v1892 = vpack.c.b16 %v1870, %v1868
    %v1893 = vpack.c.b16 %v1873, %v1871
    %v1894 = vpack.c.b16 %v1874, %v1872
    %v1895 = vpack.c.b16 %v1877, %v1875
    %v1896 = vpack.c.b16 %v1878, %v1876
    %v1897 = vpack.c.b16 %v1881, %v1879
    %v1898 = vpack.c.b16 %v1882, %v1880
    %v1899 = vpack.c.b16 %v1883, %v1883
    %v1900 = vpack.c.b16 %v1884, %v1884
    %vm1915 = vcmask 982016
    %v1917 = vsel %vm1915, %v1835, 0
    %v1920 = vsel %vm1915, %v1836, 0
    %v1923 = vsel %vm1915, %v1837, 0
    %v1926 = vsel %vm1915, %v1838, 0
    %v1929 = vsel %vm1915, %v1839, 0
    %vm1931 = vcmask 1043456
    %v1933 = vsel %vm1931, %v1899, 0
    %v1936 = vsel %vm1931, %v1900, 0
    %1938 = vmatpush.bf16.msra.mxu0 %v1933
    %1939 = vmatpush.bf16.msra.mxu0 %v1897
    %1940 = vmatpush.bf16.msra.mxu0 %v1895
    %1941 = vmatpush.bf16.msra.mxu0 %v1893
    %1942 = vmatpush.bf16.msra.mxu0 %v1891
    %1943 = vmatpush.bf16.msra.mxu0 %v1889
    %1944 = vmatpush.bf16.msra.mxu0 %v1887
    %1945 = vmatpush.bf16.msra.mxu0 %v1885
    %1946 = vmatmul.bf16.gmra.mxu0 %v1917
    %v1947 = vpop.f32.mrf.mxu0
    %v1948 = vadd.f32 0.0, %v1947
    %v1949 = vpop.f32.mrf.mxu0
    %v1950 = vadd.f32 0.0, %v1949
    %1951 = vmatmul.bf16.gmra.mxu0 %v1920
    %v1952 = vpop.f32.mrf.mxu0
    %v1953 = vadd.f32 0.0, %v1952
    %v1954 = vpop.f32.mrf.mxu0
    %v1955 = vadd.f32 0.0, %v1954
    %1956 = vmatmul.bf16.gmra.mxu0 %v1923
    %v1957 = vpop.f32.mrf.mxu0
    %v1958 = vadd.f32 0.0, %v1957
    %v1959 = vpop.f32.mrf.mxu0
    %v1960 = vadd.f32 0.0, %v1959
    %1961 = vmatmul.bf16.gmra.mxu0 %v1926
    %v1962 = vpop.f32.mrf.mxu0
    %v1963 = vadd.f32 0.0, %v1962
    %v1964 = vpop.f32.mrf.mxu0
    %v1965 = vadd.f32 0.0, %v1964
    %1966 = vmatmul.bf16.gmra.mxu0 %v1929
    %v1967 = vpop.f32.mrf.mxu0
    %v1968 = vadd.f32 0.0, %v1967
    %v1969 = vpop.f32.mrf.mxu0
    %v1970 = vadd.f32 0.0, %v1969
    %1971 = vdwg.mxu0
    %1972 = vmatpush.bf16.msra.mxu0 %v1936
    %1973 = vmatpush.bf16.msra.mxu0 %v1898
    %1974 = vmatpush.bf16.msra.mxu0 %v1896
    %1975 = vmatpush.bf16.msra.mxu0 %v1894
    %1976 = vmatpush.bf16.msra.mxu0 %v1892
    %1977 = vmatpush.bf16.msra.mxu0 %v1890
    %1978 = vmatpush.bf16.msra.mxu0 %v1888
    %1979 = vmatpush.bf16.msra.mxu0 %v1886
    %1980 = vmatmul.bf16.gmra.mxu0 %v1917
    %v1981 = vpop.f32.mrf.mxu0
    %v1982 = vadd.f32 0.0, %v1981
    %v1983 = vpop.f32.mrf.mxu0
    %v1984 = vadd.f32 0.0, %v1983
    %1985 = vmatmul.bf16.gmra.mxu0 %v1920
    %v1986 = vpop.f32.mrf.mxu0
    %v1987 = vadd.f32 0.0, %v1986
    %v1988 = vpop.f32.mrf.mxu0
    %v1989 = vadd.f32 0.0, %v1988
    %1990 = vmatmul.bf16.gmra.mxu0 %v1923
    %v1991 = vpop.f32.mrf.mxu0
    %v1992 = vadd.f32 0.0, %v1991
    %v1993 = vpop.f32.mrf.mxu0
    %v1994 = vadd.f32 0.0, %v1993
    %1995 = vmatmul.bf16.gmra.mxu0 %v1926
    %v1996 = vpop.f32.mrf.mxu0
    %v1997 = vadd.f32 0.0, %v1996
    %v1998 = vpop.f32.mrf.mxu0
    %v1999 = vadd.f32 0.0, %v1998
    %2000 = vmatmul.bf16.gmra.mxu0 %v1929
    %v2001 = vpop.f32.mrf.mxu0
    %v2002 = vadd.f32 0.0, %v2001
    %v2003 = vpop.f32.mrf.mxu0
    %v2004 = vadd.f32 0.0, %v2003
    %2005 = vdwg.mxu0
    %v2007 = vunpack.c.l.b16 %v1772
    %v2008 = vpack.c.b16 %v1825, %v2007
    %v2009 = vpack.c.b16 %v1827, %v1826
    %v2010 = vpack.c.b16 %v1829, %v1828
    %v2011 = vpack.c.b16 %v1831, %v1830
    %v2012 = vpack.c.b16 %v1833, %v1832
    %v2028 = vunpack.c.l.b16 %v1784
    %v2029 = vunpack.c.h.b16 %v1784
    %v2030 = vunpack.c.l.b16 %v1785
    %v2031 = vunpack.c.h.b16 %v1785
    %v2032 = vunpack.c.l.b16 %v1786
    %v2033 = vunpack.c.h.b16 %v1786
    %v2034 = vunpack.c.l.b16 %v1787
    %v2035 = vunpack.c.h.b16 %v1787
    %v2036 = vunpack.c.l.b16 %v1788
    %v2037 = vunpack.c.h.b16 %v1788
    %v2038 = vunpack.c.l.b16 %v1789
    %v2039 = vunpack.c.h.b16 %v1789
    %v2040 = vunpack.c.l.b16 %v1790
    %v2041 = vunpack.c.h.b16 %v1790
    %v2042 = vunpack.c.l.b16 %v1791
    %v2043 = vunpack.c.h.b16 %v1791
    %v2044 = vunpack.c.l.b16 %v1792
    %v2045 = vunpack.c.h.b16 %v1792
    %v2046 = vunpack.c.l.b16 %v1793
    %v2047 = vunpack.c.h.b16 %v1793
    %v2048 = vunpack.c.l.b16 %v1794
    %v2049 = vunpack.c.h.b16 %v1794
    %v2050 = vunpack.c.l.b16 %v1795
    %v2051 = vunpack.c.h.b16 %v1795
    %v2052 = vunpack.c.l.b16 %v1796
    %v2053 = vunpack.c.h.b16 %v1796
    %v2054 = vunpack.c.l.b16 %v1797
    %v2055 = vunpack.c.h.b16 %v1797
    %v2056 = vunpack.c.l.b16 %v1798
    %v2057 = vunpack.c.h.b16 %v1798
    %v2058 = vpack.c.b16 %v2030, %v2028
    %v2059 = vpack.c.b16 %v2031, %v2029
    %v2060 = vpack.c.b16 %v2034, %v2032
    %v2061 = vpack.c.b16 %v2035, %v2033
    %v2062 = vpack.c.b16 %v2038, %v2036
    %v2063 = vpack.c.b16 %v2039, %v2037
    %v2064 = vpack.c.b16 %v2042, %v2040
    %v2065 = vpack.c.b16 %v2043, %v2041
    %v2066 = vpack.c.b16 %v2046, %v2044
    %v2067 = vpack.c.b16 %v2047, %v2045
    %v2068 = vpack.c.b16 %v2050, %v2048
    %v2069 = vpack.c.b16 %v2051, %v2049
    %v2070 = vpack.c.b16 %v2054, %v2052
    %v2071 = vpack.c.b16 %v2055, %v2053
    %v2072 = vpack.c.b16 %v2056, %v2056
    %v2073 = vpack.c.b16 %v2057, %v2057
    %v2089 = vsel %vm1915, %v2008, 0
    %v2092 = vsel %vm1915, %v2009, 0
    %v2095 = vsel %vm1915, %v2010, 0
    %v2098 = vsel %vm1915, %v2011, 0
    %v2101 = vsel %vm1915, %v2012, 0
    %v2104 = vsel %vm1931, %v2072, 0
    %v2107 = vsel %vm1931, %v2073, 0
    %2109 = vmatpush.bf16.msra.mxu0 %v2104
    %2110 = vmatpush.bf16.msra.mxu0 %v2070
    %2111 = vmatpush.bf16.msra.mxu0 %v2068
    %2112 = vmatpush.bf16.msra.mxu0 %v2066
    %2113 = vmatpush.bf16.msra.mxu0 %v2064
    %2114 = vmatpush.bf16.msra.mxu0 %v2062
    %2115 = vmatpush.bf16.msra.mxu0 %v2060
    %2116 = vmatpush.bf16.msra.mxu0 %v2058
    %2117 = vmatmul.bf16.gmra.mxu0 %v2089
    %v2118 = vpop.f32.mrf.mxu0
    %v2119 = vadd.f32 %v1948, %v2118
    %v2120 = vpop.f32.mrf.mxu0
    %v2121 = vadd.f32 %v1950, %v2120
    %2122 = vmatmul.bf16.gmra.mxu0 %v2092
    %v2123 = vpop.f32.mrf.mxu0
    %v2124 = vadd.f32 %v1953, %v2123
    %v2125 = vpop.f32.mrf.mxu0
    %v2126 = vadd.f32 %v1955, %v2125
    %2127 = vmatmul.bf16.gmra.mxu0 %v2095
    %v2128 = vpop.f32.mrf.mxu0
    %v2129 = vadd.f32 %v1958, %v2128
    %v2130 = vpop.f32.mrf.mxu0
    %v2131 = vadd.f32 %v1960, %v2130
    %2132 = vmatmul.bf16.gmra.mxu0 %v2098
    %v2133 = vpop.f32.mrf.mxu0
    %v2134 = vadd.f32 %v1963, %v2133
    %v2135 = vpop.f32.mrf.mxu0
    %v2136 = vadd.f32 %v1965, %v2135
    %2137 = vmatmul.bf16.gmra.mxu0 %v2101
    %v2138 = vpop.f32.mrf.mxu0
    %v2139 = vadd.f32 %v1968, %v2138
    %v2140 = vpop.f32.mrf.mxu0
    %v2141 = vadd.f32 %v1970, %v2140
    %2142 = vdwg.mxu0
    %2143 = vmatpush.bf16.msra.mxu0 %v2107
    %2144 = vmatpush.bf16.msra.mxu0 %v2071
    %2145 = vmatpush.bf16.msra.mxu0 %v2069
    %2146 = vmatpush.bf16.msra.mxu0 %v2067
    %2147 = vmatpush.bf16.msra.mxu0 %v2065
    %2148 = vmatpush.bf16.msra.mxu0 %v2063
    %2149 = vmatpush.bf16.msra.mxu0 %v2061
    %2150 = vmatpush.bf16.msra.mxu0 %v2059
    %2151 = vmatmul.bf16.gmra.mxu0 %v2089
    %v2152 = vpop.f32.mrf.mxu0
    %v2153 = vadd.f32 %v1982, %v2152
    %v2154 = vpop.f32.mrf.mxu0
    %v2155 = vadd.f32 %v1984, %v2154
    %2156 = vmatmul.bf16.gmra.mxu0 %v2092
    %v2157 = vpop.f32.mrf.mxu0
    %v2158 = vadd.f32 %v1987, %v2157
    %v2159 = vpop.f32.mrf.mxu0
    %v2160 = vadd.f32 %v1989, %v2159
    %2161 = vmatmul.bf16.gmra.mxu0 %v2095
    %v2162 = vpop.f32.mrf.mxu0
    %v2163 = vadd.f32 %v1992, %v2162
    %v2164 = vpop.f32.mrf.mxu0
    %v2165 = vadd.f32 %v1994, %v2164
    %2166 = vmatmul.bf16.gmra.mxu0 %v2098
    %v2167 = vpop.f32.mrf.mxu0
    %v2168 = vadd.f32 %v1997, %v2167
    %v2169 = vpop.f32.mrf.mxu0
    %v2170 = vadd.f32 %v1999, %v2169
    %2171 = vmatmul.bf16.gmra.mxu0 %v2101
    %v2172 = vpop.f32.mrf.mxu0
    %v2173 = vadd.f32 %v2002, %v2172
    %v2174 = vpop.f32.mrf.mxu0
    %v2175 = vadd.f32 %v2004, %v2174
    %2176 = vdwg.mxu0
    %s2177 = scalar_lea.vmem %s3, 240
    %v2178 = vld [vmem:[%s2177] sm:$0xff]
    %v2179 = vld [vmem:[%s2177 + $0x8] sm:$0xff]
    %v2180 = vld [vmem:[%s2177 + $0x10] sm:$0xff]
    %v2181 = vld [vmem:[%s2177 + $0x18] sm:$0xff]
    %v2182 = vld [vmem:[%s2177 + $0x20] sm:$0xff]
    %v2183 = vld [vmem:[%s2177 + $0x28] sm:$0xff]
    %v2184 = vld [vmem:[%s2177 + $0x30] sm:$0xff]
    %v2185 = vld [vmem:[%s2177 + $0x38] sm:$0xff]
    %v2186 = vld [vmem:[%s2177 + $0x40] sm:$0xff]
    %v2187 = vld [vmem:[%s2177 + $0x48] sm:$0xff]
    %v2188 = vld [vmem:[%s2177 + $0x50] sm:$0xff]
    %v2189 = vld [vmem:[%s2177 + $0x58] sm:$0xff]
    %v2190 = vld [vmem:[%s2177 + $0x60] sm:$0xff]
    %v2191 = vld [vmem:[%s2177 + $0x68] sm:$0xff]
    %v2192 = vld [vmem:[%s2177 + $0x70] sm:$0xff]
    %v2194 = vunpack.c.l.b16 %v1783
    %v2195 = vpack.c.b16 %v2194, %v1834
    %v2211 = vunpack.c.l.b16 %v2178
    %v2212 = vunpack.c.h.b16 %v2178
    %v2213 = vunpack.c.l.b16 %v2179
    %v2214 = vunpack.c.h.b16 %v2179
    %v2215 = vunpack.c.l.b16 %v2180
    %v2216 = vunpack.c.h.b16 %v2180
    %v2217 = vunpack.c.l.b16 %v2181
    %v2218 = vunpack.c.h.b16 %v2181
    %v2219 = vunpack.c.l.b16 %v2182
    %v2220 = vunpack.c.h.b16 %v2182
    %v2221 = vunpack.c.l.b16 %v2183
    %v2222 = vunpack.c.h.b16 %v2183
    %v2223 = vunpack.c.l.b16 %v2184
    %v2224 = vunpack.c.h.b16 %v2184
    %v2225 = vunpack.c.l.b16 %v2185
    %v2226 = vunpack.c.h.b16 %v2185
    %v2227 = vunpack.c.l.b16 %v2186
    %v2228 = vunpack.c.h.b16 %v2186
    %v2229 = vunpack.c.l.b16 %v2187
    %v2230 = vunpack.c.h.b16 %v2187
    %v2231 = vunpack.c.l.b16 %v2188
    %v2232 = vunpack.c.h.b16 %v2188
    %v2233 = vunpack.c.l.b16 %v2189
    %v2234 = vunpack.c.h.b16 %v2189
    %v2235 = vunpack.c.l.b16 %v2190
    %v2236 = vunpack.c.h.b16 %v2190
    %v2237 = vunpack.c.l.b16 %v2191
    %v2238 = vunpack.c.h.b16 %v2191
    %v2239 = vunpack.c.l.b16 %v2192
    %v2240 = vunpack.c.h.b16 %v2192
    %v2241 = vpack.c.b16 %v2213, %v2211
    %v2242 = vpack.c.b16 %v2214, %v2212
    %v2243 = vpack.c.b16 %v2217, %v2215
    %v2244 = vpack.c.b16 %v2218, %v2216
    %v2245 = vpack.c.b16 %v2221, %v2219
    %v2246 = vpack.c.b16 %v2222, %v2220
    %v2247 = vpack.c.b16 %v2225, %v2223
    %v2248 = vpack.c.b16 %v2226, %v2224
    %v2249 = vpack.c.b16 %v2229, %v2227
    %v2250 = vpack.c.b16 %v2230, %v2228
    %v2251 = vpack.c.b16 %v2233, %v2231
    %v2252 = vpack.c.b16 %v2234, %v2232
    %v2253 = vpack.c.b16 %v2237, %v2235
    %v2254 = vpack.c.b16 %v2238, %v2236
    %v2255 = vpack.c.b16 %v2239, %v2239
    %v2256 = vpack.c.b16 %v2240, %v2240
    %v2272 = vsel %vm1915, %v2195, 0
    %v2275 = vsel %vm1931, %v2255, 0
    %v2278 = vsel %vm1931, %v2256, 0
    %2280 = vmatpush.bf16.msra.mxu0 %v2275
    %2281 = vmatpush.bf16.msra.mxu0 %v2253
    %2282 = vmatpush.bf16.msra.mxu0 %v2251
    %2283 = vmatpush.bf16.msra.mxu0 %v2249
    %2284 = vmatpush.bf16.msra.mxu0 %v2247
    %2285 = vmatpush.bf16.msra.mxu0 %v2245
    %2286 = vmatpush.bf16.msra.mxu0 %v2243
    %2287 = vmatpush.bf16.msra.mxu0 %v2241
    %2288 = vmatmul.bf16.gmra.mxu0 %v2092
    %v2289 = vpop.f32.mrf.mxu0
    %v2290 = vadd.f32 0.0, %v2289
    %v2291 = vpop.f32.mrf.mxu0
    %v2292 = vadd.f32 0.0, %v2291
    %2293 = vmatmul.bf16.gmra.mxu0 %v2095
    %v2294 = vpop.f32.mrf.mxu0
    %v2295 = vadd.f32 0.0, %v2294
    %v2296 = vpop.f32.mrf.mxu0
    %v2297 = vadd.f32 0.0, %v2296
    %2298 = vmatmul.bf16.gmra.mxu0 %v2098
    %v2299 = vpop.f32.mrf.mxu0
    %v2300 = vadd.f32 0.0, %v2299
    %v2301 = vpop.f32.mrf.mxu0
    %v2302 = vadd.f32 0.0, %v2301
    %2303 = vmatmul.bf16.gmra.mxu0 %v2101
    %v2304 = vpop.f32.mrf.mxu0
    %v2305 = vadd.f32 0.0, %v2304
    %v2306 = vpop.f32.mrf.mxu0
    %v2307 = vadd.f32 0.0, %v2306
    %2308 = vmatmul.bf16.gmra.mxu0 %v2272
    %v2309 = vpop.f32.mrf.mxu0
    %v2310 = vadd.f32 0.0, %v2309
    %v2311 = vpop.f32.mrf.mxu0
    %v2312 = vadd.f32 0.0, %v2311
    %2313 = vdwg.mxu0
    %2314 = vmatpush.bf16.msra.mxu0 %v2278
    %2315 = vmatpush.bf16.msra.mxu0 %v2254
    %2316 = vmatpush.bf16.msra.mxu0 %v2252
    %2317 = vmatpush.bf16.msra.mxu0 %v2250
    %2318 = vmatpush.bf16.msra.mxu0 %v2248
    %2319 = vmatpush.bf16.msra.mxu0 %v2246
    %2320 = vmatpush.bf16.msra.mxu0 %v2244
    %2321 = vmatpush.bf16.msra.mxu0 %v2242
    %2322 = vmatmul.bf16.gmra.mxu0 %v2092
    %v2323 = vpop.f32.mrf.mxu0
    %v2324 = vadd.f32 0.0, %v2323
    %v2325 = vpop.f32.mrf.mxu0
    %v2326 = vadd.f32 0.0, %v2325
    %2327 = vmatmul.bf16.gmra.mxu0 %v2095
    %v2328 = vpop.f32.mrf.mxu0
    %v2329 = vadd.f32 0.0, %v2328
    %v2330 = vpop.f32.mrf.mxu0
    %v2331 = vadd.f32 0.0, %v2330
    %2332 = vmatmul.bf16.gmra.mxu0 %v2098
    %v2333 = vpop.f32.mrf.mxu0
    %v2334 = vadd.f32 0.0, %v2333
    %v2335 = vpop.f32.mrf.mxu0
    %v2336 = vadd.f32 0.0, %v2335
    %2337 = vmatmul.bf16.gmra.mxu0 %v2101
    %v2338 = vpop.f32.mrf.mxu0
    %v2339 = vadd.f32 0.0, %v2338
    %v2340 = vpop.f32.mrf.mxu0
    %v2341 = vadd.f32 0.0, %v2340
    %2342 = vmatmul.bf16.gmra.mxu0 %v2272
    %v2343 = vpop.f32.mrf.mxu0
    %v2344 = vadd.f32 0.0, %v2343
    %v2345 = vpop.f32.mrf.mxu0
    %v2346 = vadd.f32 0.0, %v2345
    %2347 = vdwg.mxu0
    %v2348 = vadd.f32 %v2119, %v2290
    %v2349 = vadd.f32 %v2153, %v2324
    %v2350 = vadd.f32 %v2121, %v2292
    %v2351 = vadd.f32 %v2155, %v2326
    %v2352 = vadd.f32 %v2124, %v2295
    %v2353 = vadd.f32 %v2158, %v2329
    %v2354 = vadd.f32 %v2126, %v2297
    %v2355 = vadd.f32 %v2160, %v2331
    %v2356 = vadd.f32 %v2129, %v2300
    %v2357 = vadd.f32 %v2163, %v2334
    %v2358 = vadd.f32 %v2131, %v2302
    %v2359 = vadd.f32 %v2165, %v2336
    %v2360 = vadd.f32 %v2134, %v2305
    %v2361 = vadd.f32 %v2168, %v2339
    %v2362 = vadd.f32 %v2136, %v2307
    %v2363 = vadd.f32 %v2170, %v2341
    %v2364 = vadd.f32 %v2139, %v2310
    %v2365 = vadd.f32 %v2173, %v2344
    %v2366 = vadd.f32 %v2141, %v2312
    %v2367 = vadd.f32 %v2175, %v2346
    %v2368 = vld [vmem:[%s4] sm:$0x3]
    %v2370 = vperm.slane %v2368, 0
    %v2371 = vperm.slane %v2368, 1
    %v2374 = vadd.f32 %v2348, %v2370
    %v2375 = vadd.f32 %v2349, %v2371
    %v2376 = vadd.f32 %v2350, %v2370
    %v2377 = vadd.f32 %v2351, %v2371
    %v2378 = vadd.f32 %v2352, %v2370
    %v2379 = vadd.f32 %v2353, %v2371
    %v2380 = vadd.f32 %v2354, %v2370
    %v2381 = vadd.f32 %v2355, %v2371
    %v2382 = vadd.f32 %v2356, %v2370
    %v2383 = vadd.f32 %v2357, %v2371
    %v2384 = vadd.f32 %v2358, %v2370
    %v2385 = vadd.f32 %v2359, %v2371
    %v2386 = vadd.f32 %v2360, %v2370
    %v2387 = vadd.f32 %v2361, %v2371
    %v2388 = vadd.f32 %v2362, %v2370
    %v2389 = vadd.f32 %v2363, %v2371
    %v2390 = vadd.f32 %v2364, %v2370
    %v2391 = vadd.f32 %v2365, %v2371
    %v2392 = vadd.f32 %v2366, %v2370
    %v2393 = vadd.f32 %v2367, %v2371
    %v2394 = vmax.f32 %v2374, 0.0
    %v2395 = vmax.f32 %v2375, 0.0
    %v2396 = vmax.f32 %v2376, 0.0
    %v2397 = vmax.f32 %v2377, 0.0
    %v2398 = vmax.f32 %v2378, 0.0
    %v2399 = vmax.f32 %v2379, 0.0
    %v2400 = vmax.f32 %v2380, 0.0
    %v2401 = vmax.f32 %v2381, 0.0
    %v2402 = vmax.f32 %v2382, 0.0
    %v2403 = vmax.f32 %v2383, 0.0
    %v2404 = vmax.f32 %v2384, 0.0
    %v2405 = vmax.f32 %v2385, 0.0
    %v2406 = vmax.f32 %v2386, 0.0
    %v2407 = vmax.f32 %v2387, 0.0
    %v2408 = vmax.f32 %v2388, 0.0
    %v2409 = vmax.f32 %v2389, 0.0
    %v2410 = vmax.f32 %v2390, 0.0
    %v2411 = vmax.f32 %v2391, 0.0
    %v2412 = vmax.f32 %v2392, 0.0
    %v2413 = vmax.f32 %v2393, 0.0
    %v2414 = vpack.c.bf16 %v2395, %v2394
    %v2415 = vpack.c.bf16 %v2397, %v2396
    %v2416 = vpack.c.bf16 %v2399, %v2398
    %v2417 = vpack.c.bf16 %v2401, %v2400
    %v2418 = vpack.c.bf16 %v2403, %v2402
    %v2419 = vpack.c.bf16 %v2405, %v2404
    %v2420 = vpack.c.bf16 %v2407, %v2406
    %v2421 = vpack.c.bf16 %v2409, %v2408
    %v2422 = vpack.c.bf16 %v2411, %v2410
    %v2423 = vpack.c.bf16 %v2413, %v2412
    %v2424 = vld [vmem:[%s5] sm:$0xff]
    %v2425 = vld [vmem:[%s5 + $0x8] sm:$0xff]
    %v2426 = vld [vmem:[%s5 + $0x10] sm:$0xff]
    %v2427 = vld [vmem:[%s5 + $0x18] sm:$0xff]
    %v2428 = vld [vmem:[%s5 + $0x20] sm:$0xff]
    %v2429 = vld [vmem:[%s5 + $0x28] sm:$0xff]
    %v2430 = vld [vmem:[%s5 + $0x30] sm:$0xff]
    %v2431 = vld [vmem:[%s5 + $0x38] sm:$0xff]
    %v2432 = vld [vmem:[%s5 + $0x40] sm:$0xff]
    %v2433 = vld [vmem:[%s5 + $0x48] sm:$0xff]
    %v2434 = vld [vmem:[%s5 + $0x50] sm:$0xff]
    %v2435 = vld [vmem:[%s5 + $0x58] sm:$0xff]
    %v2436 = vld [vmem:[%s5 + $0x60] sm:$0xff]
    %v2437 = vld [vmem:[%s5 + $0x68] sm:$0xff]
    %v2438 = vld [vmem:[%s5 + $0x70] sm:$0xff]
    %v2439 = vld [vmem:[%s5 + $0x78] sm:$0xff]
    %v2440 = vld [vmem:[%s5 + $0x80] sm:$0xff]
    %v2441 = vld [vmem:[%s5 + $0x88] sm:$0xff]
    %v2442 = vld [vmem:[%s5 + $0x90] sm:$0xff]
    %v2443 = vld [vmem:[%s5 + $0x98] sm:$0xff]
    %v2444 = vld [vmem:[%s5 + $0xa0] sm:$0xff]
    %v2445 = vld [vmem:[%s5 + $0xa8] sm:$0xff]
    %v2446 = vld [vmem:[%s5 + $0xb0] sm:$0xff]
    %v2447 = vld [vmem:[%s5 + $0xb8] sm:$0xff]
    %v2448 = vld [vmem:[%s5 + $0xc0] sm:$0xff]
    %v2449 = vld [vmem:[%s5 + $0xc8] sm:$0xff]
    %v2450 = vld [vmem:[%s5 + $0xd0] sm:$0xff]
    %v2451 = vld [vmem:[%s5 + $0xd8] sm:$0xff]
    %v2452 = vld [vmem:[%s5 + $0xe0] sm:$0xff]
    %v2453 = vld [vmem:[%s5 + $0xe8] sm:$0xff]
    %v2454 = vld [vmem:[%s5 + $0xf0] sm:$0xff]
    %v2455 = vld [vmem:[%s5 + $0xf8] sm:$0xff]
    %v2456 = vld [vmem:[%s5 + $0x100] sm:$0xff]
    %v2457 = vld [vmem:[%s5 + $0x108] sm:$0xff]
    %v2458 = vld [vmem:[%s5 + $0x110] sm:$0xff]
    %v2459 = vld [vmem:[%s5 + $0x118] sm:$0xff]
    %v2460 = vld [vmem:[%s5 + $0x120] sm:$0xff]
    %v2461 = vld [vmem:[%s5 + $0x128] sm:$0xff]
    %v2462 = vld [vmem:[%s5 + $0x130] sm:$0xff]
    %v2463 = vld [vmem:[%s5 + $0x138] sm:$0xff]
    %v2464 = vld [vmem:[%s5 + $0x140] sm:$0xff]
    %v2465 = vld [vmem:[%s5 + $0x148] sm:$0xff]
    %v2466 = vld [vmem:[%s5 + $0x150] sm:$0xff]
    %v2467 = vld [vmem:[%s5 + $0x158] sm:$0xff]
    %v2468 = vld [vmem:[%s5 + $0x160] sm:$0xff]
    %v2469 = vld [vmem:[%s5 + $0x168] sm:$0xff]
    %v2470 = vld [vmem:[%s5 + $0x170] sm:$0xff]
    %v2471 = vld [vmem:[%s5 + $0x178] sm:$0xff]
    %v2472 = vld [vmem:[%s5 + $0x180] sm:$0xff]
    %v2473 = vld [vmem:[%s5 + $0x188] sm:$0xff]
    %s2474 = scalar_lea.vmem %s5, 400
    %v2475 = vld [vmem:[%s2474] sm:$0xff]
    %v2476 = vld [vmem:[%s2474 + $0x8] sm:$0xff]
    %v2477 = vld [vmem:[%s2474 + $0x10] sm:$0xff]
    %v2478 = vld [vmem:[%s2474 + $0x18] sm:$0xff]
    %v2479 = vld [vmem:[%s2474 + $0x20] sm:$0xff]
    %v2480 = vld [vmem:[%s2474 + $0x28] sm:$0xff]
    %v2481 = vld [vmem:[%s2474 + $0x30] sm:$0xff]
    %v2482 = vld [vmem:[%s2474 + $0x38] sm:$0xff]
    %v2483 = vld [vmem:[%s2474 + $0x40] sm:$0xff]
    %v2484 = vld [vmem:[%s2474 + $0x48] sm:$0xff]
    %v2485 = vld [vmem:[%s2474 + $0x50] sm:$0xff]
    %v2486 = vld [vmem:[%s2474 + $0x58] sm:$0xff]
    %v2487 = vld [vmem:[%s2474 + $0x60] sm:$0xff]
    %v2488 = vld [vmem:[%s2474 + $0x68] sm:$0xff]
    %v2489 = vld [vmem:[%s2474 + $0x70] sm:$0xff]
    %v2490 = vld [vmem:[%s2474 + $0x78] sm:$0xff]
    %v2491 = vld [vmem:[%s2474 + $0x80] sm:$0xff]
    %v2492 = vld [vmem:[%s2474 + $0x88] sm:$0xff]
    %v2493 = vld [vmem:[%s2474 + $0x90] sm:$0xff]
    %v2494 = vld [vmem:[%s2474 + $0x98] sm:$0xff]
    %v2495 = vld [vmem:[%s2474 + $0xa0] sm:$0xff]
    %v2496 = vld [vmem:[%s2474 + $0xa8] sm:$0xff]
    %v2497 = vld [vmem:[%s2474 + $0xb0] sm:$0xff]
    %v2498 = vld [vmem:[%s2474 + $0xb8] sm:$0xff]
    %v2499 = vld [vmem:[%s2474 + $0xc0] sm:$0xff]
    %v2500 = vld [vmem:[%s2474 + $0xc8] sm:$0xff]
    %v2501 = vld [vmem:[%s2474 + $0xd0] sm:$0xff]
    %v2502 = vld [vmem:[%s2474 + $0xd8] sm:$0xff]
    %v2503 = vld [vmem:[%s2474 + $0xe0] sm:$0xff]
    %v2504 = vld [vmem:[%s2474 + $0xe8] sm:$0xff]
    %v2505 = vld [vmem:[%s2474 + $0xf0] sm:$0xff]
    %v2506 = vld [vmem:[%s2474 + $0xf8] sm:$0xff]
    %v2507 = vld [vmem:[%s2474 + $0x100] sm:$0xff]
    %v2508 = vld [vmem:[%s2474 + $0x108] sm:$0xff]
    %v2509 = vld [vmem:[%s2474 + $0x110] sm:$0xff]
    %v2510 = vld [vmem:[%s2474 + $0x118] sm:$0xff]
    %v2511 = vld [vmem:[%s2474 + $0x120] sm:$0xff]
    %v2512 = vld [vmem:[%s2474 + $0x128] sm:$0xff]
    %v2513 = vld [vmem:[%s2474 + $0x130] sm:$0xff]
    %v2514 = vld [vmem:[%s2474 + $0x138] sm:$0xff]
    %v2515 = vld [vmem:[%s2474 + $0x140] sm:$0xff]
    %v2516 = vld [vmem:[%s2474 + $0x148] sm:$0xff]
    %v2517 = vld [vmem:[%s2474 + $0x150] sm:$0xff]
    %v2518 = vld [vmem:[%s2474 + $0x158] sm:$0xff]
    %v2519 = vld [vmem:[%s2474 + $0x160] sm:$0xff]
    %v2520 = vld [vmem:[%s2474 + $0x168] sm:$0xff]
    %v2521 = vld [vmem:[%s2474 + $0x170] sm:$0xff]
    %v2522 = vld [vmem:[%s2474 + $0x178] sm:$0xff]
    %v2523 = vld [vmem:[%s2474 + $0x180] sm:$0xff]
    %v2524 = vld [vmem:[%s2474 + $0x188] sm:$0xff]
    %v2526 = vunpack.c.l.b16 %v2415
    %v2527 = vunpack.c.h.b16 %v2415
    %v2528 = vpack.c.b16 %v2526, %v2526
    %v2529 = vpack.c.b16 %v2527, %v2527
    %v2581 = vunpack.c.l.b16 %v2475
    %v2582 = vunpack.c.h.b16 %v2475
    %v2583 = vunpack.c.l.b16 %v2476
    %v2584 = vunpack.c.h.b16 %v2476
    %v2585 = vunpack.c.l.b16 %v2477
    %v2586 = vunpack.c.h.b16 %v2477
    %v2587 = vunpack.c.l.b16 %v2478
    %v2588 = vunpack.c.h.b16 %v2478
    %v2589 = vunpack.c.l.b16 %v2479
    %v2590 = vunpack.c.h.b16 %v2479
    %v2591 = vunpack.c.l.b16 %v2480
    %v2592 = vunpack.c.h.b16 %v2480
    %v2593 = vunpack.c.l.b16 %v2481
    %v2594 = vunpack.c.h.b16 %v2481
    %v2595 = vunpack.c.l.b16 %v2482
    %v2596 = vunpack.c.h.b16 %v2482
    %v2597 = vunpack.c.l.b16 %v2483
    %v2598 = vunpack.c.h.b16 %v2483
    %v2599 = vunpack.c.l.b16 %v2484
    %v2600 = vunpack.c.h.b16 %v2484
    %v2601 = vunpack.c.l.b16 %v2485
    %v2602 = vunpack.c.h.b16 %v2485
    %v2603 = vunpack.c.l.b16 %v2486
    %v2604 = vunpack.c.h.b16 %v2486
    %v2605 = vunpack.c.l.b16 %v2487
    %v2606 = vunpack.c.h.b16 %v2487
    %v2607 = vunpack.c.l.b16 %v2488
    %v2608 = vunpack.c.h.b16 %v2488
    %v2609 = vunpack.c.l.b16 %v2489
    %v2610 = vunpack.c.h.b16 %v2489
    %v2611 = vunpack.c.l.b16 %v2490
    %v2612 = vunpack.c.h.b16 %v2490
    %v2613 = vunpack.c.l.b16 %v2491
    %v2614 = vunpack.c.h.b16 %v2491
    %v2615 = vunpack.c.l.b16 %v2492
    %v2616 = vunpack.c.h.b16 %v2492
    %v2617 = vunpack.c.l.b16 %v2493
    %v2618 = vunpack.c.h.b16 %v2493
    %v2619 = vunpack.c.l.b16 %v2494
    %v2620 = vunpack.c.h.b16 %v2494
    %v2621 = vunpack.c.l.b16 %v2495
    %v2622 = vunpack.c.h.b16 %v2495
    %v2623 = vunpack.c.l.b16 %v2496
    %v2624 = vunpack.c.h.b16 %v2496
    %v2625 = vunpack.c.l.b16 %v2497
    %v2626 = vunpack.c.h.b16 %v2497
    %v2627 = vunpack.c.l.b16 %v2498
    %v2628 = vunpack.c.h.b16 %v2498
    %v2629 = vunpack.c.l.b16 %v2499
    %v2630 = vunpack.c.h.b16 %v2499
    %v2631 = vunpack.c.l.b16 %v2500
    %v2632 = vunpack.c.h.b16 %v2500
    %v2633 = vunpack.c.l.b16 %v2501
    %v2634 = vunpack.c.h.b16 %v2501
    %v2635 = vunpack.c.l.b16 %v2502
    %v2636 = vunpack.c.h.b16 %v2502
    %v2637 = vunpack.c.l.b16 %v2503
    %v2638 = vunpack.c.h.b16 %v2503
    %v2639 = vunpack.c.l.b16 %v2504
    %v2640 = vunpack.c.h.b16 %v2504
    %v2641 = vunpack.c.l.b16 %v2505
    %v2642 = vunpack.c.h.b16 %v2505
    %v2643 = vunpack.c.l.b16 %v2506
    %v2644 = vunpack.c.h.b16 %v2506
    %v2645 = vunpack.c.l.b16 %v2507
    %v2646 = vunpack.c.h.b16 %v2507
    %v2647 = vunpack.c.l.b16 %v2508
    %v2648 = vunpack.c.h.b16 %v2508
    %v2649 = vunpack.c.l.b16 %v2509
    %v2650 = vunpack.c.h.b16 %v2509
    %v2651 = vunpack.c.l.b16 %v2510
    %v2652 = vunpack.c.h.b16 %v2510
    %v2653 = vunpack.c.l.b16 %v2511
    %v2654 = vunpack.c.h.b16 %v2511
    %v2655 = vunpack.c.l.b16 %v2512
    %v2656 = vunpack.c.h.b16 %v2512
    %v2657 = vunpack.c.l.b16 %v2513
    %v2658 = vunpack.c.h.b16 %v2513
    %v2659 = vunpack.c.l.b16 %v2514
    %v2660 = vunpack.c.h.b16 %v2514
    %v2661 = vunpack.c.l.b16 %v2515
    %v2662 = vunpack.c.h.b16 %v2515
    %v2663 = vunpack.c.l.b16 %v2516
    %v2664 = vunpack.c.h.b16 %v2516
    %v2665 = vunpack.c.l.b16 %v2517
    %v2666 = vunpack.c.h.b16 %v2517
    %v2667 = vunpack.c.l.b16 %v2518
    %v2668 = vunpack.c.h.b16 %v2518
    %v2669 = vunpack.c.l.b16 %v2519
    %v2670 = vunpack.c.h.b16 %v2519
    %v2671 = vunpack.c.l.b16 %v2520
    %v2672 = vunpack.c.h.b16 %v2520
    %v2673 = vunpack.c.l.b16 %v2521
    %v2674 = vunpack.c.h.b16 %v2521
    %v2675 = vunpack.c.l.b16 %v2522
    %v2676 = vunpack.c.h.b16 %v2522
    %v2677 = vunpack.c.l.b16 %v2523
    %v2678 = vunpack.c.h.b16 %v2523
    %v2679 = vunpack.c.l.b16 %v2524
    %v2680 = vunpack.c.h.b16 %v2524
    %v2681 = vpack.c.b16 %v2585, %v2581
    %v2682 = vpack.c.b16 %v2586, %v2582
    %v2683 = vpack.c.b16 %v2587, %v2583
    %v2684 = vpack.c.b16 %v2588, %v2584
    %v2685 = vpack.c.b16 %v2593, %v2589
    %v2686 = vpack.c.b16 %v2594, %v2590
    %v2687 = vpack.c.b16 %v2595, %v2591
    %v2688 = vpack.c.b16 %v2596, %v2592
    %v2689 = vpack.c.b16 %v2601, %v2597
    %v2690 = vpack.c.b16 %v2602, %v2598
    %v2691 = vpack.c.b16 %v2603, %v2599
    %v2692 = vpack.c.b16 %v2604, %v2600
    %v2693 = vpack.c.b16 %v2609, %v2605
    %v2694 = vpack.c.b16 %v2610, %v2606
    %v2695 = vpack.c.b16 %v2611, %v2607
    %v2696 = vpack.c.b16 %v2612, %v2608
    %v2697 = vpack.c.b16 %v2617, %v2613
    %v2698 = vpack.c.b16 %v2618, %v2614
    %v2699 = vpack.c.b16 %v2619, %v2615
    %v2700 = vpack.c.b16 %v2620, %v2616
    %v2701 = vpack.c.b16 %v2625, %v2621
    %v2702 = vpack.c.b16 %v2626, %v2622
    %v2703 = vpack.c.b16 %v2627, %v2623
    %v2704 = vpack.c.b16 %v2628, %v2624
    %v2705 = vpack.c.b16 %v2633, %v2629
    %v2706 = vpack.c.b16 %v2634, %v2630
    %v2707 = vpack.c.b16 %v2635, %v2631
    %v2708 = vpack.c.b16 %v2636, %v2632
    %v2709 = vpack.c.b16 %v2641, %v2637
    %v2710 = vpack.c.b16 %v2642, %v2638
    %v2711 = vpack.c.b16 %v2643, %v2639
    %v2712 = vpack.c.b16 %v2644, %v2640
    %v2713 = vpack.c.b16 %v2649, %v2645
    %v2714 = vpack.c.b16 %v2650, %v2646
    %v2715 = vpack.c.b16 %v2651, %v2647
    %v2716 = vpack.c.b16 %v2652, %v2648
    %v2717 = vpack.c.b16 %v2657, %v2653
    %v2718 = vpack.c.b16 %v2658, %v2654
    %v2719 = vpack.c.b16 %v2659, %v2655
    %v2720 = vpack.c.b16 %v2660, %v2656
    %v2721 = vpack.c.b16 %v2665, %v2661
    %v2722 = vpack.c.b16 %v2666, %v2662
    %v2723 = vpack.c.b16 %v2667, %v2663
    %v2724 = vpack.c.b16 %v2668, %v2664
    %v2725 = vpack.c.b16 %v2673, %v2669
    %v2726 = vpack.c.b16 %v2674, %v2670
    %v2727 = vpack.c.b16 %v2675, %v2671
    %v2728 = vpack.c.b16 %v2676, %v2672
    %v2729 = vpack.c.b16 %v2677, %v2677
    %v2730 = vpack.c.b16 %v2678, %v2678
    %v2731 = vpack.c.b16 %v2679, %v2679
    %v2732 = vpack.c.b16 %v2680, %v2680
    %vm2781 = vcmask 588800
    %v2783 = vsel %vm2781, %v2529, 0
    %v2786 = vsel %vm1931, %v2729, 0
    %v2789 = vsel %vm1931, %v2730, 0
    %v2792 = vsel %vm1931, %v2731, 0
    %v2795 = vsel %vm1931, %v2732, 0
    %2797 = vmatpush.bf16.msra.mxu0 %v2709
    %2798 = vmatpush.bf16.msra.mxu0 %v2705
    %2799 = vmatpush.bf16.msra.mxu0 %v2701
    %2800 = vmatpush.bf16.msra.mxu0 %v2697
    %2801 = vmatpush.bf16.msra.mxu0 %v2693
    %2802 = vmatpush.bf16.msra.mxu0 %v2689
    %2803 = vmatpush.bf16.msra.mxu0 %v2685
    %2804 = vmatpush.bf16.msra.mxu0 %v2681
    %2805 = vmatmul.bf16.gmra.mxu0 %v2528
    %v2806 = vpop.f32.mrf.mxu0
    %v2807 = vadd.f32 0.0, %v2806
    %v2808 = vpop.f32.mrf.mxu0
    %2809 = vdwg.mxu0
    %2810 = vmatpush.bf16.msra.mxu0 0
    %2811 = vmatpush.bf16.msra.mxu0 0
    %2812 = vmatpush.bf16.msra.mxu0 0
    %2813 = vmatpush.bf16.msra.mxu0 %v2786
    %2814 = vmatpush.bf16.msra.mxu0 %v2725
    %2815 = vmatpush.bf16.msra.mxu0 %v2721
    %2816 = vmatpush.bf16.msra.mxu0 %v2717
    %2817 = vmatpush.bf16.msra.mxu0 %v2713
    %2818 = vmatmul.bf16.gmra.mxu0 %v2783
    %v2819 = vpop.f32.mrf.mxu0
    %v2820 = vadd.f32 %v2807, %v2819
    %v2821 = vpop.f32.mrf.mxu0
    %2822 = vdwg.mxu0
    %2823 = vmatpush.bf16.msra.mxu0 %v2710
    %2824 = vmatpush.bf16.msra.mxu0 %v2706
    %2825 = vmatpush.bf16.msra.mxu0 %v2702
    %2826 = vmatpush.bf16.msra.mxu0 %v2698
    %2827 = vmatpush.bf16.msra.mxu0 %v2694
    %2828 = vmatpush.bf16.msra.mxu0 %v2690
    %2829 = vmatpush.bf16.msra.mxu0 %v2686
    %2830 = vmatpush.bf16.msra.mxu0 %v2682
    %2831 = vmatmul.bf16.gmra.mxu0 %v2528
    %v2832 = vpop.f32.mrf.mxu0
    %v2833 = vadd.f32 0.0, %v2832
    %v2834 = vpop.f32.mrf.mxu0
    %2835 = vdwg.mxu0
    %2836 = vmatpush.bf16.msra.mxu0 0
    %2837 = vmatpush.bf16.msra.mxu0 0
    %2838 = vmatpush.bf16.msra.mxu0 0
    %2839 = vmatpush.bf16.msra.mxu0 %v2789
    %2840 = vmatpush.bf16.msra.mxu0 %v2726
    %2841 = vmatpush.bf16.msra.mxu0 %v2722
    %2842 = vmatpush.bf16.msra.mxu0 %v2718
    %2843 = vmatpush.bf16.msra.mxu0 %v2714
    %2844 = vmatmul.bf16.gmra.mxu0 %v2783
    %v2845 = vpop.f32.mrf.mxu0
    %v2846 = vadd.f32 %v2833, %v2845
    %v2847 = vpop.f32.mrf.mxu0
    %2848 = vdwg.mxu0
    %2849 = vmatpush.bf16.msra.mxu0 %v2711
    %2850 = vmatpush.bf16.msra.mxu0 %v2707
    %2851 = vmatpush.bf16.msra.mxu0 %v2703
    %2852 = vmatpush.bf16.msra.mxu0 %v2699
    %2853 = vmatpush.bf16.msra.mxu0 %v2695
    %2854 = vmatpush.bf16.msra.mxu0 %v2691
    %2855 = vmatpush.bf16.msra.mxu0 %v2687
    %2856 = vmatpush.bf16.msra.mxu0 %v2683
    %2857 = vmatmul.bf16.gmra.mxu0 %v2528
    %v2858 = vpop.f32.mrf.mxu0
    %v2859 = vadd.f32 0.0, %v2858
    %v2860 = vpop.f32.mrf.mxu0
    %2861 = vdwg.mxu0
    %2862 = vmatpush.bf16.msra.mxu0 0
    %2863 = vmatpush.bf16.msra.mxu0 0
    %2864 = vmatpush.bf16.msra.mxu0 0
    %2865 = vmatpush.bf16.msra.mxu0 %v2792
    %2866 = vmatpush.bf16.msra.mxu0 %v2727
    %2867 = vmatpush.bf16.msra.mxu0 %v2723
    %2868 = vmatpush.bf16.msra.mxu0 %v2719
    %2869 = vmatpush.bf16.msra.mxu0 %v2715
    %2870 = vmatmul.bf16.gmra.mxu0 %v2783
    %v2871 = vpop.f32.mrf.mxu0
    %v2872 = vadd.f32 %v2859, %v2871
    %v2873 = vpop.f32.mrf.mxu0
    %2874 = vdwg.mxu0
    %2875 = vmatpush.bf16.msra.mxu0 %v2712
    %2876 = vmatpush.bf16.msra.mxu0 %v2708
    %2877 = vmatpush.bf16.msra.mxu0 %v2704
    %2878 = vmatpush.bf16.msra.mxu0 %v2700
    %2879 = vmatpush.bf16.msra.mxu0 %v2696
    %2880 = vmatpush.bf16.msra.mxu0 %v2692
    %2881 = vmatpush.bf16.msra.mxu0 %v2688
    %2882 = vmatpush.bf16.msra.mxu0 %v2684
    %2883 = vmatmul.bf16.gmra.mxu0 %v2528
    %v2884 = vpop.f32.mrf.mxu0
    %v2885 = vadd.f32 0.0, %v2884
    %v2886 = vpop.f32.mrf.mxu0
    %2887 = vdwg.mxu0
    %2888 = vmatpush.bf16.msra.mxu0 0
    %2889 = vmatpush.bf16.msra.mxu0 0
    %2890 = vmatpush.bf16.msra.mxu0 0
    %2891 = vmatpush.bf16.msra.mxu0 %v2795
    %2892 = vmatpush.bf16.msra.mxu0 %v2728
    %2893 = vmatpush.bf16.msra.mxu0 %v2724
    %2894 = vmatpush.bf16.msra.mxu0 %v2720
    %2895 = vmatpush.bf16.msra.mxu0 %v2716
    %2896 = vmatmul.bf16.gmra.mxu0 %v2783
    %v2897 = vpop.f32.mrf.mxu0
    %v2898 = vadd.f32 %v2885, %v2897
    %v2899 = vpop.f32.mrf.mxu0
    %2900 = vdwg.mxu0
    %v2902 = vunpack.c.l.b16 %v2414
    %v2903 = vunpack.c.h.b16 %v2414
    %v2904 = vpack.c.b16 %v2902, %v2902
    %v2905 = vpack.c.b16 %v2903, %v2903
    %v2957 = vunpack.c.l.b16 %v2424
    %v2958 = vunpack.c.h.b16 %v2424
    %v2959 = vunpack.c.l.b16 %v2425
    %v2960 = vunpack.c.h.b16 %v2425
    %v2961 = vunpack.c.l.b16 %v2426
    %v2962 = vunpack.c.h.b16 %v2426
    %v2963 = vunpack.c.l.b16 %v2427
    %v2964 = vunpack.c.h.b16 %v2427
    %v2965 = vunpack.c.l.b16 %v2428
    %v2966 = vunpack.c.h.b16 %v2428
    %v2967 = vunpack.c.l.b16 %v2429
    %v2968 = vunpack.c.h.b16 %v2429
    %v2969 = vunpack.c.l.b16 %v2430
    %v2970 = vunpack.c.h.b16 %v2430
    %v2971 = vunpack.c.l.b16 %v2431
    %v2972 = vunpack.c.h.b16 %v2431
    %v2973 = vunpack.c.l.b16 %v2432
    %v2974 = vunpack.c.h.b16 %v2432
    %v2975 = vunpack.c.l.b16 %v2433
    %v2976 = vunpack.c.h.b16 %v2433
    %v2977 = vunpack.c.l.b16 %v2434
    %v2978 = vunpack.c.h.b16 %v2434
    %v2979 = vunpack.c.l.b16 %v2435
    %v2980 = vunpack.c.h.b16 %v2435
    %v2981 = vunpack.c.l.b16 %v2436
    %v2982 = vunpack.c.h.b16 %v2436
    %v2983 = vunpack.c.l.b16 %v2437
    %v2984 = vunpack.c.h.b16 %v2437
    %v2985 = vunpack.c.l.b16 %v2438
    %v2986 = vunpack.c.h.b16 %v2438
    %v2987 = vunpack.c.l.b16 %v2439
    %v2988 = vunpack.c.h.b16 %v2439
    %v2989 = vunpack.c.l.b16 %v2440
    %v2990 = vunpack.c.h.b16 %v2440
    %v2991 = vunpack.c.l.b16 %v2441
    %v2992 = vunpack.c.h.b16 %v2441
    %v2993 = vunpack.c.l.b16 %v2442
    %v2994 = vunpack.c.h.b16 %v2442
    %v2995 = vunpack.c.l.b16 %v2443
    %v2996 = vunpack.c.h.b16 %v2443
    %v2997 = vunpack.c.l.b16 %v2444
    %v2998 = vunpack.c.h.b16 %v2444
    %v2999 = vunpack.c.l.b16 %v2445
    %v3000 = vunpack.c.h.b16 %v2445
    %v3001 = vunpack.c.l.b16 %v2446
    %v3002 = vunpack.c.h.b16 %v2446
    %v3003 = vunpack.c.l.b16 %v2447
    %v3004 = vunpack.c.h.b16 %v2447
    %v3005 = vunpack.c.l.b16 %v2448
    %v3006 = vunpack.c.h.b16 %v2448
    %v3007 = vunpack.c.l.b16 %v2449
    %v3008 = vunpack.c.h.b16 %v2449
    %v3009 = vunpack.c.l.b16 %v2450
    %v3010 = vunpack.c.h.b16 %v2450
    %v3011 = vunpack.c.l.b16 %v2451
    %v3012 = vunpack.c.h.b16 %v2451
    %v3013 = vunpack.c.l.b16 %v2452
    %v3014 = vunpack.c.h.b16 %v2452
    %v3015 = vunpack.c.l.b16 %v2453
    %v3016 = vunpack.c.h.b16 %v2453
    %v3017 = vunpack.c.l.b16 %v2454
    %v3018 = vunpack.c.h.b16 %v2454
    %v3019 = vunpack.c.l.b16 %v2455
    %v3020 = vunpack.c.h.b16 %v2455
    %v3021 = vunpack.c.l.b16 %v2456
    %v3022 = vunpack.c.h.b16 %v2456
    %v3023 = vunpack.c.l.b16 %v2457
    %v3024 = vunpack.c.h.b16 %v2457
    %v3025 = vunpack.c.l.b16 %v2458
    %v3026 = vunpack.c.h.b16 %v2458
    %v3027 = vunpack.c.l.b16 %v2459
    %v3028 = vunpack.c.h.b16 %v2459
    %v3029 = vunpack.c.l.b16 %v2460
    %v3030 = vunpack.c.h.b16 %v2460
    %v3031 = vunpack.c.l.b16 %v2461
    %v3032 = vunpack.c.h.b16 %v2461
    %v3033 = vunpack.c.l.b16 %v2462
    %v3034 = vunpack.c.h.b16 %v2462
    %v3035 = vunpack.c.l.b16 %v2463
    %v3036 = vunpack.c.h.b16 %v2463
    %v3037 = vunpack.c.l.b16 %v2464
    %v3038 = vunpack.c.h.b16 %v2464
    %v3039 = vunpack.c.l.b16 %v2465
    %v3040 = vunpack.c.h.b16 %v2465
    %v3041 = vunpack.c.l.b16 %v2466
    %v3042 = vunpack.c.h.b16 %v2466
    %v3043 = vunpack.c.l.b16 %v2467
    %v3044 = vunpack.c.h.b16 %v2467
    %v3045 = vunpack.c.l.b16 %v2468
    %v3046 = vunpack.c.h.b16 %v2468
    %v3047 = vunpack.c.l.b16 %v2469
    %v3048 = vunpack.c.h.b16 %v2469
    %v3049 = vunpack.c.l.b16 %v2470
    %v3050 = vunpack.c.h.b16 %v2470
    %v3051 = vunpack.c.l.b16 %v2471
    %v3052 = vunpack.c.h.b16 %v2471
    %v3053 = vunpack.c.l.b16 %v2472
    %v3054 = vunpack.c.h.b16 %v2472
    %v3055 = vunpack.c.l.b16 %v2473
    %v3056 = vunpack.c.h.b16 %v2473
    %v3057 = vpack.c.b16 %v2961, %v2957
    %v3058 = vpack.c.b16 %v2962, %v2958
    %v3059 = vpack.c.b16 %v2963, %v2959
    %v3060 = vpack.c.b16 %v2964, %v2960
    %v3061 = vpack.c.b16 %v2969, %v2965
    %v3062 = vpack.c.b16 %v2970, %v2966
    %v3063 = vpack.c.b16 %v2971, %v2967
    %v3064 = vpack.c.b16 %v2972, %v2968
    %v3065 = vpack.c.b16 %v2977, %v2973
    %v3066 = vpack.c.b16 %v2978, %v2974
    %v3067 = vpack.c.b16 %v2979, %v2975
    %v3068 = vpack.c.b16 %v2980, %v2976
    %v3069 = vpack.c.b16 %v2985, %v2981
    %v3070 = vpack.c.b16 %v2986, %v2982
    %v3071 = vpack.c.b16 %v2987, %v2983
    %v3072 = vpack.c.b16 %v2988, %v2984
    %v3073 = vpack.c.b16 %v2993, %v2989
    %v3074 = vpack.c.b16 %v2994, %v2990
    %v3075 = vpack.c.b16 %v2995, %v2991
    %v3076 = vpack.c.b16 %v2996, %v2992
    %v3077 = vpack.c.b16 %v3001, %v2997
    %v3078 = vpack.c.b16 %v3002, %v2998
    %v3079 = vpack.c.b16 %v3003, %v2999
    %v3080 = vpack.c.b16 %v3004, %v3000
    %v3081 = vpack.c.b16 %v3009, %v3005
    %v3082 = vpack.c.b16 %v3010, %v3006
    %v3083 = vpack.c.b16 %v3011, %v3007
    %v3084 = vpack.c.b16 %v3012, %v3008
    %v3085 = vpack.c.b16 %v3017, %v3013
    %v3086 = vpack.c.b16 %v3018, %v3014
    %v3087 = vpack.c.b16 %v3019, %v3015
    %v3088 = vpack.c.b16 %v3020, %v3016
    %v3089 = vpack.c.b16 %v3025, %v3021
    %v3090 = vpack.c.b16 %v3026, %v3022
    %v3091 = vpack.c.b16 %v3027, %v3023
    %v3092 = vpack.c.b16 %v3028, %v3024
    %v3093 = vpack.c.b16 %v3033, %v3029
    %v3094 = vpack.c.b16 %v3034, %v3030
    %v3095 = vpack.c.b16 %v3035, %v3031
    %v3096 = vpack.c.b16 %v3036, %v3032
    %v3097 = vpack.c.b16 %v3041, %v3037
    %v3098 = vpack.c.b16 %v3042, %v3038
    %v3099 = vpack.c.b16 %v3043, %v3039
    %v3100 = vpack.c.b16 %v3044, %v3040
    %v3101 = vpack.c.b16 %v3049, %v3045
    %v3102 = vpack.c.b16 %v3050, %v3046
    %v3103 = vpack.c.b16 %v3051, %v3047
    %v3104 = vpack.c.b16 %v3052, %v3048
    %v3105 = vpack.c.b16 %v3053, %v3053
    %v3106 = vpack.c.b16 %v3054, %v3054
    %v3107 = vpack.c.b16 %v3055, %v3055
    %v3108 = vpack.c.b16 %v3056, %v3056
    %v3158 = vsel %vm2781, %v2905, 0
    %v3161 = vsel %vm1931, %v3105, 0
    %v3164 = vsel %vm1931, %v3106, 0
    %v3167 = vsel %vm1931, %v3107, 0
    %v3170 = vsel %vm1931, %v3108, 0
    %3172 = vmatpush.bf16.msra.mxu0 %v3085
    %3173 = vmatpush.bf16.msra.mxu0 %v3081
    %3174 = vmatpush.bf16.msra.mxu0 %v3077
    %3175 = vmatpush.bf16.msra.mxu0 %v3073
    %3176 = vmatpush.bf16.msra.mxu0 %v3069
    %3177 = vmatpush.bf16.msra.mxu0 %v3065
    %3178 = vmatpush.bf16.msra.mxu0 %v3061
    %3179 = vmatpush.bf16.msra.mxu0 %v3057
    %3180 = vmatmul.bf16.gmra.mxu0 %v2904
    %v3181 = vpop.f32.mrf.mxu0
    %v3182 = vadd.f32 %v2820, %v3181
    %v3183 = vpop.f32.mrf.mxu0
    %3184 = vdwg.mxu0
    %3185 = vmatpush.bf16.msra.mxu0 0
    %3186 = vmatpush.bf16.msra.mxu0 0
    %3187 = vmatpush.bf16.msra.mxu0 0
    %3188 = vmatpush.bf16.msra.mxu0 %v3161
    %3189 = vmatpush.bf16.msra.mxu0 %v3101
    %3190 = vmatpush.bf16.msra.mxu0 %v3097
    %3191 = vmatpush.bf16.msra.mxu0 %v3093
    %3192 = vmatpush.bf16.msra.mxu0 %v3089
    %3193 = vmatmul.bf16.gmra.mxu0 %v3158
    %v3194 = vpop.f32.mrf.mxu0
    %v3195 = vadd.f32 %v3182, %v3194
    %v3196 = vpop.f32.mrf.mxu0
    %3197 = vdwg.mxu0
    %3198 = vmatpush.bf16.msra.mxu0 %v3086
    %3199 = vmatpush.bf16.msra.mxu0 %v3082
    %3200 = vmatpush.bf16.msra.mxu0 %v3078
    %3201 = vmatpush.bf16.msra.mxu0 %v3074
    %3202 = vmatpush.bf16.msra.mxu0 %v3070
    %3203 = vmatpush.bf16.msra.mxu0 %v3066
    %3204 = vmatpush.bf16.msra.mxu0 %v3062
    %3205 = vmatpush.bf16.msra.mxu0 %v3058
    %3206 = vmatmul.bf16.gmra.mxu0 %v2904
    %v3207 = vpop.f32.mrf.mxu0
    %v3208 = vadd.f32 %v2846, %v3207
    %v3209 = vpop.f32.mrf.mxu0
    %3210 = vdwg.mxu0
    %3211 = vmatpush.bf16.msra.mxu0 0
    %3212 = vmatpush.bf16.msra.mxu0 0
    %3213 = vmatpush.bf16.msra.mxu0 0
    %3214 = vmatpush.bf16.msra.mxu0 %v3164
    %3215 = vmatpush.bf16.msra.mxu0 %v3102
    %3216 = vmatpush.bf16.msra.mxu0 %v3098
    %3217 = vmatpush.bf16.msra.mxu0 %v3094
    %3218 = vmatpush.bf16.msra.mxu0 %v3090
    %3219 = vmatmul.bf16.gmra.mxu0 %v3158
    %v3220 = vpop.f32.mrf.mxu0
    %v3221 = vadd.f32 %v3208, %v3220
    %v3222 = vpop.f32.mrf.mxu0
    %3223 = vdwg.mxu0
    %3224 = vmatpush.bf16.msra.mxu0 %v3087
    %3225 = vmatpush.bf16.msra.mxu0 %v3083
    %3226 = vmatpush.bf16.msra.mxu0 %v3079
    %3227 = vmatpush.bf16.msra.mxu0 %v3075
    %3228 = vmatpush.bf16.msra.mxu0 %v3071
    %3229 = vmatpush.bf16.msra.mxu0 %v3067
    %3230 = vmatpush.bf16.msra.mxu0 %v3063
    %3231 = vmatpush.bf16.msra.mxu0 %v3059
    %3232 = vmatmul.bf16.gmra.mxu0 %v2904
    %v3233 = vpop.f32.mrf.mxu0
    %v3234 = vadd.f32 %v2872, %v3233
    %v3235 = vpop.f32.mrf.mxu0
    %3236 = vdwg.mxu0
    %3237 = vmatpush.bf16.msra.mxu0 0
    %3238 = vmatpush.bf16.msra.mxu0 0
    %3239 = vmatpush.bf16.msra.mxu0 0
    %3240 = vmatpush.bf16.msra.mxu0 %v3167
    %3241 = vmatpush.bf16.msra.mxu0 %v3103
    %3242 = vmatpush.bf16.msra.mxu0 %v3099
    %3243 = vmatpush.bf16.msra.mxu0 %v3095
    %3244 = vmatpush.bf16.msra.mxu0 %v3091
    %3245 = vmatmul.bf16.gmra.mxu0 %v3158
    %v3246 = vpop.f32.mrf.mxu0
    %v3247 = vadd.f32 %v3234, %v3246
    %v3248 = vpop.f32.mrf.mxu0
    %3249 = vdwg.mxu0
    %3250 = vmatpush.bf16.msra.mxu0 %v3088
    %3251 = vmatpush.bf16.msra.mxu0 %v3084
    %3252 = vmatpush.bf16.msra.mxu0 %v3080
    %3253 = vmatpush.bf16.msra.mxu0 %v3076
    %3254 = vmatpush.bf16.msra.mxu0 %v3072
    %3255 = vmatpush.bf16.msra.mxu0 %v3068
    %3256 = vmatpush.bf16.msra.mxu0 %v3064
    %3257 = vmatpush.bf16.msra.mxu0 %v3060
    %3258 = vmatmul.bf16.gmra.mxu0 %v2904
    %v3259 = vpop.f32.mrf.mxu0
    %v3260 = vadd.f32 %v2898, %v3259
    %v3261 = vpop.f32.mrf.mxu0
    %3262 = vdwg.mxu0
    %3263 = vmatpush.bf16.msra.mxu0 0
    %3264 = vmatpush.bf16.msra.mxu0 0
    %3265 = vmatpush.bf16.msra.mxu0 0
    %3266 = vmatpush.bf16.msra.mxu0 %v3170
    %3267 = vmatpush.bf16.msra.mxu0 %v3104
    %3268 = vmatpush.bf16.msra.mxu0 %v3100
    %3269 = vmatpush.bf16.msra.mxu0 %v3096
    %3270 = vmatpush.bf16.msra.mxu0 %v3092
    %3271 = vmatmul.bf16.gmra.mxu0 %v3158
    %v3272 = vpop.f32.mrf.mxu0
    %v3273 = vadd.f32 %v3260, %v3272
    %v3274 = vpop.f32.mrf.mxu0
    %3275 = vdwg.mxu0
    %s3276 = scalar_lea.vmem %s5, 800
    %v3277 = vld [vmem:[%s3276] sm:$0xff]
    %v3278 = vld [vmem:[%s3276 + $0x8] sm:$0xff]
    %v3279 = vld [vmem:[%s3276 + $0x10] sm:$0xff]
    %v3280 = vld [vmem:[%s3276 + $0x18] sm:$0xff]
    %v3281 = vld [vmem:[%s3276 + $0x20] sm:$0xff]
    %v3282 = vld [vmem:[%s3276 + $0x28] sm:$0xff]
    %v3283 = vld [vmem:[%s3276 + $0x30] sm:$0xff]
    %v3284 = vld [vmem:[%s3276 + $0x38] sm:$0xff]
    %v3285 = vld [vmem:[%s3276 + $0x40] sm:$0xff]
    %v3286 = vld [vmem:[%s3276 + $0x48] sm:$0xff]
    %v3287 = vld [vmem:[%s3276 + $0x50] sm:$0xff]
    %v3288 = vld [vmem:[%s3276 + $0x58] sm:$0xff]
    %v3289 = vld [vmem:[%s3276 + $0x60] sm:$0xff]
    %v3290 = vld [vmem:[%s3276 + $0x68] sm:$0xff]
    %v3291 = vld [vmem:[%s3276 + $0x70] sm:$0xff]
    %v3292 = vld [vmem:[%s3276 + $0x78] sm:$0xff]
    %v3293 = vld [vmem:[%s3276 + $0x80] sm:$0xff]
    %v3294 = vld [vmem:[%s3276 + $0x88] sm:$0xff]
    %v3295 = vld [vmem:[%s3276 + $0x90] sm:$0xff]
    %v3296 = vld [vmem:[%s3276 + $0x98] sm:$0xff]
    %v3297 = vld [vmem:[%s3276 + $0xa0] sm:$0xff]
    %v3298 = vld [vmem:[%s3276 + $0xa8] sm:$0xff]
    %v3299 = vld [vmem:[%s3276 + $0xb0] sm:$0xff]
    %v3300 = vld [vmem:[%s3276 + $0xb8] sm:$0xff]
    %v3301 = vld [vmem:[%s3276 + $0xc0] sm:$0xff]
    %v3302 = vld [vmem:[%s3276 + $0xc8] sm:$0xff]
    %v3303 = vld [vmem:[%s3276 + $0xd0] sm:$0xff]
    %v3304 = vld [vmem:[%s3276 + $0xd8] sm:$0xff]
    %v3305 = vld [vmem:[%s3276 + $0xe0] sm:$0xff]
    %v3306 = vld [vmem:[%s3276 + $0xe8] sm:$0xff]
    %v3307 = vld [vmem:[%s3276 + $0xf0] sm:$0xff]
    %v3308 = vld [vmem:[%s3276 + $0xf8] sm:$0xff]
    %v3309 = vld [vmem:[%s3276 + $0x100] sm:$0xff]
    %v3310 = vld [vmem:[%s3276 + $0x108] sm:$0xff]
    %v3311 = vld [vmem:[%s3276 + $0x110] sm:$0xff]
    %v3312 = vld [vmem:[%s3276 + $0x118] sm:$0xff]
    %v3313 = vld [vmem:[%s3276 + $0x120] sm:$0xff]
    %v3314 = vld [vmem:[%s3276 + $0x128] sm:$0xff]
    %v3315 = vld [vmem:[%s3276 + $0x130] sm:$0xff]
    %v3316 = vld [vmem:[%s3276 + $0x138] sm:$0xff]
    %v3317 = vld [vmem:[%s3276 + $0x140] sm:$0xff]
    %v3318 = vld [vmem:[%s3276 + $0x148] sm:$0xff]
    %v3319 = vld [vmem:[%s3276 + $0x150] sm:$0xff]
    %v3320 = vld [vmem:[%s3276 + $0x158] sm:$0xff]
    %v3321 = vld [vmem:[%s3276 + $0x160] sm:$0xff]
    %v3322 = vld [vmem:[%s3276 + $0x168] sm:$0xff]
    %v3323 = vld [vmem:[%s3276 + $0x170] sm:$0xff]
    %v3324 = vld [vmem:[%s3276 + $0x178] sm:$0xff]
    %v3325 = vld [vmem:[%s3276 + $0x180] sm:$0xff]
    %v3326 = vld [vmem:[%s3276 + $0x188] sm:$0xff]
    %v3328 = vunpack.c.l.b16 %v2416
    %v3329 = vunpack.c.h.b16 %v2416
    %v3330 = vpack.c.b16 %v3328, %v3328
    %v3331 = vpack.c.b16 %v3329, %v3329
    %v3383 = vunpack.c.l.b16 %v3277
    %v3384 = vunpack.c.h.b16 %v3277
    %v3385 = vunpack.c.l.b16 %v3278
    %v3386 = vunpack.c.h.b16 %v3278
    %v3387 = vunpack.c.l.b16 %v3279
    %v3388 = vunpack.c.h.b16 %v3279
    %v3389 = vunpack.c.l.b16 %v3280
    %v3390 = vunpack.c.h.b16 %v3280
    %v3391 = vunpack.c.l.b16 %v3281
    %v3392 = vunpack.c.h.b16 %v3281
    %v3393 = vunpack.c.l.b16 %v3282
    %v3394 = vunpack.c.h.b16 %v3282
    %v3395 = vunpack.c.l.b16 %v3283
    %v3396 = vunpack.c.h.b16 %v3283
    %v3397 = vunpack.c.l.b16 %v3284
    %v3398 = vunpack.c.h.b16 %v3284
    %v3399 = vunpack.c.l.b16 %v3285
    %v3400 = vunpack.c.h.b16 %v3285
    %v3401 = vunpack.c.l.b16 %v3286
    %v3402 = vunpack.c.h.b16 %v3286
    %v3403 = vunpack.c.l.b16 %v3287
    %v3404 = vunpack.c.h.b16 %v3287
    %v3405 = vunpack.c.l.b16 %v3288
    %v3406 = vunpack.c.h.b16 %v3288
    %v3407 = vunpack.c.l.b16 %v3289
    %v3408 = vunpack.c.h.b16 %v3289
    %v3409 = vunpack.c.l.b16 %v3290
    %v3410 = vunpack.c.h.b16 %v3290
    %v3411 = vunpack.c.l.b16 %v3291
    %v3412 = vunpack.c.h.b16 %v3291
    %v3413 = vunpack.c.l.b16 %v3292
    %v3414 = vunpack.c.h.b16 %v3292
    %v3415 = vunpack.c.l.b16 %v3293
    %v3416 = vunpack.c.h.b16 %v3293
    %v3417 = vunpack.c.l.b16 %v3294
    %v3418 = vunpack.c.h.b16 %v3294
    %v3419 = vunpack.c.l.b16 %v3295
    %v3420 = vunpack.c.h.b16 %v3295
    %v3421 = vunpack.c.l.b16 %v3296
    %v3422 = vunpack.c.h.b16 %v3296
    %v3423 = vunpack.c.l.b16 %v3297
    %v3424 = vunpack.c.h.b16 %v3297
    %v3425 = vunpack.c.l.b16 %v3298
    %v3426 = vunpack.c.h.b16 %v3298
    %v3427 = vunpack.c.l.b16 %v3299
    %v3428 = vunpack.c.h.b16 %v3299
    %v3429 = vunpack.c.l.b16 %v3300
    %v3430 = vunpack.c.h.b16 %v3300
    %v3431 = vunpack.c.l.b16 %v3301
    %v3432 = vunpack.c.h.b16 %v3301
    %v3433 = vunpack.c.l.b16 %v3302
    %v3434 = vunpack.c.h.b16 %v3302
    %v3435 = vunpack.c.l.b16 %v3303
    %v3436 = vunpack.c.h.b16 %v3303
    %v3437 = vunpack.c.l.b16 %v3304
    %v3438 = vunpack.c.h.b16 %v3304
    %v3439 = vunpack.c.l.b16 %v3305
    %v3440 = vunpack.c.h.b16 %v3305
    %v3441 = vunpack.c.l.b16 %v3306
    %v3442 = vunpack.c.h.b16 %v3306
    %v3443 = vunpack.c.l.b16 %v3307
    %v3444 = vunpack.c.h.b16 %v3307
    %v3445 = vunpack.c.l.b16 %v3308
    %v3446 = vunpack.c.h.b16 %v3308
    %v3447 = vunpack.c.l.b16 %v3309
    %v3448 = vunpack.c.h.b16 %v3309
    %v3449 = vunpack.c.l.b16 %v3310
    %v3450 = vunpack.c.h.b16 %v3310
    %v3451 = vunpack.c.l.b16 %v3311
    %v3452 = vunpack.c.h.b16 %v3311
    %v3453 = vunpack.c.l.b16 %v3312
    %v3454 = vunpack.c.h.b16 %v3312
    %v3455 = vunpack.c.l.b16 %v3313
    %v3456 = vunpack.c.h.b16 %v3313
    %v3457 = vunpack.c.l.b16 %v3314
    %v3458 = vunpack.c.h.b16 %v3314
    %v3459 = vunpack.c.l.b16 %v3315
    %v3460 = vunpack.c.h.b16 %v3315
    %v3461 = vunpack.c.l.b16 %v3316
    %v3462 = vunpack.c.h.b16 %v3316
    %v3463 = vunpack.c.l.b16 %v3317
    %v3464 = vunpack.c.h.b16 %v3317
    %v3465 = vunpack.c.l.b16 %v3318
    %v3466 = vunpack.c.h.b16 %v3318
    %v3467 = vunpack.c.l.b16 %v3319
    %v3468 = vunpack.c.h.b16 %v3319
    %v3469 = vunpack.c.l.b16 %v3320
    %v3470 = vunpack.c.h.b16 %v3320
    %v3471 = vunpack.c.l.b16 %v3321
    %v3472 = vunpack.c.h.b16 %v3321
    %v3473 = vunpack.c.l.b16 %v3322
    %v3474 = vunpack.c.h.b16 %v3322
    %v3475 = vunpack.c.l.b16 %v3323
    %v3476 = vunpack.c.h.b16 %v3323
    %v3477 = vunpack.c.l.b16 %v3324
    %v3478 = vunpack.c.h.b16 %v3324
    %v3479 = vunpack.c.l.b16 %v3325
    %v3480 = vunpack.c.h.b16 %v3325
    %v3481 = vunpack.c.l.b16 %v3326
    %v3482 = vunpack.c.h.b16 %v3326
    %v3483 = vpack.c.b16 %v3387, %v3383
    %v3484 = vpack.c.b16 %v3388, %v3384
    %v3485 = vpack.c.b16 %v3389, %v3385
    %v3486 = vpack.c.b16 %v3390, %v3386
    %v3487 = vpack.c.b16 %v3395, %v3391
    %v3488 = vpack.c.b16 %v3396, %v3392
    %v3489 = vpack.c.b16 %v3397, %v3393
    %v3490 = vpack.c.b16 %v3398, %v3394
    %v3491 = vpack.c.b16 %v3403, %v3399
    %v3492 = vpack.c.b16 %v3404, %v3400
    %v3493 = vpack.c.b16 %v3405, %v3401
    %v3494 = vpack.c.b16 %v3406, %v3402
    %v3495 = vpack.c.b16 %v3411, %v3407
    %v3496 = vpack.c.b16 %v3412, %v3408
    %v3497 = vpack.c.b16 %v3413, %v3409
    %v3498 = vpack.c.b16 %v3414, %v3410
    %v3499 = vpack.c.b16 %v3419, %v3415
    %v3500 = vpack.c.b16 %v3420, %v3416
    %v3501 = vpack.c.b16 %v3421, %v3417
    %v3502 = vpack.c.b16 %v3422, %v3418
    %v3503 = vpack.c.b16 %v3427, %v3423
    %v3504 = vpack.c.b16 %v3428, %v3424
    %v3505 = vpack.c.b16 %v3429, %v3425
    %v3506 = vpack.c.b16 %v3430, %v3426
    %v3507 = vpack.c.b16 %v3435, %v3431
    %v3508 = vpack.c.b16 %v3436, %v3432
    %v3509 = vpack.c.b16 %v3437, %v3433
    %v3510 = vpack.c.b16 %v3438, %v3434
    %v3511 = vpack.c.b16 %v3443, %v3439
    %v3512 = vpack.c.b16 %v3444, %v3440
    %v3513 = vpack.c.b16 %v3445, %v3441
    %v3514 = vpack.c.b16 %v3446, %v3442
    %v3515 = vpack.c.b16 %v3451, %v3447
    %v3516 = vpack.c.b16 %v3452, %v3448
    %v3517 = vpack.c.b16 %v3453, %v3449
    %v3518 = vpack.c.b16 %v3454, %v3450
    %v3519 = vpack.c.b16 %v3459, %v3455
    %v3520 = vpack.c.b16 %v3460, %v3456
    %v3521 = vpack.c.b16 %v3461, %v3457
    %v3522 = vpack.c.b16 %v3462, %v3458
    %v3523 = vpack.c.b16 %v3467, %v3463
    %v3524 = vpack.c.b16 %v3468, %v3464
    %v3525 = vpack.c.b16 %v3469, %v3465
    %v3526 = vpack.c.b16 %v3470, %v3466
    %v3527 = vpack.c.b16 %v3475, %v3471
    %v3528 = vpack.c.b16 %v3476, %v3472
    %v3529 = vpack.c.b16 %v3477, %v3473
    %v3530 = vpack.c.b16 %v3478, %v3474
    %v3531 = vpack.c.b16 %v3479, %v3479
    %v3532 = vpack.c.b16 %v3480, %v3480
    %v3533 = vpack.c.b16 %v3481, %v3481
    %v3534 = vpack.c.b16 %v3482, %v3482
    %v3584 = vsel %vm2781, %v3331, 0
    %v3587 = vsel %vm1931, %v3531, 0
    %v3590 = vsel %vm1931, %v3532, 0
    %v3593 = vsel %vm1931, %v3533, 0
    %v3596 = vsel %vm1931, %v3534, 0
    %3598 = vmatpush.bf16.msra.mxu0 %v3511
    %3599 = vmatpush.bf16.msra.mxu0 %v3507
    %3600 = vmatpush.bf16.msra.mxu0 %v3503
    %3601 = vmatpush.bf16.msra.mxu0 %v3499
    %3602 = vmatpush.bf16.msra.mxu0 %v3495
    %3603 = vmatpush.bf16.msra.mxu0 %v3491
    %3604 = vmatpush.bf16.msra.mxu0 %v3487
    %3605 = vmatpush.bf16.msra.mxu0 %v3483
    %3606 = vmatmul.bf16.gmra.mxu0 %v3330
    %v3607 = vpop.f32.mrf.mxu0
    %v3608 = vadd.f32 0.0, %v3607
    %v3609 = vpop.f32.mrf.mxu0
    %3610 = vdwg.mxu0
    %3611 = vmatpush.bf16.msra.mxu0 0
    %3612 = vmatpush.bf16.msra.mxu0 0
    %3613 = vmatpush.bf16.msra.mxu0 0
    %3614 = vmatpush.bf16.msra.mxu0 %v3587
    %3615 = vmatpush.bf16.msra.mxu0 %v3527
    %3616 = vmatpush.bf16.msra.mxu0 %v3523
    %3617 = vmatpush.bf16.msra.mxu0 %v3519
    %3618 = vmatpush.bf16.msra.mxu0 %v3515
    %3619 = vmatmul.bf16.gmra.mxu0 %v3584
    %v3620 = vpop.f32.mrf.mxu0
    %v3621 = vadd.f32 %v3608, %v3620
    %v3622 = vpop.f32.mrf.mxu0
    %3623 = vdwg.mxu0
    %3624 = vmatpush.bf16.msra.mxu0 %v3512
    %3625 = vmatpush.bf16.msra.mxu0 %v3508
    %3626 = vmatpush.bf16.msra.mxu0 %v3504
    %3627 = vmatpush.bf16.msra.mxu0 %v3500
    %3628 = vmatpush.bf16.msra.mxu0 %v3496
    %3629 = vmatpush.bf16.msra.mxu0 %v3492
    %3630 = vmatpush.bf16.msra.mxu0 %v3488
    %3631 = vmatpush.bf16.msra.mxu0 %v3484
    %3632 = vmatmul.bf16.gmra.mxu0 %v3330
    %v3633 = vpop.f32.mrf.mxu0
    %v3634 = vadd.f32 0.0, %v3633
    %v3635 = vpop.f32.mrf.mxu0
    %3636 = vdwg.mxu0
    %3637 = vmatpush.bf16.msra.mxu0 0
    %3638 = vmatpush.bf16.msra.mxu0 0
    %3639 = vmatpush.bf16.msra.mxu0 0
    %3640 = vmatpush.bf16.msra.mxu0 %v3590
    %3641 = vmatpush.bf16.msra.mxu0 %v3528
    %3642 = vmatpush.bf16.msra.mxu0 %v3524
    %3643 = vmatpush.bf16.msra.mxu0 %v3520
    %3644 = vmatpush.bf16.msra.mxu0 %v3516
    %3645 = vmatmul.bf16.gmra.mxu0 %v3584
    %v3646 = vpop.f32.mrf.mxu0
    %v3647 = vadd.f32 %v3634, %v3646
    %v3648 = vpop.f32.mrf.mxu0
    %3649 = vdwg.mxu0
    %3650 = vmatpush.bf16.msra.mxu0 %v3513
    %3651 = vmatpush.bf16.msra.mxu0 %v3509
    %3652 = vmatpush.bf16.msra.mxu0 %v3505
    %3653 = vmatpush.bf16.msra.mxu0 %v3501
    %3654 = vmatpush.bf16.msra.mxu0 %v3497
    %3655 = vmatpush.bf16.msra.mxu0 %v3493
    %3656 = vmatpush.bf16.msra.mxu0 %v3489
    %3657 = vmatpush.bf16.msra.mxu0 %v3485
    %3658 = vmatmul.bf16.gmra.mxu0 %v3330
    %v3659 = vpop.f32.mrf.mxu0
    %v3660 = vadd.f32 0.0, %v3659
    %v3661 = vpop.f32.mrf.mxu0
    %3662 = vdwg.mxu0
    %3663 = vmatpush.bf16.msra.mxu0 0
    %3664 = vmatpush.bf16.msra.mxu0 0
    %3665 = vmatpush.bf16.msra.mxu0 0
    %3666 = vmatpush.bf16.msra.mxu0 %v3593
    %3667 = vmatpush.bf16.msra.mxu0 %v3529
    %3668 = vmatpush.bf16.msra.mxu0 %v3525
    %3669 = vmatpush.bf16.msra.mxu0 %v3521
    %3670 = vmatpush.bf16.msra.mxu0 %v3517
    %3671 = vmatmul.bf16.gmra.mxu0 %v3584
    %v3672 = vpop.f32.mrf.mxu0
    %v3673 = vadd.f32 %v3660, %v3672
    %v3674 = vpop.f32.mrf.mxu0
    %3675 = vdwg.mxu0
    %3676 = vmatpush.bf16.msra.mxu0 %v3514
    %3677 = vmatpush.bf16.msra.mxu0 %v3510
    %3678 = vmatpush.bf16.msra.mxu0 %v3506
    %3679 = vmatpush.bf16.msra.mxu0 %v3502
    %3680 = vmatpush.bf16.msra.mxu0 %v3498
    %3681 = vmatpush.bf16.msra.mxu0 %v3494
    %3682 = vmatpush.bf16.msra.mxu0 %v3490
    %3683 = vmatpush.bf16.msra.mxu0 %v3486
    %3684 = vmatmul.bf16.gmra.mxu0 %v3330
    %v3685 = vpop.f32.mrf.mxu0
    %v3686 = vadd.f32 0.0, %v3685
    %v3687 = vpop.f32.mrf.mxu0
    %3688 = vdwg.mxu0
    %3689 = vmatpush.bf16.msra.mxu0 0
    %3690 = vmatpush.bf16.msra.mxu0 0
    %3691 = vmatpush.bf16.msra.mxu0 0
    %3692 = vmatpush.bf16.msra.mxu0 %v3596
    %3693 = vmatpush.bf16.msra.mxu0 %v3530
    %3694 = vmatpush.bf16.msra.mxu0 %v3526
    %3695 = vmatpush.bf16.msra.mxu0 %v3522
    %3696 = vmatpush.bf16.msra.mxu0 %v3518
    %3697 = vmatmul.bf16.gmra.mxu0 %v3584
    %v3698 = vpop.f32.mrf.mxu0
    %v3699 = vadd.f32 %v3686, %v3698
    %v3700 = vpop.f32.mrf.mxu0
    %3701 = vdwg.mxu0
    %v3702 = vadd.f32 %v3195, %v3621
    %v3703 = vadd.f32 %v3221, %v3647
    %v3704 = vadd.f32 %v3247, %v3673
    %v3705 = vadd.f32 %v3273, %v3699
    %s3706 = scalar_lea.vmem %s5, 1200
    %v3707 = vld [vmem:[%s3706] sm:$0xff]
    %v3708 = vld [vmem:[%s3706 + $0x8] sm:$0xff]
    %v3709 = vld [vmem:[%s3706 + $0x10] sm:$0xff]
    %v3710 = vld [vmem:[%s3706 + $0x18] sm:$0xff]
    %v3711 = vld [vmem:[%s3706 + $0x20] sm:$0xff]
    %v3712 = vld [vmem:[%s3706 + $0x28] sm:$0xff]
    %v3713 = vld [vmem:[%s3706 + $0x30] sm:$0xff]
    %v3714 = vld [vmem:[%s3706 + $0x38] sm:$0xff]
    %v3715 = vld [vmem:[%s3706 + $0x40] sm:$0xff]
    %v3716 = vld [vmem:[%s3706 + $0x48] sm:$0xff]
    %v3717 = vld [vmem:[%s3706 + $0x50] sm:$0xff]
    %v3718 = vld [vmem:[%s3706 + $0x58] sm:$0xff]
    %v3719 = vld [vmem:[%s3706 + $0x60] sm:$0xff]
    %v3720 = vld [vmem:[%s3706 + $0x68] sm:$0xff]
    %v3721 = vld [vmem:[%s3706 + $0x70] sm:$0xff]
    %v3722 = vld [vmem:[%s3706 + $0x78] sm:$0xff]
    %v3723 = vld [vmem:[%s3706 + $0x80] sm:$0xff]
    %v3724 = vld [vmem:[%s3706 + $0x88] sm:$0xff]
    %v3725 = vld [vmem:[%s3706 + $0x90] sm:$0xff]
    %v3726 = vld [vmem:[%s3706 + $0x98] sm:$0xff]
    %v3727 = vld [vmem:[%s3706 + $0xa0] sm:$0xff]
    %v3728 = vld [vmem:[%s3706 + $0xa8] sm:$0xff]
    %v3729 = vld [vmem:[%s3706 + $0xb0] sm:$0xff]
    %v3730 = vld [vmem:[%s3706 + $0xb8] sm:$0xff]
    %v3731 = vld [vmem:[%s3706 + $0xc0] sm:$0xff]
    %v3732 = vld [vmem:[%s3706 + $0xc8] sm:$0xff]
    %v3733 = vld [vmem:[%s3706 + $0xd0] sm:$0xff]
    %v3734 = vld [vmem:[%s3706 + $0xd8] sm:$0xff]
    %v3735 = vld [vmem:[%s3706 + $0xe0] sm:$0xff]
    %v3736 = vld [vmem:[%s3706 + $0xe8] sm:$0xff]
    %v3737 = vld [vmem:[%s3706 + $0xf0] sm:$0xff]
    %v3738 = vld [vmem:[%s3706 + $0xf8] sm:$0xff]
    %v3739 = vld [vmem:[%s3706 + $0x100] sm:$0xff]
    %v3740 = vld [vmem:[%s3706 + $0x108] sm:$0xff]
    %v3741 = vld [vmem:[%s3706 + $0x110] sm:$0xff]
    %v3742 = vld [vmem:[%s3706 + $0x118] sm:$0xff]
    %v3743 = vld [vmem:[%s3706 + $0x120] sm:$0xff]
    %v3744 = vld [vmem:[%s3706 + $0x128] sm:$0xff]
    %v3745 = vld [vmem:[%s3706 + $0x130] sm:$0xff]
    %v3746 = vld [vmem:[%s3706 + $0x138] sm:$0xff]
    %v3747 = vld [vmem:[%s3706 + $0x140] sm:$0xff]
    %v3748 = vld [vmem:[%s3706 + $0x148] sm:$0xff]
    %v3749 = vld [vmem:[%s3706 + $0x150] sm:$0xff]
    %v3750 = vld [vmem:[%s3706 + $0x158] sm:$0xff]
    %v3751 = vld [vmem:[%s3706 + $0x160] sm:$0xff]
    %v3752 = vld [vmem:[%s3706 + $0x168] sm:$0xff]
    %v3753 = vld [vmem:[%s3706 + $0x170] sm:$0xff]
    %v3754 = vld [vmem:[%s3706 + $0x178] sm:$0xff]
    %v3755 = vld [vmem:[%s3706 + $0x180] sm:$0xff]
    %v3756 = vld [vmem:[%s3706 + $0x188] sm:$0xff]
    %v3758 = vunpack.c.l.b16 %v2417
    %v3759 = vunpack.c.h.b16 %v2417
    %v3760 = vpack.c.b16 %v3758, %v3758
    %v3761 = vpack.c.b16 %v3759, %v3759
    %v3813 = vunpack.c.l.b16 %v3707
    %v3814 = vunpack.c.h.b16 %v3707
    %v3815 = vunpack.c.l.b16 %v3708
    %v3816 = vunpack.c.h.b16 %v3708
    %v3817 = vunpack.c.l.b16 %v3709
    %v3818 = vunpack.c.h.b16 %v3709
    %v3819 = vunpack.c.l.b16 %v3710
    %v3820 = vunpack.c.h.b16 %v3710
    %v3821 = vunpack.c.l.b16 %v3711
    %v3822 = vunpack.c.h.b16 %v3711
    %v3823 = vunpack.c.l.b16 %v3712
    %v3824 = vunpack.c.h.b16 %v3712
    %v3825 = vunpack.c.l.b16 %v3713
    %v3826 = vunpack.c.h.b16 %v3713
    %v3827 = vunpack.c.l.b16 %v3714
    %v3828 = vunpack.c.h.b16 %v3714
    %v3829 = vunpack.c.l.b16 %v3715
    %v3830 = vunpack.c.h.b16 %v3715
    %v3831 = vunpack.c.l.b16 %v3716
    %v3832 = vunpack.c.h.b16 %v3716
    %v3833 = vunpack.c.l.b16 %v3717
    %v3834 = vunpack.c.h.b16 %v3717
    %v3835 = vunpack.c.l.b16 %v3718
    %v3836 = vunpack.c.h.b16 %v3718
    %v3837 = vunpack.c.l.b16 %v3719
    %v3838 = vunpack.c.h.b16 %v3719
    %v3839 = vunpack.c.l.b16 %v3720
    %v3840 = vunpack.c.h.b16 %v3720
    %v3841 = vunpack.c.l.b16 %v3721
    %v3842 = vunpack.c.h.b16 %v3721
    %v3843 = vunpack.c.l.b16 %v3722
    %v3844 = vunpack.c.h.b16 %v3722
    %v3845 = vunpack.c.l.b16 %v3723
    %v3846 = vunpack.c.h.b16 %v3723
    %v3847 = vunpack.c.l.b16 %v3724
    %v3848 = vunpack.c.h.b16 %v3724
    %v3849 = vunpack.c.l.b16 %v3725
    %v3850 = vunpack.c.h.b16 %v3725
    %v3851 = vunpack.c.l.b16 %v3726
    %v3852 = vunpack.c.h.b16 %v3726
    %v3853 = vunpack.c.l.b16 %v3727
    %v3854 = vunpack.c.h.b16 %v3727
    %v3855 = vunpack.c.l.b16 %v3728
    %v3856 = vunpack.c.h.b16 %v3728
    %v3857 = vunpack.c.l.b16 %v3729
    %v3858 = vunpack.c.h.b16 %v3729
    %v3859 = vunpack.c.l.b16 %v3730
    %v3860 = vunpack.c.h.b16 %v3730
    %v3861 = vunpack.c.l.b16 %v3731
    %v3862 = vunpack.c.h.b16 %v3731
    %v3863 = vunpack.c.l.b16 %v3732
    %v3864 = vunpack.c.h.b16 %v3732
    %v3865 = vunpack.c.l.b16 %v3733
    %v3866 = vunpack.c.h.b16 %v3733
    %v3867 = vunpack.c.l.b16 %v3734
    %v3868 = vunpack.c.h.b16 %v3734
    %v3869 = vunpack.c.l.b16 %v3735
    %v3870 = vunpack.c.h.b16 %v3735
    %v3871 = vunpack.c.l.b16 %v3736
    %v3872 = vunpack.c.h.b16 %v3736
    %v3873 = vunpack.c.l.b16 %v3737
    %v3874 = vunpack.c.h.b16 %v3737
    %v3875 = vunpack.c.l.b16 %v3738
    %v3876 = vunpack.c.h.b16 %v3738
    %v3877 = vunpack.c.l.b16 %v3739
    %v3878 = vunpack.c.h.b16 %v3739
    %v3879 = vunpack.c.l.b16 %v3740
    %v3880 = vunpack.c.h.b16 %v3740
    %v3881 = vunpack.c.l.b16 %v3741
    %v3882 = vunpack.c.h.b16 %v3741
    %v3883 = vunpack.c.l.b16 %v3742
    %v3884 = vunpack.c.h.b16 %v3742
    %v3885 = vunpack.c.l.b16 %v3743
    %v3886 = vunpack.c.h.b16 %v3743
    %v3887 = vunpack.c.l.b16 %v3744
    %v3888 = vunpack.c.h.b16 %v3744
    %v3889 = vunpack.c.l.b16 %v3745
    %v3890 = vunpack.c.h.b16 %v3745
    %v3891 = vunpack.c.l.b16 %v3746
    %v3892 = vunpack.c.h.b16 %v3746
    %v3893 = vunpack.c.l.b16 %v3747
    %v3894 = vunpack.c.h.b16 %v3747
    %v3895 = vunpack.c.l.b16 %v3748
    %v3896 = vunpack.c.h.b16 %v3748
    %v3897 = vunpack.c.l.b16 %v3749
    %v3898 = vunpack.c.h.b16 %v3749
    %v3899 = vunpack.c.l.b16 %v3750
    %v3900 = vunpack.c.h.b16 %v3750
    %v3901 = vunpack.c.l.b16 %v3751
    %v3902 = vunpack.c.h.b16 %v3751
    %v3903 = vunpack.c.l.b16 %v3752
    %v3904 = vunpack.c.h.b16 %v3752
    %v3905 = vunpack.c.l.b16 %v3753
    %v3906 = vunpack.c.h.b16 %v3753
    %v3907 = vunpack.c.l.b16 %v3754
    %v3908 = vunpack.c.h.b16 %v3754
    %v3909 = vunpack.c.l.b16 %v3755
    %v3910 = vunpack.c.h.b16 %v3755
    %v3911 = vunpack.c.l.b16 %v3756
    %v3912 = vunpack.c.h.b16 %v3756
    %v3913 = vpack.c.b16 %v3817, %v3813
    %v3914 = vpack.c.b16 %v3818, %v3814
    %v3915 = vpack.c.b16 %v3819, %v3815
    %v3916 = vpack.c.b16 %v3820, %v3816
    %v3917 = vpack.c.b16 %v3825, %v3821
    %v3918 = vpack.c.b16 %v3826, %v3822
    %v3919 = vpack.c.b16 %v3827, %v3823
    %v3920 = vpack.c.b16 %v3828, %v3824
    %v3921 = vpack.c.b16 %v3833, %v3829
    %v3922 = vpack.c.b16 %v3834, %v3830
    %v3923 = vpack.c.b16 %v3835, %v3831
    %v3924 = vpack.c.b16 %v3836, %v3832
    %v3925 = vpack.c.b16 %v3841, %v3837
    %v3926 = vpack.c.b16 %v3842, %v3838
    %v3927 = vpack.c.b16 %v3843, %v3839
    %v3928 = vpack.c.b16 %v3844, %v3840
    %v3929 = vpack.c.b16 %v3849, %v3845
    %v3930 = vpack.c.b16 %v3850, %v3846
    %v3931 = vpack.c.b16 %v3851, %v3847
    %v3932 = vpack.c.b16 %v3852, %v3848
    %v3933 = vpack.c.b16 %v3857, %v3853
    %v3934 = vpack.c.b16 %v3858, %v3854
    %v3935 = vpack.c.b16 %v3859, %v3855
    %v3936 = vpack.c.b16 %v3860, %v3856
    %v3937 = vpack.c.b16 %v3865, %v3861
    %v3938 = vpack.c.b16 %v3866, %v3862
    %v3939 = vpack.c.b16 %v3867, %v3863
    %v3940 = vpack.c.b16 %v3868, %v3864
    %v3941 = vpack.c.b16 %v3873, %v3869
    %v3942 = vpack.c.b16 %v3874, %v3870
    %v3943 = vpack.c.b16 %v3875, %v3871
    %v3944 = vpack.c.b16 %v3876, %v3872
    %v3945 = vpack.c.b16 %v3881, %v3877
    %v3946 = vpack.c.b16 %v3882, %v3878
    %v3947 = vpack.c.b16 %v3883, %v3879
    %v3948 = vpack.c.b16 %v3884, %v3880
    %v3949 = vpack.c.b16 %v3889, %v3885
    %v3950 = vpack.c.b16 %v3890, %v3886
    %v3951 = vpack.c.b16 %v3891, %v3887
    %v3952 = vpack.c.b16 %v3892, %v3888
    %v3953 = vpack.c.b16 %v3897, %v3893
    %v3954 = vpack.c.b16 %v3898, %v3894
    %v3955 = vpack.c.b16 %v3899, %v3895
    %v3956 = vpack.c.b16 %v3900, %v3896
    %v3957 = vpack.c.b16 %v3905, %v3901
    %v3958 = vpack.c.b16 %v3906, %v3902
    %v3959 = vpack.c.b16 %v3907, %v3903
    %v3960 = vpack.c.b16 %v3908, %v3904
    %v3961 = vpack.c.b16 %v3909, %v3909
    %v3962 = vpack.c.b16 %v3910, %v3910
    %v3963 = vpack.c.b16 %v3911, %v3911
    %v3964 = vpack.c.b16 %v3912, %v3912
    %v4014 = vsel %vm2781, %v3761, 0
    %v4017 = vsel %vm1931, %v3961, 0
    %v4020 = vsel %vm1931, %v3962, 0
    %v4023 = vsel %vm1931, %v3963, 0
    %v4026 = vsel %vm1931, %v3964, 0
    %4028 = vmatpush.bf16.msra.mxu0 %v3941
    %4029 = vmatpush.bf16.msra.mxu0 %v3937
    %4030 = vmatpush.bf16.msra.mxu0 %v3933
    %4031 = vmatpush.bf16.msra.mxu0 %v3929
    %4032 = vmatpush.bf16.msra.mxu0 %v3925
    %4033 = vmatpush.bf16.msra.mxu0 %v3921
    %4034 = vmatpush.bf16.msra.mxu0 %v3917
    %4035 = vmatpush.bf16.msra.mxu0 %v3913
    %4036 = vmatmul.bf16.gmra.mxu0 %v3760
    %v4037 = vpop.f32.mrf.mxu0
    %v4038 = vadd.f32 0.0, %v4037
    %v4039 = vpop.f32.mrf.mxu0
    %4040 = vdwg.mxu0
    %4041 = vmatpush.bf16.msra.mxu0 0
    %4042 = vmatpush.bf16.msra.mxu0 0
    %4043 = vmatpush.bf16.msra.mxu0 0
    %4044 = vmatpush.bf16.msra.mxu0 %v4017
    %4045 = vmatpush.bf16.msra.mxu0 %v3957
    %4046 = vmatpush.bf16.msra.mxu0 %v3953
    %4047 = vmatpush.bf16.msra.mxu0 %v3949
    %4048 = vmatpush.bf16.msra.mxu0 %v3945
    %4049 = vmatmul.bf16.gmra.mxu0 %v4014
    %v4050 = vpop.f32.mrf.mxu0
    %v4051 = vadd.f32 %v4038, %v4050
    %v4052 = vpop.f32.mrf.mxu0
    %4053 = vdwg.mxu0
    %4054 = vmatpush.bf16.msra.mxu0 %v3942
    %4055 = vmatpush.bf16.msra.mxu0 %v3938
    %4056 = vmatpush.bf16.msra.mxu0 %v3934
    %4057 = vmatpush.bf16.msra.mxu0 %v3930
    %4058 = vmatpush.bf16.msra.mxu0 %v3926
    %4059 = vmatpush.bf16.msra.mxu0 %v3922
    %4060 = vmatpush.bf16.msra.mxu0 %v3918
    %4061 = vmatpush.bf16.msra.mxu0 %v3914
    %4062 = vmatmul.bf16.gmra.mxu0 %v3760
    %v4063 = vpop.f32.mrf.mxu0
    %v4064 = vadd.f32 0.0, %v4063
    %v4065 = vpop.f32.mrf.mxu0
    %4066 = vdwg.mxu0
    %4067 = vmatpush.bf16.msra.mxu0 0
    %4068 = vmatpush.bf16.msra.mxu0 0
    %4069 = vmatpush.bf16.msra.mxu0 0
    %4070 = vmatpush.bf16.msra.mxu0 %v4020
    %4071 = vmatpush.bf16.msra.mxu0 %v3958
    %4072 = vmatpush.bf16.msra.mxu0 %v3954
    %4073 = vmatpush.bf16.msra.mxu0 %v3950
    %4074 = vmatpush.bf16.msra.mxu0 %v3946
    %4075 = vmatmul.bf16.gmra.mxu0 %v4014
    %v4076 = vpop.f32.mrf.mxu0
    %v4077 = vadd.f32 %v4064, %v4076
    %v4078 = vpop.f32.mrf.mxu0
    %4079 = vdwg.mxu0
    %4080 = vmatpush.bf16.msra.mxu0 %v3943
    %4081 = vmatpush.bf16.msra.mxu0 %v3939
    %4082 = vmatpush.bf16.msra.mxu0 %v3935
    %4083 = vmatpush.bf16.msra.mxu0 %v3931
    %4084 = vmatpush.bf16.msra.mxu0 %v3927
    %4085 = vmatpush.bf16.msra.mxu0 %v3923
    %4086 = vmatpush.bf16.msra.mxu0 %v3919
    %4087 = vmatpush.bf16.msra.mxu0 %v3915
    %4088 = vmatmul.bf16.gmra.mxu0 %v3760
    %v4089 = vpop.f32.mrf.mxu0
    %v4090 = vadd.f32 0.0, %v4089
    %v4091 = vpop.f32.mrf.mxu0
    %4092 = vdwg.mxu0
    %4093 = vmatpush.bf16.msra.mxu0 0
    %4094 = vmatpush.bf16.msra.mxu0 0
    %4095 = vmatpush.bf16.msra.mxu0 0
    %4096 = vmatpush.bf16.msra.mxu0 %v4023
    %4097 = vmatpush.bf16.msra.mxu0 %v3959
    %4098 = vmatpush.bf16.msra.mxu0 %v3955
    %4099 = vmatpush.bf16.msra.mxu0 %v3951
    %4100 = vmatpush.bf16.msra.mxu0 %v3947
    %4101 = vmatmul.bf16.gmra.mxu0 %v4014
    %v4102 = vpop.f32.mrf.mxu0
    %v4103 = vadd.f32 %v4090, %v4102
    %v4104 = vpop.f32.mrf.mxu0
    %4105 = vdwg.mxu0
    %4106 = vmatpush.bf16.msra.mxu0 %v3944
    %4107 = vmatpush.bf16.msra.mxu0 %v3940
    %4108 = vmatpush.bf16.msra.mxu0 %v3936
    %4109 = vmatpush.bf16.msra.mxu0 %v3932
    %4110 = vmatpush.bf16.msra.mxu0 %v3928
    %4111 = vmatpush.bf16.msra.mxu0 %v3924
    %4112 = vmatpush.bf16.msra.mxu0 %v3920
    %4113 = vmatpush.bf16.msra.mxu0 %v3916
    %4114 = vmatmul.bf16.gmra.mxu0 %v3760
    %v4115 = vpop.f32.mrf.mxu0
    %v4116 = vadd.f32 0.0, %v4115
    %v4117 = vpop.f32.mrf.mxu0
    %4118 = vdwg.mxu0
    %4119 = vmatpush.bf16.msra.mxu0 0
    %4120 = vmatpush.bf16.msra.mxu0 0
    %4121 = vmatpush.bf16.msra.mxu0 0
    %4122 = vmatpush.bf16.msra.mxu0 %v4026
    %4123 = vmatpush.bf16.msra.mxu0 %v3960
    %4124 = vmatpush.bf16.msra.mxu0 %v3956
    %4125 = vmatpush.bf16.msra.mxu0 %v3952
    %4126 = vmatpush.bf16.msra.mxu0 %v3948
    %4127 = vmatmul.bf16.gmra.mxu0 %v4014
    %v4128 = vpop.f32.mrf.mxu0
    %v4129 = vadd.f32 %v4116, %v4128
    %v4130 = vpop.f32.mrf.mxu0
    %4131 = vdwg.mxu0
    %v4132 = vadd.f32 %v3702, %v4051
    %v4133 = vadd.f32 %v3703, %v4077
    %v4134 = vadd.f32 %v3704, %v4103
    %v4135 = vadd.f32 %v3705, %v4129
    %s4136 = scalar_lea.vmem %s5, 1600
    %v4137 = vld [vmem:[%s4136] sm:$0xff]
    %v4138 = vld [vmem:[%s4136 + $0x8] sm:$0xff]
    %v4139 = vld [vmem:[%s4136 + $0x10] sm:$0xff]
    %v4140 = vld [vmem:[%s4136 + $0x18] sm:$0xff]
    %v4141 = vld [vmem:[%s4136 + $0x20] sm:$0xff]
    %v4142 = vld [vmem:[%s4136 + $0x28] sm:$0xff]
    %v4143 = vld [vmem:[%s4136 + $0x30] sm:$0xff]
    %v4144 = vld [vmem:[%s4136 + $0x38] sm:$0xff]
    %v4145 = vld [vmem:[%s4136 + $0x40] sm:$0xff]
    %v4146 = vld [vmem:[%s4136 + $0x48] sm:$0xff]
    %v4147 = vld [vmem:[%s4136 + $0x50] sm:$0xff]
    %v4148 = vld [vmem:[%s4136 + $0x58] sm:$0xff]
    %v4149 = vld [vmem:[%s4136 + $0x60] sm:$0xff]
    %v4150 = vld [vmem:[%s4136 + $0x68] sm:$0xff]
    %v4151 = vld [vmem:[%s4136 + $0x70] sm:$0xff]
    %v4152 = vld [vmem:[%s4136 + $0x78] sm:$0xff]
    %v4153 = vld [vmem:[%s4136 + $0x80] sm:$0xff]
    %v4154 = vld [vmem:[%s4136 + $0x88] sm:$0xff]
    %v4155 = vld [vmem:[%s4136 + $0x90] sm:$0xff]
    %v4156 = vld [vmem:[%s4136 + $0x98] sm:$0xff]
    %v4157 = vld [vmem:[%s4136 + $0xa0] sm:$0xff]
    %v4158 = vld [vmem:[%s4136 + $0xa8] sm:$0xff]
    %v4159 = vld [vmem:[%s4136 + $0xb0] sm:$0xff]
    %v4160 = vld [vmem:[%s4136 + $0xb8] sm:$0xff]
    %v4161 = vld [vmem:[%s4136 + $0xc0] sm:$0xff]
    %v4162 = vld [vmem:[%s4136 + $0xc8] sm:$0xff]
    %v4163 = vld [vmem:[%s4136 + $0xd0] sm:$0xff]
    %v4164 = vld [vmem:[%s4136 + $0xd8] sm:$0xff]
    %v4165 = vld [vmem:[%s4136 + $0xe0] sm:$0xff]
    %v4166 = vld [vmem:[%s4136 + $0xe8] sm:$0xff]
    %v4167 = vld [vmem:[%s4136 + $0xf0] sm:$0xff]
    %v4168 = vld [vmem:[%s4136 + $0xf8] sm:$0xff]
    %v4169 = vld [vmem:[%s4136 + $0x100] sm:$0xff]
    %v4170 = vld [vmem:[%s4136 + $0x108] sm:$0xff]
    %v4171 = vld [vmem:[%s4136 + $0x110] sm:$0xff]
    %v4172 = vld [vmem:[%s4136 + $0x118] sm:$0xff]
    %v4173 = vld [vmem:[%s4136 + $0x120] sm:$0xff]
    %v4174 = vld [vmem:[%s4136 + $0x128] sm:$0xff]
    %v4175 = vld [vmem:[%s4136 + $0x130] sm:$0xff]
    %v4176 = vld [vmem:[%s4136 + $0x138] sm:$0xff]
    %v4177 = vld [vmem:[%s4136 + $0x140] sm:$0xff]
    %v4178 = vld [vmem:[%s4136 + $0x148] sm:$0xff]
    %v4179 = vld [vmem:[%s4136 + $0x150] sm:$0xff]
    %v4180 = vld [vmem:[%s4136 + $0x158] sm:$0xff]
    %v4181 = vld [vmem:[%s4136 + $0x160] sm:$0xff]
    %v4182 = vld [vmem:[%s4136 + $0x168] sm:$0xff]
    %v4183 = vld [vmem:[%s4136 + $0x170] sm:$0xff]
    %v4184 = vld [vmem:[%s4136 + $0x178] sm:$0xff]
    %v4185 = vld [vmem:[%s4136 + $0x180] sm:$0xff]
    %v4186 = vld [vmem:[%s4136 + $0x188] sm:$0xff]
    %v4188 = vunpack.c.l.b16 %v2418
    %v4189 = vunpack.c.h.b16 %v2418
    %v4190 = vpack.c.b16 %v4188, %v4188
    %v4191 = vpack.c.b16 %v4189, %v4189
    %v4243 = vunpack.c.l.b16 %v4137
    %v4244 = vunpack.c.h.b16 %v4137
    %v4245 = vunpack.c.l.b16 %v4138
    %v4246 = vunpack.c.h.b16 %v4138
    %v4247 = vunpack.c.l.b16 %v4139
    %v4248 = vunpack.c.h.b16 %v4139
    %v4249 = vunpack.c.l.b16 %v4140
    %v4250 = vunpack.c.h.b16 %v4140
    %v4251 = vunpack.c.l.b16 %v4141
    %v4252 = vunpack.c.h.b16 %v4141
    %v4253 = vunpack.c.l.b16 %v4142
    %v4254 = vunpack.c.h.b16 %v4142
    %v4255 = vunpack.c.l.b16 %v4143
    %v4256 = vunpack.c.h.b16 %v4143
    %v4257 = vunpack.c.l.b16 %v4144
    %v4258 = vunpack.c.h.b16 %v4144
    %v4259 = vunpack.c.l.b16 %v4145
    %v4260 = vunpack.c.h.b16 %v4145
    %v4261 = vunpack.c.l.b16 %v4146
    %v4262 = vunpack.c.h.b16 %v4146
    %v4263 = vunpack.c.l.b16 %v4147
    %v4264 = vunpack.c.h.b16 %v4147
    %v4265 = vunpack.c.l.b16 %v4148
    %v4266 = vunpack.c.h.b16 %v4148
    %v4267 = vunpack.c.l.b16 %v4149
    %v4268 = vunpack.c.h.b16 %v4149
    %v4269 = vunpack.c.l.b16 %v4150
    %v4270 = vunpack.c.h.b16 %v4150
    %v4271 = vunpack.c.l.b16 %v4151
    %v4272 = vunpack.c.h.b16 %v4151
    %v4273 = vunpack.c.l.b16 %v4152
    %v4274 = vunpack.c.h.b16 %v4152
    %v4275 = vunpack.c.l.b16 %v4153
    %v4276 = vunpack.c.h.b16 %v4153
    %v4277 = vunpack.c.l.b16 %v4154
    %v4278 = vunpack.c.h.b16 %v4154
    %v4279 = vunpack.c.l.b16 %v4155
    %v4280 = vunpack.c.h.b16 %v4155
    %v4281 = vunpack.c.l.b16 %v4156
    %v4282 = vunpack.c.h.b16 %v4156
    %v4283 = vunpack.c.l.b16 %v4157
    %v4284 = vunpack.c.h.b16 %v4157
    %v4285 = vunpack.c.l.b16 %v4158
    %v4286 = vunpack.c.h.b16 %v4158
    %v4287 = vunpack.c.l.b16 %v4159
    %v4288 = vunpack.c.h.b16 %v4159
    %v4289 = vunpack.c.l.b16 %v4160
    %v4290 = vunpack.c.h.b16 %v4160
    %v4291 = vunpack.c.l.b16 %v4161
    %v4292 = vunpack.c.h.b16 %v4161
    %v4293 = vunpack.c.l.b16 %v4162
    %v4294 = vunpack.c.h.b16 %v4162
    %v4295 = vunpack.c.l.b16 %v4163
    %v4296 = vunpack.c.h.b16 %v4163
    %v4297 = vunpack.c.l.b16 %v4164
    %v4298 = vunpack.c.h.b16 %v4164
    %v4299 = vunpack.c.l.b16 %v4165
    %v4300 = vunpack.c.h.b16 %v4165
    %v4301 = vunpack.c.l.b16 %v4166
    %v4302 = vunpack.c.h.b16 %v4166
    %v4303 = vunpack.c.l.b16 %v4167
    %v4304 = vunpack.c.h.b16 %v4167
    %v4305 = vunpack.c.l.b16 %v4168
    %v4306 = vunpack.c.h.b16 %v4168
    %v4307 = vunpack.c.l.b16 %v4169
    %v4308 = vunpack.c.h.b16 %v4169
    %v4309 = vunpack.c.l.b16 %v4170
    %v4310 = vunpack.c.h.b16 %v4170
    %v4311 = vunpack.c.l.b16 %v4171
    %v4312 = vunpack.c.h.b16 %v4171
    %v4313 = vunpack.c.l.b16 %v4172
    %v4314 = vunpack.c.h.b16 %v4172
    %v4315 = vunpack.c.l.b16 %v4173
    %v4316 = vunpack.c.h.b16 %v4173
    %v4317 = vunpack.c.l.b16 %v4174
    %v4318 = vunpack.c.h.b16 %v4174
    %v4319 = vunpack.c.l.b16 %v4175
    %v4320 = vunpack.c.h.b16 %v4175
    %v4321 = vunpack.c.l.b16 %v4176
    %v4322 = vunpack.c.h.b16 %v4176
    %v4323 = vunpack.c.l.b16 %v4177
    %v4324 = vunpack.c.h.b16 %v4177
    %v4325 = vunpack.c.l.b16 %v4178
    %v4326 = vunpack.c.h.b16 %v4178
    %v4327 = vunpack.c.l.b16 %v4179
    %v4328 = vunpack.c.h.b16 %v4179
    %v4329 = vunpack.c.l.b16 %v4180
    %v4330 = vunpack.c.h.b16 %v4180
    %v4331 = vunpack.c.l.b16 %v4181
    %v4332 = vunpack.c.h.b16 %v4181
    %v4333 = vunpack.c.l.b16 %v4182
    %v4334 = vunpack.c.h.b16 %v4182
    %v4335 = vunpack.c.l.b16 %v4183
    %v4336 = vunpack.c.h.b16 %v4183
    %v4337 = vunpack.c.l.b16 %v4184
    %v4338 = vunpack.c.h.b16 %v4184
    %v4339 = vunpack.c.l.b16 %v4185
    %v4340 = vunpack.c.h.b16 %v4185
    %v4341 = vunpack.c.l.b16 %v4186
    %v4342 = vunpack.c.h.b16 %v4186
    %v4343 = vpack.c.b16 %v4247, %v4243
    %v4344 = vpack.c.b16 %v4248, %v4244
    %v4345 = vpack.c.b16 %v4249, %v4245
    %v4346 = vpack.c.b16 %v4250, %v4246
    %v4347 = vpack.c.b16 %v4255, %v4251
    %v4348 = vpack.c.b16 %v4256, %v4252
    %v4349 = vpack.c.b16 %v4257, %v4253
    %v4350 = vpack.c.b16 %v4258, %v4254
    %v4351 = vpack.c.b16 %v4263, %v4259
    %v4352 = vpack.c.b16 %v4264, %v4260
    %v4353 = vpack.c.b16 %v4265, %v4261
    %v4354 = vpack.c.b16 %v4266, %v4262
    %v4355 = vpack.c.b16 %v4271, %v4267
    %v4356 = vpack.c.b16 %v4272, %v4268
    %v4357 = vpack.c.b16 %v4273, %v4269
    %v4358 = vpack.c.b16 %v4274, %v4270
    %v4359 = vpack.c.b16 %v4279, %v4275
    %v4360 = vpack.c.b16 %v4280, %v4276
    %v4361 = vpack.c.b16 %v4281, %v4277
    %v4362 = vpack.c.b16 %v4282, %v4278
    %v4363 = vpack.c.b16 %v4287, %v4283
    %v4364 = vpack.c.b16 %v4288, %v4284
    %v4365 = vpack.c.b16 %v4289, %v4285
    %v4366 = vpack.c.b16 %v4290, %v4286
    %v4367 = vpack.c.b16 %v4295, %v4291
    %v4368 = vpack.c.b16 %v4296, %v4292
    %v4369 = vpack.c.b16 %v4297, %v4293
    %v4370 = vpack.c.b16 %v4298, %v4294
    %v4371 = vpack.c.b16 %v4303, %v4299
    %v4372 = vpack.c.b16 %v4304, %v4300
    %v4373 = vpack.c.b16 %v4305, %v4301
    %v4374 = vpack.c.b16 %v4306, %v4302
    %v4375 = vpack.c.b16 %v4311, %v4307
    %v4376 = vpack.c.b16 %v4312, %v4308
    %v4377 = vpack.c.b16 %v4313, %v4309
    %v4378 = vpack.c.b16 %v4314, %v4310
    %v4379 = vpack.c.b16 %v4319, %v4315
    %v4380 = vpack.c.b16 %v4320, %v4316
    %v4381 = vpack.c.b16 %v4321, %v4317
    %v4382 = vpack.c.b16 %v4322, %v4318
    %v4383 = vpack.c.b16 %v4327, %v4323
    %v4384 = vpack.c.b16 %v4328, %v4324
    %v4385 = vpack.c.b16 %v4329, %v4325
    %v4386 = vpack.c.b16 %v4330, %v4326
    %v4387 = vpack.c.b16 %v4335, %v4331
    %v4388 = vpack.c.b16 %v4336, %v4332
    %v4389 = vpack.c.b16 %v4337, %v4333
    %v4390 = vpack.c.b16 %v4338, %v4334
    %v4391 = vpack.c.b16 %v4339, %v4339
    %v4392 = vpack.c.b16 %v4340, %v4340
    %v4393 = vpack.c.b16 %v4341, %v4341
    %v4394 = vpack.c.b16 %v4342, %v4342
    %v4444 = vsel %vm2781, %v4191, 0
    %v4447 = vsel %vm1931, %v4391, 0
    %v4450 = vsel %vm1931, %v4392, 0
    %v4453 = vsel %vm1931, %v4393, 0
    %v4456 = vsel %vm1931, %v4394, 0
    %4458 = vmatpush.bf16.msra.mxu0 %v4371
    %4459 = vmatpush.bf16.msra.mxu0 %v4367
    %4460 = vmatpush.bf16.msra.mxu0 %v4363
    %4461 = vmatpush.bf16.msra.mxu0 %v4359
    %4462 = vmatpush.bf16.msra.mxu0 %v4355
    %4463 = vmatpush.bf16.msra.mxu0 %v4351
    %4464 = vmatpush.bf16.msra.mxu0 %v4347
    %4465 = vmatpush.bf16.msra.mxu0 %v4343
    %4466 = vmatmul.bf16.gmra.mxu0 %v4190
    %v4467 = vpop.f32.mrf.mxu0
    %v4468 = vadd.f32 0.0, %v4467
    %v4469 = vpop.f32.mrf.mxu0
    %4470 = vdwg.mxu0
    %4471 = vmatpush.bf16.msra.mxu0 0
    %4472 = vmatpush.bf16.msra.mxu0 0
    %4473 = vmatpush.bf16.msra.mxu0 0
    %4474 = vmatpush.bf16.msra.mxu0 %v4447
    %4475 = vmatpush.bf16.msra.mxu0 %v4387
    %4476 = vmatpush.bf16.msra.mxu0 %v4383
    %4477 = vmatpush.bf16.msra.mxu0 %v4379
    %4478 = vmatpush.bf16.msra.mxu0 %v4375
    %4479 = vmatmul.bf16.gmra.mxu0 %v4444
    %v4480 = vpop.f32.mrf.mxu0
    %v4481 = vadd.f32 %v4468, %v4480
    %v4482 = vpop.f32.mrf.mxu0
    %4483 = vdwg.mxu0
    %4484 = vmatpush.bf16.msra.mxu0 %v4372
    %4485 = vmatpush.bf16.msra.mxu0 %v4368
    %4486 = vmatpush.bf16.msra.mxu0 %v4364
    %4487 = vmatpush.bf16.msra.mxu0 %v4360
    %4488 = vmatpush.bf16.msra.mxu0 %v4356
    %4489 = vmatpush.bf16.msra.mxu0 %v4352
    %4490 = vmatpush.bf16.msra.mxu0 %v4348
    %4491 = vmatpush.bf16.msra.mxu0 %v4344
    %4492 = vmatmul.bf16.gmra.mxu0 %v4190
    %v4493 = vpop.f32.mrf.mxu0
    %v4494 = vadd.f32 0.0, %v4493
    %v4495 = vpop.f32.mrf.mxu0
    %4496 = vdwg.mxu0
    %4497 = vmatpush.bf16.msra.mxu0 0
    %4498 = vmatpush.bf16.msra.mxu0 0
    %4499 = vmatpush.bf16.msra.mxu0 0
    %4500 = vmatpush.bf16.msra.mxu0 %v4450
    %4501 = vmatpush.bf16.msra.mxu0 %v4388
    %4502 = vmatpush.bf16.msra.mxu0 %v4384
    %4503 = vmatpush.bf16.msra.mxu0 %v4380
    %4504 = vmatpush.bf16.msra.mxu0 %v4376
    %4505 = vmatmul.bf16.gmra.mxu0 %v4444
    %v4506 = vpop.f32.mrf.mxu0
    %v4507 = vadd.f32 %v4494, %v4506
    %v4508 = vpop.f32.mrf.mxu0
    %4509 = vdwg.mxu0
    %4510 = vmatpush.bf16.msra.mxu0 %v4373
    %4511 = vmatpush.bf16.msra.mxu0 %v4369
    %4512 = vmatpush.bf16.msra.mxu0 %v4365
    %4513 = vmatpush.bf16.msra.mxu0 %v4361
    %4514 = vmatpush.bf16.msra.mxu0 %v4357
    %4515 = vmatpush.bf16.msra.mxu0 %v4353
    %4516 = vmatpush.bf16.msra.mxu0 %v4349
    %4517 = vmatpush.bf16.msra.mxu0 %v4345
    %4518 = vmatmul.bf16.gmra.mxu0 %v4190
    %v4519 = vpop.f32.mrf.mxu0
    %v4520 = vadd.f32 0.0, %v4519
    %v4521 = vpop.f32.mrf.mxu0
    %4522 = vdwg.mxu0
    %4523 = vmatpush.bf16.msra.mxu0 0
    %4524 = vmatpush.bf16.msra.mxu0 0
    %4525 = vmatpush.bf16.msra.mxu0 0
    %4526 = vmatpush.bf16.msra.mxu0 %v4453
    %4527 = vmatpush.bf16.msra.mxu0 %v4389
    %4528 = vmatpush.bf16.msra.mxu0 %v4385
    %4529 = vmatpush.bf16.msra.mxu0 %v4381
    %4530 = vmatpush.bf16.msra.mxu0 %v4377
    %4531 = vmatmul.bf16.gmra.mxu0 %v4444
    %v4532 = vpop.f32.mrf.mxu0
    %v4533 = vadd.f32 %v4520, %v4532
    %v4534 = vpop.f32.mrf.mxu0
    %4535 = vdwg.mxu0
    %4536 = vmatpush.bf16.msra.mxu0 %v4374
    %4537 = vmatpush.bf16.msra.mxu0 %v4370
    %4538 = vmatpush.bf16.msra.mxu0 %v4366
    %4539 = vmatpush.bf16.msra.mxu0 %v4362
    %4540 = vmatpush.bf16.msra.mxu0 %v4358
    %4541 = vmatpush.bf16.msra.mxu0 %v4354
    %4542 = vmatpush.bf16.msra.mxu0 %v4350
    %4543 = vmatpush.bf16.msra.mxu0 %v4346
    %4544 = vmatmul.bf16.gmra.mxu0 %v4190
    %v4545 = vpop.f32.mrf.mxu0
    %v4546 = vadd.f32 0.0, %v4545
    %v4547 = vpop.f32.mrf.mxu0
    %4548 = vdwg.mxu0
    %4549 = vmatpush.bf16.msra.mxu0 0
    %4550 = vmatpush.bf16.msra.mxu0 0
    %4551 = vmatpush.bf16.msra.mxu0 0
    %4552 = vmatpush.bf16.msra.mxu0 %v4456
    %4553 = vmatpush.bf16.msra.mxu0 %v4390
    %4554 = vmatpush.bf16.msra.mxu0 %v4386
    %4555 = vmatpush.bf16.msra.mxu0 %v4382
    %4556 = vmatpush.bf16.msra.mxu0 %v4378
    %4557 = vmatmul.bf16.gmra.mxu0 %v4444
    %v4558 = vpop.f32.mrf.mxu0
    %v4559 = vadd.f32 %v4546, %v4558
    %v4560 = vpop.f32.mrf.mxu0
    %4561 = vdwg.mxu0
    %v4562 = vadd.f32 %v4132, %v4481
    %v4563 = vadd.f32 %v4133, %v4507
    %v4564 = vadd.f32 %v4134, %v4533
    %v4565 = vadd.f32 %v4135, %v4559
    %s4566 = scalar_lea.vmem %s5, 2000
    %v4567 = vld [vmem:[%s4566] sm:$0xff]
    %v4568 = vld [vmem:[%s4566 + $0x8] sm:$0xff]
    %v4569 = vld [vmem:[%s4566 + $0x10] sm:$0xff]
    %v4570 = vld [vmem:[%s4566 + $0x18] sm:$0xff]
    %v4571 = vld [vmem:[%s4566 + $0x20] sm:$0xff]
    %v4572 = vld [vmem:[%s4566 + $0x28] sm:$0xff]
    %v4573 = vld [vmem:[%s4566 + $0x30] sm:$0xff]
    %v4574 = vld [vmem:[%s4566 + $0x38] sm:$0xff]
    %v4575 = vld [vmem:[%s4566 + $0x40] sm:$0xff]
    %v4576 = vld [vmem:[%s4566 + $0x48] sm:$0xff]
    %v4577 = vld [vmem:[%s4566 + $0x50] sm:$0xff]
    %v4578 = vld [vmem:[%s4566 + $0x58] sm:$0xff]
    %v4579 = vld [vmem:[%s4566 + $0x60] sm:$0xff]
    %v4580 = vld [vmem:[%s4566 + $0x68] sm:$0xff]
    %v4581 = vld [vmem:[%s4566 + $0x70] sm:$0xff]
    %v4582 = vld [vmem:[%s4566 + $0x78] sm:$0xff]
    %v4583 = vld [vmem:[%s4566 + $0x80] sm:$0xff]
    %v4584 = vld [vmem:[%s4566 + $0x88] sm:$0xff]
    %v4585 = vld [vmem:[%s4566 + $0x90] sm:$0xff]
    %v4586 = vld [vmem:[%s4566 + $0x98] sm:$0xff]
    %v4587 = vld [vmem:[%s4566 + $0xa0] sm:$0xff]
    %v4588 = vld [vmem:[%s4566 + $0xa8] sm:$0xff]
    %v4589 = vld [vmem:[%s4566 + $0xb0] sm:$0xff]
    %v4590 = vld [vmem:[%s4566 + $0xb8] sm:$0xff]
    %v4591 = vld [vmem:[%s4566 + $0xc0] sm:$0xff]
    %v4592 = vld [vmem:[%s4566 + $0xc8] sm:$0xff]
    %v4593 = vld [vmem:[%s4566 + $0xd0] sm:$0xff]
    %v4594 = vld [vmem:[%s4566 + $0xd8] sm:$0xff]
    %v4595 = vld [vmem:[%s4566 + $0xe0] sm:$0xff]
    %v4596 = vld [vmem:[%s4566 + $0xe8] sm:$0xff]
    %v4597 = vld [vmem:[%s4566 + $0xf0] sm:$0xff]
    %v4598 = vld [vmem:[%s4566 + $0xf8] sm:$0xff]
    %v4599 = vld [vmem:[%s4566 + $0x100] sm:$0xff]
    %v4600 = vld [vmem:[%s4566 + $0x108] sm:$0xff]
    %v4601 = vld [vmem:[%s4566 + $0x110] sm:$0xff]
    %v4602 = vld [vmem:[%s4566 + $0x118] sm:$0xff]
    %v4603 = vld [vmem:[%s4566 + $0x120] sm:$0xff]
    %v4604 = vld [vmem:[%s4566 + $0x128] sm:$0xff]
    %v4605 = vld [vmem:[%s4566 + $0x130] sm:$0xff]
    %v4606 = vld [vmem:[%s4566 + $0x138] sm:$0xff]
    %v4607 = vld [vmem:[%s4566 + $0x140] sm:$0xff]
    %v4608 = vld [vmem:[%s4566 + $0x148] sm:$0xff]
    %v4609 = vld [vmem:[%s4566 + $0x150] sm:$0xff]
    %v4610 = vld [vmem:[%s4566 + $0x158] sm:$0xff]
    %v4611 = vld [vmem:[%s4566 + $0x160] sm:$0xff]
    %v4612 = vld [vmem:[%s4566 + $0x168] sm:$0xff]
    %v4613 = vld [vmem:[%s4566 + $0x170] sm:$0xff]
    %v4614 = vld [vmem:[%s4566 + $0x178] sm:$0xff]
    %v4615 = vld [vmem:[%s4566 + $0x180] sm:$0xff]
    %v4616 = vld [vmem:[%s4566 + $0x188] sm:$0xff]
    %v4618 = vunpack.c.l.b16 %v2419
    %v4619 = vunpack.c.h.b16 %v2419
    %v4620 = vpack.c.b16 %v4618, %v4618
    %v4621 = vpack.c.b16 %v4619, %v4619
    %v4673 = vunpack.c.l.b16 %v4567
    %v4674 = vunpack.c.h.b16 %v4567
    %v4675 = vunpack.c.l.b16 %v4568
    %v4676 = vunpack.c.h.b16 %v4568
    %v4677 = vunpack.c.l.b16 %v4569
    %v4678 = vunpack.c.h.b16 %v4569
    %v4679 = vunpack.c.l.b16 %v4570
    %v4680 = vunpack.c.h.b16 %v4570
    %v4681 = vunpack.c.l.b16 %v4571
    %v4682 = vunpack.c.h.b16 %v4571
    %v4683 = vunpack.c.l.b16 %v4572
    %v4684 = vunpack.c.h.b16 %v4572
    %v4685 = vunpack.c.l.b16 %v4573
    %v4686 = vunpack.c.h.b16 %v4573
    %v4687 = vunpack.c.l.b16 %v4574
    %v4688 = vunpack.c.h.b16 %v4574
    %v4689 = vunpack.c.l.b16 %v4575
    %v4690 = vunpack.c.h.b16 %v4575
    %v4691 = vunpack.c.l.b16 %v4576
    %v4692 = vunpack.c.h.b16 %v4576
    %v4693 = vunpack.c.l.b16 %v4577
    %v4694 = vunpack.c.h.b16 %v4577
    %v4695 = vunpack.c.l.b16 %v4578
    %v4696 = vunpack.c.h.b16 %v4578
    %v4697 = vunpack.c.l.b16 %v4579
    %v4698 = vunpack.c.h.b16 %v4579
    %v4699 = vunpack.c.l.b16 %v4580
    %v4700 = vunpack.c.h.b16 %v4580
    %v4701 = vunpack.c.l.b16 %v4581
    %v4702 = vunpack.c.h.b16 %v4581
    %v4703 = vunpack.c.l.b16 %v4582
    %v4704 = vunpack.c.h.b16 %v4582
    %v4705 = vunpack.c.l.b16 %v4583
    %v4706 = vunpack.c.h.b16 %v4583
    %v4707 = vunpack.c.l.b16 %v4584
    %v4708 = vunpack.c.h.b16 %v4584
    %v4709 = vunpack.c.l.b16 %v4585
    %v4710 = vunpack.c.h.b16 %v4585
    %v4711 = vunpack.c.l.b16 %v4586
    %v4712 = vunpack.c.h.b16 %v4586
    %v4713 = vunpack.c.l.b16 %v4587
    %v4714 = vunpack.c.h.b16 %v4587
    %v4715 = vunpack.c.l.b16 %v4588
    %v4716 = vunpack.c.h.b16 %v4588
    %v4717 = vunpack.c.l.b16 %v4589
    %v4718 = vunpack.c.h.b16 %v4589
    %v4719 = vunpack.c.l.b16 %v4590
    %v4720 = vunpack.c.h.b16 %v4590
    %v4721 = vunpack.c.l.b16 %v4591
    %v4722 = vunpack.c.h.b16 %v4591
    %v4723 = vunpack.c.l.b16 %v4592
    %v4724 = vunpack.c.h.b16 %v4592
    %v4725 = vunpack.c.l.b16 %v4593
    %v4726 = vunpack.c.h.b16 %v4593
    %v4727 = vunpack.c.l.b16 %v4594
    %v4728 = vunpack.c.h.b16 %v4594
    %v4729 = vunpack.c.l.b16 %v4595
    %v4730 = vunpack.c.h.b16 %v4595
    %v4731 = vunpack.c.l.b16 %v4596
    %v4732 = vunpack.c.h.b16 %v4596
    %v4733 = vunpack.c.l.b16 %v4597
    %v4734 = vunpack.c.h.b16 %v4597
    %v4735 = vunpack.c.l.b16 %v4598
    %v4736 = vunpack.c.h.b16 %v4598
    %v4737 = vunpack.c.l.b16 %v4599
    %v4738 = vunpack.c.h.b16 %v4599
    %v4739 = vunpack.c.l.b16 %v4600
    %v4740 = vunpack.c.h.b16 %v4600
    %v4741 = vunpack.c.l.b16 %v4601
    %v4742 = vunpack.c.h.b16 %v4601
    %v4743 = vunpack.c.l.b16 %v4602
    %v4744 = vunpack.c.h.b16 %v4602
    %v4745 = vunpack.c.l.b16 %v4603
    %v4746 = vunpack.c.h.b16 %v4603
    %v4747 = vunpack.c.l.b16 %v4604
    %v4748 = vunpack.c.h.b16 %v4604
    %v4749 = vunpack.c.l.b16 %v4605
    %v4750 = vunpack.c.h.b16 %v4605
    %v4751 = vunpack.c.l.b16 %v4606
    %v4752 = vunpack.c.h.b16 %v4606
    %v4753 = vunpack.c.l.b16 %v4607
    %v4754 = vunpack.c.h.b16 %v4607
    %v4755 = vunpack.c.l.b16 %v4608
    %v4756 = vunpack.c.h.b16 %v4608
    %v4757 = vunpack.c.l.b16 %v4609
    %v4758 = vunpack.c.h.b16 %v4609
    %v4759 = vunpack.c.l.b16 %v4610
    %v4760 = vunpack.c.h.b16 %v4610
    %v4761 = vunpack.c.l.b16 %v4611
    %v4762 = vunpack.c.h.b16 %v4611
    %v4763 = vunpack.c.l.b16 %v4612
    %v4764 = vunpack.c.h.b16 %v4612
    %v4765 = vunpack.c.l.b16 %v4613
    %v4766 = vunpack.c.h.b16 %v4613
    %v4767 = vunpack.c.l.b16 %v4614
    %v4768 = vunpack.c.h.b16 %v4614
    %v4769 = vunpack.c.l.b16 %v4615
    %v4770 = vunpack.c.h.b16 %v4615
    %v4771 = vunpack.c.l.b16 %v4616
    %v4772 = vunpack.c.h.b16 %v4616
    %v4773 = vpack.c.b16 %v4677, %v4673
    %v4774 = vpack.c.b16 %v4678, %v4674
    %v4775 = vpack.c.b16 %v4679, %v4675
    %v4776 = vpack.c.b16 %v4680, %v4676
    %v4777 = vpack.c.b16 %v4685, %v4681
    %v4778 = vpack.c.b16 %v4686, %v4682
    %v4779 = vpack.c.b16 %v4687, %v4683
    %v4780 = vpack.c.b16 %v4688, %v4684
    %v4781 = vpack.c.b16 %v4693, %v4689
    %v4782 = vpack.c.b16 %v4694, %v4690
    %v4783 = vpack.c.b16 %v4695, %v4691
    %v4784 = vpack.c.b16 %v4696, %v4692
    %v4785 = vpack.c.b16 %v4701, %v4697
    %v4786 = vpack.c.b16 %v4702, %v4698
    %v4787 = vpack.c.b16 %v4703, %v4699
    %v4788 = vpack.c.b16 %v4704, %v4700
    %v4789 = vpack.c.b16 %v4709, %v4705
    %v4790 = vpack.c.b16 %v4710, %v4706
    %v4791 = vpack.c.b16 %v4711, %v4707
    %v4792 = vpack.c.b16 %v4712, %v4708
    %v4793 = vpack.c.b16 %v4717, %v4713
    %v4794 = vpack.c.b16 %v4718, %v4714
    %v4795 = vpack.c.b16 %v4719, %v4715
    %v4796 = vpack.c.b16 %v4720, %v4716
    %v4797 = vpack.c.b16 %v4725, %v4721
    %v4798 = vpack.c.b16 %v4726, %v4722
    %v4799 = vpack.c.b16 %v4727, %v4723
    %v4800 = vpack.c.b16 %v4728, %v4724
    %v4801 = vpack.c.b16 %v4733, %v4729
    %v4802 = vpack.c.b16 %v4734, %v4730
    %v4803 = vpack.c.b16 %v4735, %v4731
    %v4804 = vpack.c.b16 %v4736, %v4732
    %v4805 = vpack.c.b16 %v4741, %v4737
    %v4806 = vpack.c.b16 %v4742, %v4738
    %v4807 = vpack.c.b16 %v4743, %v4739
    %v4808 = vpack.c.b16 %v4744, %v4740
    %v4809 = vpack.c.b16 %v4749, %v4745
    %v4810 = vpack.c.b16 %v4750, %v4746
    %v4811 = vpack.c.b16 %v4751, %v4747
    %v4812 = vpack.c.b16 %v4752, %v4748
    %v4813 = vpack.c.b16 %v4757, %v4753
    %v4814 = vpack.c.b16 %v4758, %v4754
    %v4815 = vpack.c.b16 %v4759, %v4755
    %v4816 = vpack.c.b16 %v4760, %v4756
    %v4817 = vpack.c.b16 %v4765, %v4761
    %v4818 = vpack.c.b16 %v4766, %v4762
    %v4819 = vpack.c.b16 %v4767, %v4763
    %v4820 = vpack.c.b16 %v4768, %v4764
    %v4821 = vpack.c.b16 %v4769, %v4769
    %v4822 = vpack.c.b16 %v4770, %v4770
    %v4823 = vpack.c.b16 %v4771, %v4771
    %v4824 = vpack.c.b16 %v4772, %v4772
    %v4874 = vsel %vm2781, %v4621, 0
    %v4877 = vsel %vm1931, %v4821, 0
    %v4880 = vsel %vm1931, %v4822, 0
    %v4883 = vsel %vm1931, %v4823, 0
    %v4886 = vsel %vm1931, %v4824, 0
    %4888 = vmatpush.bf16.msra.mxu0 %v4801
    %4889 = vmatpush.bf16.msra.mxu0 %v4797
    %4890 = vmatpush.bf16.msra.mxu0 %v4793
    %4891 = vmatpush.bf16.msra.mxu0 %v4789
    %4892 = vmatpush.bf16.msra.mxu0 %v4785
    %4893 = vmatpush.bf16.msra.mxu0 %v4781
    %4894 = vmatpush.bf16.msra.mxu0 %v4777
    %4895 = vmatpush.bf16.msra.mxu0 %v4773
    %4896 = vmatmul.bf16.gmra.mxu0 %v4620
    %v4897 = vpop.f32.mrf.mxu0
    %v4898 = vadd.f32 0.0, %v4897
    %v4899 = vpop.f32.mrf.mxu0
    %4900 = vdwg.mxu0
    %4901 = vmatpush.bf16.msra.mxu0 0
    %4902 = vmatpush.bf16.msra.mxu0 0
    %4903 = vmatpush.bf16.msra.mxu0 0
    %4904 = vmatpush.bf16.msra.mxu0 %v4877
    %4905 = vmatpush.bf16.msra.mxu0 %v4817
    %4906 = vmatpush.bf16.msra.mxu0 %v4813
    %4907 = vmatpush.bf16.msra.mxu0 %v4809
    %4908 = vmatpush.bf16.msra.mxu0 %v4805
    %4909 = vmatmul.bf16.gmra.mxu0 %v4874
    %v4910 = vpop.f32.mrf.mxu0
    %v4911 = vadd.f32 %v4898, %v4910
    %v4912 = vpop.f32.mrf.mxu0
    %4913 = vdwg.mxu0
    %4914 = vmatpush.bf16.msra.mxu0 %v4802
    %4915 = vmatpush.bf16.msra.mxu0 %v4798
    %4916 = vmatpush.bf16.msra.mxu0 %v4794
    %4917 = vmatpush.bf16.msra.mxu0 %v4790
    %4918 = vmatpush.bf16.msra.mxu0 %v4786
    %4919 = vmatpush.bf16.msra.mxu0 %v4782
    %4920 = vmatpush.bf16.msra.mxu0 %v4778
    %4921 = vmatpush.bf16.msra.mxu0 %v4774
    %4922 = vmatmul.bf16.gmra.mxu0 %v4620
    %v4923 = vpop.f32.mrf.mxu0
    %v4924 = vadd.f32 0.0, %v4923
    %v4925 = vpop.f32.mrf.mxu0
    %4926 = vdwg.mxu0
    %4927 = vmatpush.bf16.msra.mxu0 0
    %4928 = vmatpush.bf16.msra.mxu0 0
    %4929 = vmatpush.bf16.msra.mxu0 0
    %4930 = vmatpush.bf16.msra.mxu0 %v4880
    %4931 = vmatpush.bf16.msra.mxu0 %v4818
    %4932 = vmatpush.bf16.msra.mxu0 %v4814
    %4933 = vmatpush.bf16.msra.mxu0 %v4810
    %4934 = vmatpush.bf16.msra.mxu0 %v4806
    %4935 = vmatmul.bf16.gmra.mxu0 %v4874
    %v4936 = vpop.f32.mrf.mxu0
    %v4937 = vadd.f32 %v4924, %v4936
    %v4938 = vpop.f32.mrf.mxu0
    %4939 = vdwg.mxu0
    %4940 = vmatpush.bf16.msra.mxu0 %v4803
    %4941 = vmatpush.bf16.msra.mxu0 %v4799
    %4942 = vmatpush.bf16.msra.mxu0 %v4795
    %4943 = vmatpush.bf16.msra.mxu0 %v4791
    %4944 = vmatpush.bf16.msra.mxu0 %v4787
    %4945 = vmatpush.bf16.msra.mxu0 %v4783
    %4946 = vmatpush.bf16.msra.mxu0 %v4779
    %4947 = vmatpush.bf16.msra.mxu0 %v4775
    %4948 = vmatmul.bf16.gmra.mxu0 %v4620
    %v4949 = vpop.f32.mrf.mxu0
    %v4950 = vadd.f32 0.0, %v4949
    %v4951 = vpop.f32.mrf.mxu0
    %4952 = vdwg.mxu0
    %4953 = vmatpush.bf16.msra.mxu0 0
    %4954 = vmatpush.bf16.msra.mxu0 0
    %4955 = vmatpush.bf16.msra.mxu0 0
    %4956 = vmatpush.bf16.msra.mxu0 %v4883
    %4957 = vmatpush.bf16.msra.mxu0 %v4819
    %4958 = vmatpush.bf16.msra.mxu0 %v4815
    %4959 = vmatpush.bf16.msra.mxu0 %v4811
    %4960 = vmatpush.bf16.msra.mxu0 %v4807
    %4961 = vmatmul.bf16.gmra.mxu0 %v4874
    %v4962 = vpop.f32.mrf.mxu0
    %v4963 = vadd.f32 %v4950, %v4962
    %v4964 = vpop.f32.mrf.mxu0
    %4965 = vdwg.mxu0
    %4966 = vmatpush.bf16.msra.mxu0 %v4804
    %4967 = vmatpush.bf16.msra.mxu0 %v4800
    %4968 = vmatpush.bf16.msra.mxu0 %v4796
    %4969 = vmatpush.bf16.msra.mxu0 %v4792
    %4970 = vmatpush.bf16.msra.mxu0 %v4788
    %4971 = vmatpush.bf16.msra.mxu0 %v4784
    %4972 = vmatpush.bf16.msra.mxu0 %v4780
    %4973 = vmatpush.bf16.msra.mxu0 %v4776
    %4974 = vmatmul.bf16.gmra.mxu0 %v4620
    %v4975 = vpop.f32.mrf.mxu0
    %v4976 = vadd.f32 0.0, %v4975
    %v4977 = vpop.f32.mrf.mxu0
    %4978 = vdwg.mxu0
    %4979 = vmatpush.bf16.msra.mxu0 0
    %4980 = vmatpush.bf16.msra.mxu0 0
    %4981 = vmatpush.bf16.msra.mxu0 0
    %4982 = vmatpush.bf16.msra.mxu0 %v4886
    %4983 = vmatpush.bf16.msra.mxu0 %v4820
    %4984 = vmatpush.bf16.msra.mxu0 %v4816
    %4985 = vmatpush.bf16.msra.mxu0 %v4812
    %4986 = vmatpush.bf16.msra.mxu0 %v4808
    %4987 = vmatmul.bf16.gmra.mxu0 %v4874
    %v4988 = vpop.f32.mrf.mxu0
    %v4989 = vadd.f32 %v4976, %v4988
    %v4990 = vpop.f32.mrf.mxu0
    %4991 = vdwg.mxu0
    %v4992 = vadd.f32 %v4562, %v4911
    %v4993 = vadd.f32 %v4563, %v4937
    %v4994 = vadd.f32 %v4564, %v4963
    %v4995 = vadd.f32 %v4565, %v4989
    %s4996 = scalar_lea.vmem %s5, 2400
    %v4997 = vld [vmem:[%s4996] sm:$0xff]
    %v4998 = vld [vmem:[%s4996 + $0x8] sm:$0xff]
    %v4999 = vld [vmem:[%s4996 + $0x10] sm:$0xff]
    %v5000 = vld [vmem:[%s4996 + $0x18] sm:$0xff]
    %v5001 = vld [vmem:[%s4996 + $0x20] sm:$0xff]
    %v5002 = vld [vmem:[%s4996 + $0x28] sm:$0xff]
    %v5003 = vld [vmem:[%s4996 + $0x30] sm:$0xff]
    %v5004 = vld [vmem:[%s4996 + $0x38] sm:$0xff]
    %v5005 = vld [vmem:[%s4996 + $0x40] sm:$0xff]
    %v5006 = vld [vmem:[%s4996 + $0x48] sm:$0xff]
    %v5007 = vld [vmem:[%s4996 + $0x50] sm:$0xff]
    %v5008 = vld [vmem:[%s4996 + $0x58] sm:$0xff]
    %v5009 = vld [vmem:[%s4996 + $0x60] sm:$0xff]
    %v5010 = vld [vmem:[%s4996 + $0x68] sm:$0xff]
    %v5011 = vld [vmem:[%s4996 + $0x70] sm:$0xff]
    %v5012 = vld [vmem:[%s4996 + $0x78] sm:$0xff]
    %v5013 = vld [vmem:[%s4996 + $0x80] sm:$0xff]
    %v5014 = vld [vmem:[%s4996 + $0x88] sm:$0xff]
    %v5015 = vld [vmem:[%s4996 + $0x90] sm:$0xff]
    %v5016 = vld [vmem:[%s4996 + $0x98] sm:$0xff]
    %v5017 = vld [vmem:[%s4996 + $0xa0] sm:$0xff]
    %v5018 = vld [vmem:[%s4996 + $0xa8] sm:$0xff]
    %v5019 = vld [vmem:[%s4996 + $0xb0] sm:$0xff]
    %v5020 = vld [vmem:[%s4996 + $0xb8] sm:$0xff]
    %v5021 = vld [vmem:[%s4996 + $0xc0] sm:$0xff]
    %v5022 = vld [vmem:[%s4996 + $0xc8] sm:$0xff]
    %v5023 = vld [vmem:[%s4996 + $0xd0] sm:$0xff]
    %v5024 = vld [vmem:[%s4996 + $0xd8] sm:$0xff]
    %v5025 = vld [vmem:[%s4996 + $0xe0] sm:$0xff]
    %v5026 = vld [vmem:[%s4996 + $0xe8] sm:$0xff]
    %v5027 = vld [vmem:[%s4996 + $0xf0] sm:$0xff]
    %v5028 = vld [vmem:[%s4996 + $0xf8] sm:$0xff]
    %v5029 = vld [vmem:[%s4996 + $0x100] sm:$0xff]
    %v5030 = vld [vmem:[%s4996 + $0x108] sm:$0xff]
    %v5031 = vld [vmem:[%s4996 + $0x110] sm:$0xff]
    %v5032 = vld [vmem:[%s4996 + $0x118] sm:$0xff]
    %v5033 = vld [vmem:[%s4996 + $0x120] sm:$0xff]
    %v5034 = vld [vmem:[%s4996 + $0x128] sm:$0xff]
    %v5035 = vld [vmem:[%s4996 + $0x130] sm:$0xff]
    %v5036 = vld [vmem:[%s4996 + $0x138] sm:$0xff]
    %v5037 = vld [vmem:[%s4996 + $0x140] sm:$0xff]
    %v5038 = vld [vmem:[%s4996 + $0x148] sm:$0xff]
    %v5039 = vld [vmem:[%s4996 + $0x150] sm:$0xff]
    %v5040 = vld [vmem:[%s4996 + $0x158] sm:$0xff]
    %v5041 = vld [vmem:[%s4996 + $0x160] sm:$0xff]
    %v5042 = vld [vmem:[%s4996 + $0x168] sm:$0xff]
    %v5043 = vld [vmem:[%s4996 + $0x170] sm:$0xff]
    %v5044 = vld [vmem:[%s4996 + $0x178] sm:$0xff]
    %v5045 = vld [vmem:[%s4996 + $0x180] sm:$0xff]
    %v5046 = vld [vmem:[%s4996 + $0x188] sm:$0xff]
    %v5048 = vunpack.c.l.b16 %v2420
    %v5049 = vunpack.c.h.b16 %v2420
    %v5050 = vpack.c.b16 %v5048, %v5048
    %v5051 = vpack.c.b16 %v5049, %v5049
    %v5103 = vunpack.c.l.b16 %v4997
    %v5104 = vunpack.c.h.b16 %v4997
    %v5105 = vunpack.c.l.b16 %v4998
    %v5106 = vunpack.c.h.b16 %v4998
    %v5107 = vunpack.c.l.b16 %v4999
    %v5108 = vunpack.c.h.b16 %v4999
    %v5109 = vunpack.c.l.b16 %v5000
    %v5110 = vunpack.c.h.b16 %v5000
    %v5111 = vunpack.c.l.b16 %v5001
    %v5112 = vunpack.c.h.b16 %v5001
    %v5113 = vunpack.c.l.b16 %v5002
    %v5114 = vunpack.c.h.b16 %v5002
    %v5115 = vunpack.c.l.b16 %v5003
    %v5116 = vunpack.c.h.b16 %v5003
    %v5117 = vunpack.c.l.b16 %v5004
    %v5118 = vunpack.c.h.b16 %v5004
    %v5119 = vunpack.c.l.b16 %v5005
    %v5120 = vunpack.c.h.b16 %v5005
    %v5121 = vunpack.c.l.b16 %v5006
    %v5122 = vunpack.c.h.b16 %v5006
    %v5123 = vunpack.c.l.b16 %v5007
    %v5124 = vunpack.c.h.b16 %v5007
    %v5125 = vunpack.c.l.b16 %v5008
    %v5126 = vunpack.c.h.b16 %v5008
    %v5127 = vunpack.c.l.b16 %v5009
    %v5128 = vunpack.c.h.b16 %v5009
    %v5129 = vunpack.c.l.b16 %v5010
    %v5130 = vunpack.c.h.b16 %v5010
    %v5131 = vunpack.c.l.b16 %v5011
    %v5132 = vunpack.c.h.b16 %v5011
    %v5133 = vunpack.c.l.b16 %v5012
    %v5134 = vunpack.c.h.b16 %v5012
    %v5135 = vunpack.c.l.b16 %v5013
    %v5136 = vunpack.c.h.b16 %v5013
    %v5137 = vunpack.c.l.b16 %v5014
    %v5138 = vunpack.c.h.b16 %v5014
    %v5139 = vunpack.c.l.b16 %v5015
    %v5140 = vunpack.c.h.b16 %v5015
    %v5141 = vunpack.c.l.b16 %v5016
    %v5142 = vunpack.c.h.b16 %v5016
    %v5143 = vunpack.c.l.b16 %v5017
    %v5144 = vunpack.c.h.b16 %v5017
    %v5145 = vunpack.c.l.b16 %v5018
    %v5146 = vunpack.c.h.b16 %v5018
    %v5147 = vunpack.c.l.b16 %v5019
    %v5148 = vunpack.c.h.b16 %v5019
    %v5149 = vunpack.c.l.b16 %v5020
    %v5150 = vunpack.c.h.b16 %v5020
    %v5151 = vunpack.c.l.b16 %v5021
    %v5152 = vunpack.c.h.b16 %v5021
    %v5153 = vunpack.c.l.b16 %v5022
    %v5154 = vunpack.c.h.b16 %v5022
    %v5155 = vunpack.c.l.b16 %v5023
    %v5156 = vunpack.c.h.b16 %v5023
    %v5157 = vunpack.c.l.b16 %v5024
    %v5158 = vunpack.c.h.b16 %v5024
    %v5159 = vunpack.c.l.b16 %v5025
    %v5160 = vunpack.c.h.b16 %v5025
    %v5161 = vunpack.c.l.b16 %v5026
    %v5162 = vunpack.c.h.b16 %v5026
    %v5163 = vunpack.c.l.b16 %v5027
    %v5164 = vunpack.c.h.b16 %v5027
    %v5165 = vunpack.c.l.b16 %v5028
    %v5166 = vunpack.c.h.b16 %v5028
    %v5167 = vunpack.c.l.b16 %v5029
    %v5168 = vunpack.c.h.b16 %v5029
    %v5169 = vunpack.c.l.b16 %v5030
    %v5170 = vunpack.c.h.b16 %v5030
    %v5171 = vunpack.c.l.b16 %v5031
    %v5172 = vunpack.c.h.b16 %v5031
    %v5173 = vunpack.c.l.b16 %v5032
    %v5174 = vunpack.c.h.b16 %v5032
    %v5175 = vunpack.c.l.b16 %v5033
    %v5176 = vunpack.c.h.b16 %v5033
    %v5177 = vunpack.c.l.b16 %v5034
    %v5178 = vunpack.c.h.b16 %v5034
    %v5179 = vunpack.c.l.b16 %v5035
    %v5180 = vunpack.c.h.b16 %v5035
    %v5181 = vunpack.c.l.b16 %v5036
    %v5182 = vunpack.c.h.b16 %v5036
    %v5183 = vunpack.c.l.b16 %v5037
    %v5184 = vunpack.c.h.b16 %v5037
    %v5185 = vunpack.c.l.b16 %v5038
    %v5186 = vunpack.c.h.b16 %v5038
    %v5187 = vunpack.c.l.b16 %v5039
    %v5188 = vunpack.c.h.b16 %v5039
    %v5189 = vunpack.c.l.b16 %v5040
    %v5190 = vunpack.c.h.b16 %v5040
    %v5191 = vunpack.c.l.b16 %v5041
    %v5192 = vunpack.c.h.b16 %v5041
    %v5193 = vunpack.c.l.b16 %v5042
    %v5194 = vunpack.c.h.b16 %v5042
    %v5195 = vunpack.c.l.b16 %v5043
    %v5196 = vunpack.c.h.b16 %v5043
    %v5197 = vunpack.c.l.b16 %v5044
    %v5198 = vunpack.c.h.b16 %v5044
    %v5199 = vunpack.c.l.b16 %v5045
    %v5200 = vunpack.c.h.b16 %v5045
    %v5201 = vunpack.c.l.b16 %v5046
    %v5202 = vunpack.c.h.b16 %v5046
    %v5203 = vpack.c.b16 %v5107, %v5103
    %v5204 = vpack.c.b16 %v5108, %v5104
    %v5205 = vpack.c.b16 %v5109, %v5105
    %v5206 = vpack.c.b16 %v5110, %v5106
    %v5207 = vpack.c.b16 %v5115, %v5111
    %v5208 = vpack.c.b16 %v5116, %v5112
    %v5209 = vpack.c.b16 %v5117, %v5113
    %v5210 = vpack.c.b16 %v5118, %v5114
    %v5211 = vpack.c.b16 %v5123, %v5119
    %v5212 = vpack.c.b16 %v5124, %v5120
    %v5213 = vpack.c.b16 %v5125, %v5121
    %v5214 = vpack.c.b16 %v5126, %v5122
    %v5215 = vpack.c.b16 %v5131, %v5127
    %v5216 = vpack.c.b16 %v5132, %v5128
    %v5217 = vpack.c.b16 %v5133, %v5129
    %v5218 = vpack.c.b16 %v5134, %v5130
    %v5219 = vpack.c.b16 %v5139, %v5135
    %v5220 = vpack.c.b16 %v5140, %v5136
    %v5221 = vpack.c.b16 %v5141, %v5137
    %v5222 = vpack.c.b16 %v5142, %v5138
    %v5223 = vpack.c.b16 %v5147, %v5143
    %v5224 = vpack.c.b16 %v5148, %v5144
    %v5225 = vpack.c.b16 %v5149, %v5145
    %v5226 = vpack.c.b16 %v5150, %v5146
    %v5227 = vpack.c.b16 %v5155, %v5151
    %v5228 = vpack.c.b16 %v5156, %v5152
    %v5229 = vpack.c.b16 %v5157, %v5153
    %v5230 = vpack.c.b16 %v5158, %v5154
    %v5231 = vpack.c.b16 %v5163, %v5159
    %v5232 = vpack.c.b16 %v5164, %v5160
    %v5233 = vpack.c.b16 %v5165, %v5161
    %v5234 = vpack.c.b16 %v5166, %v5162
    %v5235 = vpack.c.b16 %v5171, %v5167
    %v5236 = vpack.c.b16 %v5172, %v5168
    %v5237 = vpack.c.b16 %v5173, %v5169
    %v5238 = vpack.c.b16 %v5174, %v5170
    %v5239 = vpack.c.b16 %v5179, %v5175
    %v5240 = vpack.c.b16 %v5180, %v5176
    %v5241 = vpack.c.b16 %v5181, %v5177
    %v5242 = vpack.c.b16 %v5182, %v5178
    %v5243 = vpack.c.b16 %v5187, %v5183
    %v5244 = vpack.c.b16 %v5188, %v5184
    %v5245 = vpack.c.b16 %v5189, %v5185
    %v5246 = vpack.c.b16 %v5190, %v5186
    %v5247 = vpack.c.b16 %v5195, %v5191
    %v5248 = vpack.c.b16 %v5196, %v5192
    %v5249 = vpack.c.b16 %v5197, %v5193
    %v5250 = vpack.c.b16 %v5198, %v5194
    %v5251 = vpack.c.b16 %v5199, %v5199
    %v5252 = vpack.c.b16 %v5200, %v5200
    %v5253 = vpack.c.b16 %v5201, %v5201
    %v5254 = vpack.c.b16 %v5202, %v5202
    %v5304 = vsel %vm2781, %v5051, 0
    %v5307 = vsel %vm1931, %v5251, 0
    %v5310 = vsel %vm1931, %v5252, 0
    %v5313 = vsel %vm1931, %v5253, 0
    %v5316 = vsel %vm1931, %v5254, 0
    %5318 = vmatpush.bf16.msra.mxu0 %v5231
    %5319 = vmatpush.bf16.msra.mxu0 %v5227
    %5320 = vmatpush.bf16.msra.mxu0 %v5223
    %5321 = vmatpush.bf16.msra.mxu0 %v5219
    %5322 = vmatpush.bf16.msra.mxu0 %v5215
    %5323 = vmatpush.bf16.msra.mxu0 %v5211
    %5324 = vmatpush.bf16.msra.mxu0 %v5207
    %5325 = vmatpush.bf16.msra.mxu0 %v5203
    %5326 = vmatmul.bf16.gmra.mxu0 %v5050
    %v5327 = vpop.f32.mrf.mxu0
    %v5328 = vadd.f32 0.0, %v5327
    %v5329 = vpop.f32.mrf.mxu0
    %5330 = vdwg.mxu0
    %5331 = vmatpush.bf16.msra.mxu0 0
    %5332 = vmatpush.bf16.msra.mxu0 0
    %5333 = vmatpush.bf16.msra.mxu0 0
    %5334 = vmatpush.bf16.msra.mxu0 %v5307
    %5335 = vmatpush.bf16.msra.mxu0 %v5247
    %5336 = vmatpush.bf16.msra.mxu0 %v5243
    %5337 = vmatpush.bf16.msra.mxu0 %v5239
    %5338 = vmatpush.bf16.msra.mxu0 %v5235
    %5339 = vmatmul.bf16.gmra.mxu0 %v5304
    %v5340 = vpop.f32.mrf.mxu0
    %v5341 = vadd.f32 %v5328, %v5340
    %v5342 = vpop.f32.mrf.mxu0
    %5343 = vdwg.mxu0
    %5344 = vmatpush.bf16.msra.mxu0 %v5232
    %5345 = vmatpush.bf16.msra.mxu0 %v5228
    %5346 = vmatpush.bf16.msra.mxu0 %v5224
    %5347 = vmatpush.bf16.msra.mxu0 %v5220
    %5348 = vmatpush.bf16.msra.mxu0 %v5216
    %5349 = vmatpush.bf16.msra.mxu0 %v5212
    %5350 = vmatpush.bf16.msra.mxu0 %v5208
    %5351 = vmatpush.bf16.msra.mxu0 %v5204
    %5352 = vmatmul.bf16.gmra.mxu0 %v5050
    %v5353 = vpop.f32.mrf.mxu0
    %v5354 = vadd.f32 0.0, %v5353
    %v5355 = vpop.f32.mrf.mxu0
    %5356 = vdwg.mxu0
    %5357 = vmatpush.bf16.msra.mxu0 0
    %5358 = vmatpush.bf16.msra.mxu0 0
    %5359 = vmatpush.bf16.msra.mxu0 0
    %5360 = vmatpush.bf16.msra.mxu0 %v5310
    %5361 = vmatpush.bf16.msra.mxu0 %v5248
    %5362 = vmatpush.bf16.msra.mxu0 %v5244
    %5363 = vmatpush.bf16.msra.mxu0 %v5240
    %5364 = vmatpush.bf16.msra.mxu0 %v5236
    %5365 = vmatmul.bf16.gmra.mxu0 %v5304
    %v5366 = vpop.f32.mrf.mxu0
    %v5367 = vadd.f32 %v5354, %v5366
    %v5368 = vpop.f32.mrf.mxu0
    %5369 = vdwg.mxu0
    %5370 = vmatpush.bf16.msra.mxu0 %v5233
    %5371 = vmatpush.bf16.msra.mxu0 %v5229
    %5372 = vmatpush.bf16.msra.mxu0 %v5225
    %5373 = vmatpush.bf16.msra.mxu0 %v5221
    %5374 = vmatpush.bf16.msra.mxu0 %v5217
    %5375 = vmatpush.bf16.msra.mxu0 %v5213
    %5376 = vmatpush.bf16.msra.mxu0 %v5209
    %5377 = vmatpush.bf16.msra.mxu0 %v5205
    %5378 = vmatmul.bf16.gmra.mxu0 %v5050
    %v5379 = vpop.f32.mrf.mxu0
    %v5380 = vadd.f32 0.0, %v5379
    %v5381 = vpop.f32.mrf.mxu0
    %5382 = vdwg.mxu0
    %5383 = vmatpush.bf16.msra.mxu0 0
    %5384 = vmatpush.bf16.msra.mxu0 0
    %5385 = vmatpush.bf16.msra.mxu0 0
    %5386 = vmatpush.bf16.msra.mxu0 %v5313
    %5387 = vmatpush.bf16.msra.mxu0 %v5249
    %5388 = vmatpush.bf16.msra.mxu0 %v5245
    %5389 = vmatpush.bf16.msra.mxu0 %v5241
    %5390 = vmatpush.bf16.msra.mxu0 %v5237
    %5391 = vmatmul.bf16.gmra.mxu0 %v5304
    %v5392 = vpop.f32.mrf.mxu0
    %v5393 = vadd.f32 %v5380, %v5392
    %v5394 = vpop.f32.mrf.mxu0
    %5395 = vdwg.mxu0
    %5396 = vmatpush.bf16.msra.mxu0 %v5234
    %5397 = vmatpush.bf16.msra.mxu0 %v5230
    %5398 = vmatpush.bf16.msra.mxu0 %v5226
    %5399 = vmatpush.bf16.msra.mxu0 %v5222
    %5400 = vmatpush.bf16.msra.mxu0 %v5218
    %5401 = vmatpush.bf16.msra.mxu0 %v5214
    %5402 = vmatpush.bf16.msra.mxu0 %v5210
    %5403 = vmatpush.bf16.msra.mxu0 %v5206
    %5404 = vmatmul.bf16.gmra.mxu0 %v5050
    %v5405 = vpop.f32.mrf.mxu0
    %v5406 = vadd.f32 0.0, %v5405
    %v5407 = vpop.f32.mrf.mxu0
    %5408 = vdwg.mxu0
    %5409 = vmatpush.bf16.msra.mxu0 0
    %5410 = vmatpush.bf16.msra.mxu0 0
    %5411 = vmatpush.bf16.msra.mxu0 0
    %5412 = vmatpush.bf16.msra.mxu0 %v5316
    %5413 = vmatpush.bf16.msra.mxu0 %v5250
    %5414 = vmatpush.bf16.msra.mxu0 %v5246
    %5415 = vmatpush.bf16.msra.mxu0 %v5242
    %5416 = vmatpush.bf16.msra.mxu0 %v5238
    %5417 = vmatmul.bf16.gmra.mxu0 %v5304
    %v5418 = vpop.f32.mrf.mxu0
    %v5419 = vadd.f32 %v5406, %v5418
    %v5420 = vpop.f32.mrf.mxu0
    %5421 = vdwg.mxu0
    %v5422 = vadd.f32 %v4992, %v5341
    %v5423 = vadd.f32 %v4993, %v5367
    %v5424 = vadd.f32 %v4994, %v5393
    %v5425 = vadd.f32 %v4995, %v5419
    %s5426 = scalar_lea.vmem %s5, 2800
    %v5427 = vld [vmem:[%s5426] sm:$0xff]
    %v5428 = vld [vmem:[%s5426 + $0x8] sm:$0xff]
    %v5429 = vld [vmem:[%s5426 + $0x10] sm:$0xff]
    %v5430 = vld [vmem:[%s5426 + $0x18] sm:$0xff]
    %v5431 = vld [vmem:[%s5426 + $0x20] sm:$0xff]
    %v5432 = vld [vmem:[%s5426 + $0x28] sm:$0xff]
    %v5433 = vld [vmem:[%s5426 + $0x30] sm:$0xff]
    %v5434 = vld [vmem:[%s5426 + $0x38] sm:$0xff]
    %v5435 = vld [vmem:[%s5426 + $0x40] sm:$0xff]
    %v5436 = vld [vmem:[%s5426 + $0x48] sm:$0xff]
    %v5437 = vld [vmem:[%s5426 + $0x50] sm:$0xff]
    %v5438 = vld [vmem:[%s5426 + $0x58] sm:$0xff]
    %v5439 = vld [vmem:[%s5426 + $0x60] sm:$0xff]
    %v5440 = vld [vmem:[%s5426 + $0x68] sm:$0xff]
    %v5441 = vld [vmem:[%s5426 + $0x70] sm:$0xff]
    %v5442 = vld [vmem:[%s5426 + $0x78] sm:$0xff]
    %v5443 = vld [vmem:[%s5426 + $0x80] sm:$0xff]
    %v5444 = vld [vmem:[%s5426 + $0x88] sm:$0xff]
    %v5445 = vld [vmem:[%s5426 + $0x90] sm:$0xff]
    %v5446 = vld [vmem:[%s5426 + $0x98] sm:$0xff]
    %v5447 = vld [vmem:[%s5426 + $0xa0] sm:$0xff]
    %v5448 = vld [vmem:[%s5426 + $0xa8] sm:$0xff]
    %v5449 = vld [vmem:[%s5426 + $0xb0] sm:$0xff]
    %v5450 = vld [vmem:[%s5426 + $0xb8] sm:$0xff]
    %v5451 = vld [vmem:[%s5426 + $0xc0] sm:$0xff]
    %v5452 = vld [vmem:[%s5426 + $0xc8] sm:$0xff]
    %v5453 = vld [vmem:[%s5426 + $0xd0] sm:$0xff]
    %v5454 = vld [vmem:[%s5426 + $0xd8] sm:$0xff]
    %v5455 = vld [vmem:[%s5426 + $0xe0] sm:$0xff]
    %v5456 = vld [vmem:[%s5426 + $0xe8] sm:$0xff]
    %v5457 = vld [vmem:[%s5426 + $0xf0] sm:$0xff]
    %v5458 = vld [vmem:[%s5426 + $0xf8] sm:$0xff]
    %v5459 = vld [vmem:[%s5426 + $0x100] sm:$0xff]
    %v5460 = vld [vmem:[%s5426 + $0x108] sm:$0xff]
    %v5461 = vld [vmem:[%s5426 + $0x110] sm:$0xff]
    %v5462 = vld [vmem:[%s5426 + $0x118] sm:$0xff]
    %v5463 = vld [vmem:[%s5426 + $0x120] sm:$0xff]
    %v5464 = vld [vmem:[%s5426 + $0x128] sm:$0xff]
    %v5465 = vld [vmem:[%s5426 + $0x130] sm:$0xff]
    %v5466 = vld [vmem:[%s5426 + $0x138] sm:$0xff]
    %v5467 = vld [vmem:[%s5426 + $0x140] sm:$0xff]
    %v5468 = vld [vmem:[%s5426 + $0x148] sm:$0xff]
    %v5469 = vld [vmem:[%s5426 + $0x150] sm:$0xff]
    %v5470 = vld [vmem:[%s5426 + $0x158] sm:$0xff]
    %v5471 = vld [vmem:[%s5426 + $0x160] sm:$0xff]
    %v5472 = vld [vmem:[%s5426 + $0x168] sm:$0xff]
    %v5473 = vld [vmem:[%s5426 + $0x170] sm:$0xff]
    %v5474 = vld [vmem:[%s5426 + $0x178] sm:$0xff]
    %v5475 = vld [vmem:[%s5426 + $0x180] sm:$0xff]
    %v5476 = vld [vmem:[%s5426 + $0x188] sm:$0xff]
    %v5478 = vunpack.c.l.b16 %v2421
    %v5479 = vunpack.c.h.b16 %v2421
    %v5480 = vpack.c.b16 %v5478, %v5478
    %v5481 = vpack.c.b16 %v5479, %v5479
    %v5533 = vunpack.c.l.b16 %v5427
    %v5534 = vunpack.c.h.b16 %v5427
    %v5535 = vunpack.c.l.b16 %v5428
    %v5536 = vunpack.c.h.b16 %v5428
    %v5537 = vunpack.c.l.b16 %v5429
    %v5538 = vunpack.c.h.b16 %v5429
    %v5539 = vunpack.c.l.b16 %v5430
    %v5540 = vunpack.c.h.b16 %v5430
    %v5541 = vunpack.c.l.b16 %v5431
    %v5542 = vunpack.c.h.b16 %v5431
    %v5543 = vunpack.c.l.b16 %v5432
    %v5544 = vunpack.c.h.b16 %v5432
    %v5545 = vunpack.c.l.b16 %v5433
    %v5546 = vunpack.c.h.b16 %v5433
    %v5547 = vunpack.c.l.b16 %v5434
    %v5548 = vunpack.c.h.b16 %v5434
    %v5549 = vunpack.c.l.b16 %v5435
    %v5550 = vunpack.c.h.b16 %v5435
    %v5551 = vunpack.c.l.b16 %v5436
    %v5552 = vunpack.c.h.b16 %v5436
    %v5553 = vunpack.c.l.b16 %v5437
    %v5554 = vunpack.c.h.b16 %v5437
    %v5555 = vunpack.c.l.b16 %v5438
    %v5556 = vunpack.c.h.b16 %v5438
    %v5557 = vunpack.c.l.b16 %v5439
    %v5558 = vunpack.c.h.b16 %v5439
    %v5559 = vunpack.c.l.b16 %v5440
    %v5560 = vunpack.c.h.b16 %v5440
    %v5561 = vunpack.c.l.b16 %v5441
    %v5562 = vunpack.c.h.b16 %v5441
    %v5563 = vunpack.c.l.b16 %v5442
    %v5564 = vunpack.c.h.b16 %v5442
    %v5565 = vunpack.c.l.b16 %v5443
    %v5566 = vunpack.c.h.b16 %v5443
    %v5567 = vunpack.c.l.b16 %v5444
    %v5568 = vunpack.c.h.b16 %v5444
    %v5569 = vunpack.c.l.b16 %v5445
    %v5570 = vunpack.c.h.b16 %v5445
    %v5571 = vunpack.c.l.b16 %v5446
    %v5572 = vunpack.c.h.b16 %v5446
    %v5573 = vunpack.c.l.b16 %v5447
    %v5574 = vunpack.c.h.b16 %v5447
    %v5575 = vunpack.c.l.b16 %v5448
    %v5576 = vunpack.c.h.b16 %v5448
    %v5577 = vunpack.c.l.b16 %v5449
    %v5578 = vunpack.c.h.b16 %v5449
    %v5579 = vunpack.c.l.b16 %v5450
    %v5580 = vunpack.c.h.b16 %v5450
    %v5581 = vunpack.c.l.b16 %v5451
    %v5582 = vunpack.c.h.b16 %v5451
    %v5583 = vunpack.c.l.b16 %v5452
    %v5584 = vunpack.c.h.b16 %v5452
    %v5585 = vunpack.c.l.b16 %v5453
    %v5586 = vunpack.c.h.b16 %v5453
    %v5587 = vunpack.c.l.b16 %v5454
    %v5588 = vunpack.c.h.b16 %v5454
    %v5589 = vunpack.c.l.b16 %v5455
    %v5590 = vunpack.c.h.b16 %v5455
    %v5591 = vunpack.c.l.b16 %v5456
    %v5592 = vunpack.c.h.b16 %v5456
    %v5593 = vunpack.c.l.b16 %v5457
    %v5594 = vunpack.c.h.b16 %v5457
    %v5595 = vunpack.c.l.b16 %v5458
    %v5596 = vunpack.c.h.b16 %v5458
    %v5597 = vunpack.c.l.b16 %v5459
    %v5598 = vunpack.c.h.b16 %v5459
    %v5599 = vunpack.c.l.b16 %v5460
    %v5600 = vunpack.c.h.b16 %v5460
    %v5601 = vunpack.c.l.b16 %v5461
    %v5602 = vunpack.c.h.b16 %v5461
    %v5603 = vunpack.c.l.b16 %v5462
    %v5604 = vunpack.c.h.b16 %v5462
    %v5605 = vunpack.c.l.b16 %v5463
    %v5606 = vunpack.c.h.b16 %v5463
    %v5607 = vunpack.c.l.b16 %v5464
    %v5608 = vunpack.c.h.b16 %v5464
    %v5609 = vunpack.c.l.b16 %v5465
    %v5610 = vunpack.c.h.b16 %v5465
    %v5611 = vunpack.c.l.b16 %v5466
    %v5612 = vunpack.c.h.b16 %v5466
    %v5613 = vunpack.c.l.b16 %v5467
    %v5614 = vunpack.c.h.b16 %v5467
    %v5615 = vunpack.c.l.b16 %v5468
    %v5616 = vunpack.c.h.b16 %v5468
    %v5617 = vunpack.c.l.b16 %v5469
    %v5618 = vunpack.c.h.b16 %v5469
    %v5619 = vunpack.c.l.b16 %v5470
    %v5620 = vunpack.c.h.b16 %v5470
    %v5621 = vunpack.c.l.b16 %v5471
    %v5622 = vunpack.c.h.b16 %v5471
    %v5623 = vunpack.c.l.b16 %v5472
    %v5624 = vunpack.c.h.b16 %v5472
    %v5625 = vunpack.c.l.b16 %v5473
    %v5626 = vunpack.c.h.b16 %v5473
    %v5627 = vunpack.c.l.b16 %v5474
    %v5628 = vunpack.c.h.b16 %v5474
    %v5629 = vunpack.c.l.b16 %v5475
    %v5630 = vunpack.c.h.b16 %v5475
    %v5631 = vunpack.c.l.b16 %v5476
    %v5632 = vunpack.c.h.b16 %v5476
    %v5633 = vpack.c.b16 %v5537, %v5533
    %v5634 = vpack.c.b16 %v5538, %v5534
    %v5635 = vpack.c.b16 %v5539, %v5535
    %v5636 = vpack.c.b16 %v5540, %v5536
    %v5637 = vpack.c.b16 %v5545, %v5541
    %v5638 = vpack.c.b16 %v5546, %v5542
    %v5639 = vpack.c.b16 %v5547, %v5543
    %v5640 = vpack.c.b16 %v5548, %v5544
    %v5641 = vpack.c.b16 %v5553, %v5549
    %v5642 = vpack.c.b16 %v5554, %v5550
    %v5643 = vpack.c.b16 %v5555, %v5551
    %v5644 = vpack.c.b16 %v5556, %v5552
    %v5645 = vpack.c.b16 %v5561, %v5557
    %v5646 = vpack.c.b16 %v5562, %v5558
    %v5647 = vpack.c.b16 %v5563, %v5559
    %v5648 = vpack.c.b16 %v5564, %v5560
    %v5649 = vpack.c.b16 %v5569, %v5565
    %v5650 = vpack.c.b16 %v5570, %v5566
    %v5651 = vpack.c.b16 %v5571, %v5567
    %v5652 = vpack.c.b16 %v5572, %v5568
    %v5653 = vpack.c.b16 %v5577, %v5573
    %v5654 = vpack.c.b16 %v5578, %v5574
    %v5655 = vpack.c.b16 %v5579, %v5575
    %v5656 = vpack.c.b16 %v5580, %v5576
    %v5657 = vpack.c.b16 %v5585, %v5581
    %v5658 = vpack.c.b16 %v5586, %v5582
    %v5659 = vpack.c.b16 %v5587, %v5583
    %v5660 = vpack.c.b16 %v5588, %v5584
    %v5661 = vpack.c.b16 %v5593, %v5589
    %v5662 = vpack.c.b16 %v5594, %v5590
    %v5663 = vpack.c.b16 %v5595, %v5591
    %v5664 = vpack.c.b16 %v5596, %v5592
    %v5665 = vpack.c.b16 %v5601, %v5597
    %v5666 = vpack.c.b16 %v5602, %v5598
    %v5667 = vpack.c.b16 %v5603, %v5599
    %v5668 = vpack.c.b16 %v5604, %v5600
    %v5669 = vpack.c.b16 %v5609, %v5605
    %v5670 = vpack.c.b16 %v5610, %v5606
    %v5671 = vpack.c.b16 %v5611, %v5607
    %v5672 = vpack.c.b16 %v5612, %v5608
    %v5673 = vpack.c.b16 %v5617, %v5613
    %v5674 = vpack.c.b16 %v5618, %v5614
    %v5675 = vpack.c.b16 %v5619, %v5615
    %v5676 = vpack.c.b16 %v5620, %v5616
    %v5677 = vpack.c.b16 %v5625, %v5621
    %v5678 = vpack.c.b16 %v5626, %v5622
    %v5679 = vpack.c.b16 %v5627, %v5623
    %v5680 = vpack.c.b16 %v5628, %v5624
    %v5681 = vpack.c.b16 %v5629, %v5629
    %v5682 = vpack.c.b16 %v5630, %v5630
    %v5683 = vpack.c.b16 %v5631, %v5631
    %v5684 = vpack.c.b16 %v5632, %v5632
    %v5734 = vsel %vm2781, %v5481, 0
    %v5737 = vsel %vm1931, %v5681, 0
    %v5740 = vsel %vm1931, %v5682, 0
    %v5743 = vsel %vm1931, %v5683, 0
    %v5746 = vsel %vm1931, %v5684, 0
    %5748 = vmatpush.bf16.msra.mxu0 %v5661
    %5749 = vmatpush.bf16.msra.mxu0 %v5657
    %5750 = vmatpush.bf16.msra.mxu0 %v5653
    %5751 = vmatpush.bf16.msra.mxu0 %v5649
    %5752 = vmatpush.bf16.msra.mxu0 %v5645
    %5753 = vmatpush.bf16.msra.mxu0 %v5641
    %5754 = vmatpush.bf16.msra.mxu0 %v5637
    %5755 = vmatpush.bf16.msra.mxu0 %v5633
    %5756 = vmatmul.bf16.gmra.mxu0 %v5480
    %v5757 = vpop.f32.mrf.mxu0
    %v5758 = vadd.f32 0.0, %v5757
    %v5759 = vpop.f32.mrf.mxu0
    %5760 = vdwg.mxu0
    %5761 = vmatpush.bf16.msra.mxu0 0
    %5762 = vmatpush.bf16.msra.mxu0 0
    %5763 = vmatpush.bf16.msra.mxu0 0
    %5764 = vmatpush.bf16.msra.mxu0 %v5737
    %5765 = vmatpush.bf16.msra.mxu0 %v5677
    %5766 = vmatpush.bf16.msra.mxu0 %v5673
    %5767 = vmatpush.bf16.msra.mxu0 %v5669
    %5768 = vmatpush.bf16.msra.mxu0 %v5665
    %5769 = vmatmul.bf16.gmra.mxu0 %v5734
    %v5770 = vpop.f32.mrf.mxu0
    %v5771 = vadd.f32 %v5758, %v5770
    %v5772 = vpop.f32.mrf.mxu0
    %5773 = vdwg.mxu0
    %5774 = vmatpush.bf16.msra.mxu0 %v5662
    %5775 = vmatpush.bf16.msra.mxu0 %v5658
    %5776 = vmatpush.bf16.msra.mxu0 %v5654
    %5777 = vmatpush.bf16.msra.mxu0 %v5650
    %5778 = vmatpush.bf16.msra.mxu0 %v5646
    %5779 = vmatpush.bf16.msra.mxu0 %v5642
    %5780 = vmatpush.bf16.msra.mxu0 %v5638
    %5781 = vmatpush.bf16.msra.mxu0 %v5634
    %5782 = vmatmul.bf16.gmra.mxu0 %v5480
    %v5783 = vpop.f32.mrf.mxu0
    %v5784 = vadd.f32 0.0, %v5783
    %v5785 = vpop.f32.mrf.mxu0
    %5786 = vdwg.mxu0
    %5787 = vmatpush.bf16.msra.mxu0 0
    %5788 = vmatpush.bf16.msra.mxu0 0
    %5789 = vmatpush.bf16.msra.mxu0 0
    %5790 = vmatpush.bf16.msra.mxu0 %v5740
    %5791 = vmatpush.bf16.msra.mxu0 %v5678
    %5792 = vmatpush.bf16.msra.mxu0 %v5674
    %5793 = vmatpush.bf16.msra.mxu0 %v5670
    %5794 = vmatpush.bf16.msra.mxu0 %v5666
    %5795 = vmatmul.bf16.gmra.mxu0 %v5734
    %v5796 = vpop.f32.mrf.mxu0
    %v5797 = vadd.f32 %v5784, %v5796
    %v5798 = vpop.f32.mrf.mxu0
    %5799 = vdwg.mxu0
    %5800 = vmatpush.bf16.msra.mxu0 %v5663
    %5801 = vmatpush.bf16.msra.mxu0 %v5659
    %5802 = vmatpush.bf16.msra.mxu0 %v5655
    %5803 = vmatpush.bf16.msra.mxu0 %v5651
    %5804 = vmatpush.bf16.msra.mxu0 %v5647
    %5805 = vmatpush.bf16.msra.mxu0 %v5643
    %5806 = vmatpush.bf16.msra.mxu0 %v5639
    %5807 = vmatpush.bf16.msra.mxu0 %v5635
    %5808 = vmatmul.bf16.gmra.mxu0 %v5480
    %v5809 = vpop.f32.mrf.mxu0
    %v5810 = vadd.f32 0.0, %v5809
    %v5811 = vpop.f32.mrf.mxu0
    %5812 = vdwg.mxu0
    %5813 = vmatpush.bf16.msra.mxu0 0
    %5814 = vmatpush.bf16.msra.mxu0 0
    %5815 = vmatpush.bf16.msra.mxu0 0
    %5816 = vmatpush.bf16.msra.mxu0 %v5743
    %5817 = vmatpush.bf16.msra.mxu0 %v5679
    %5818 = vmatpush.bf16.msra.mxu0 %v5675
    %5819 = vmatpush.bf16.msra.mxu0 %v5671
    %5820 = vmatpush.bf16.msra.mxu0 %v5667
    %5821 = vmatmul.bf16.gmra.mxu0 %v5734
    %v5822 = vpop.f32.mrf.mxu0
    %v5823 = vadd.f32 %v5810, %v5822
    %v5824 = vpop.f32.mrf.mxu0
    %5825 = vdwg.mxu0
    %5826 = vmatpush.bf16.msra.mxu0 %v5664
    %5827 = vmatpush.bf16.msra.mxu0 %v5660
    %5828 = vmatpush.bf16.msra.mxu0 %v5656
    %5829 = vmatpush.bf16.msra.mxu0 %v5652
    %5830 = vmatpush.bf16.msra.mxu0 %v5648
    %5831 = vmatpush.bf16.msra.mxu0 %v5644
    %5832 = vmatpush.bf16.msra.mxu0 %v5640
    %5833 = vmatpush.bf16.msra.mxu0 %v5636
    %5834 = vmatmul.bf16.gmra.mxu0 %v5480
    %v5835 = vpop.f32.mrf.mxu0
    %v5836 = vadd.f32 0.0, %v5835
    %v5837 = vpop.f32.mrf.mxu0
    %5838 = vdwg.mxu0
    %5839 = vmatpush.bf16.msra.mxu0 0
    %5840 = vmatpush.bf16.msra.mxu0 0
    %5841 = vmatpush.bf16.msra.mxu0 0
    %5842 = vmatpush.bf16.msra.mxu0 %v5746
    %5843 = vmatpush.bf16.msra.mxu0 %v5680
    %5844 = vmatpush.bf16.msra.mxu0 %v5676
    %5845 = vmatpush.bf16.msra.mxu0 %v5672
    %5846 = vmatpush.bf16.msra.mxu0 %v5668
    %5847 = vmatmul.bf16.gmra.mxu0 %v5734
    %v5848 = vpop.f32.mrf.mxu0
    %v5849 = vadd.f32 %v5836, %v5848
    %v5850 = vpop.f32.mrf.mxu0
    %5851 = vdwg.mxu0
    %v5852 = vadd.f32 %v5422, %v5771
    %v5853 = vadd.f32 %v5423, %v5797
    %v5854 = vadd.f32 %v5424, %v5823
    %v5855 = vadd.f32 %v5425, %v5849
    %s5856 = scalar_lea.vmem %s5, 3200
    %v5857 = vld [vmem:[%s5856] sm:$0xff]
    %v5858 = vld [vmem:[%s5856 + $0x8] sm:$0xff]
    %v5859 = vld [vmem:[%s5856 + $0x10] sm:$0xff]
    %v5860 = vld [vmem:[%s5856 + $0x18] sm:$0xff]
    %v5861 = vld [vmem:[%s5856 + $0x20] sm:$0xff]
    %v5862 = vld [vmem:[%s5856 + $0x28] sm:$0xff]
    %v5863 = vld [vmem:[%s5856 + $0x30] sm:$0xff]
    %v5864 = vld [vmem:[%s5856 + $0x38] sm:$0xff]
    %v5865 = vld [vmem:[%s5856 + $0x40] sm:$0xff]
    %v5866 = vld [vmem:[%s5856 + $0x48] sm:$0xff]
    %v5867 = vld [vmem:[%s5856 + $0x50] sm:$0xff]
    %v5868 = vld [vmem:[%s5856 + $0x58] sm:$0xff]
    %v5869 = vld [vmem:[%s5856 + $0x60] sm:$0xff]
    %v5870 = vld [vmem:[%s5856 + $0x68] sm:$0xff]
    %v5871 = vld [vmem:[%s5856 + $0x70] sm:$0xff]
    %v5872 = vld [vmem:[%s5856 + $0x78] sm:$0xff]
    %v5873 = vld [vmem:[%s5856 + $0x80] sm:$0xff]
    %v5874 = vld [vmem:[%s5856 + $0x88] sm:$0xff]
    %v5875 = vld [vmem:[%s5856 + $0x90] sm:$0xff]
    %v5876 = vld [vmem:[%s5856 + $0x98] sm:$0xff]
    %v5877 = vld [vmem:[%s5856 + $0xa0] sm:$0xff]
    %v5878 = vld [vmem:[%s5856 + $0xa8] sm:$0xff]
    %v5879 = vld [vmem:[%s5856 + $0xb0] sm:$0xff]
    %v5880 = vld [vmem:[%s5856 + $0xb8] sm:$0xff]
    %v5881 = vld [vmem:[%s5856 + $0xc0] sm:$0xff]
    %v5882 = vld [vmem:[%s5856 + $0xc8] sm:$0xff]
    %v5883 = vld [vmem:[%s5856 + $0xd0] sm:$0xff]
    %v5884 = vld [vmem:[%s5856 + $0xd8] sm:$0xff]
    %v5885 = vld [vmem:[%s5856 + $0xe0] sm:$0xff]
    %v5886 = vld [vmem:[%s5856 + $0xe8] sm:$0xff]
    %v5887 = vld [vmem:[%s5856 + $0xf0] sm:$0xff]
    %v5888 = vld [vmem:[%s5856 + $0xf8] sm:$0xff]
    %v5889 = vld [vmem:[%s5856 + $0x100] sm:$0xff]
    %v5890 = vld [vmem:[%s5856 + $0x108] sm:$0xff]
    %v5891 = vld [vmem:[%s5856 + $0x110] sm:$0xff]
    %v5892 = vld [vmem:[%s5856 + $0x118] sm:$0xff]
    %v5893 = vld [vmem:[%s5856 + $0x120] sm:$0xff]
    %v5894 = vld [vmem:[%s5856 + $0x128] sm:$0xff]
    %v5895 = vld [vmem:[%s5856 + $0x130] sm:$0xff]
    %v5896 = vld [vmem:[%s5856 + $0x138] sm:$0xff]
    %v5897 = vld [vmem:[%s5856 + $0x140] sm:$0xff]
    %v5898 = vld [vmem:[%s5856 + $0x148] sm:$0xff]
    %v5899 = vld [vmem:[%s5856 + $0x150] sm:$0xff]
    %v5900 = vld [vmem:[%s5856 + $0x158] sm:$0xff]
    %v5901 = vld [vmem:[%s5856 + $0x160] sm:$0xff]
    %v5902 = vld [vmem:[%s5856 + $0x168] sm:$0xff]
    %v5903 = vld [vmem:[%s5856 + $0x170] sm:$0xff]
    %v5904 = vld [vmem:[%s5856 + $0x178] sm:$0xff]
    %v5905 = vld [vmem:[%s5856 + $0x180] sm:$0xff]
    %v5906 = vld [vmem:[%s5856 + $0x188] sm:$0xff]
    %v5908 = vunpack.c.l.b16 %v2422
    %v5909 = vunpack.c.h.b16 %v2422
    %v5910 = vpack.c.b16 %v5908, %v5908
    %v5911 = vpack.c.b16 %v5909, %v5909
    %v5963 = vunpack.c.l.b16 %v5857
    %v5964 = vunpack.c.h.b16 %v5857
    %v5965 = vunpack.c.l.b16 %v5858
    %v5966 = vunpack.c.h.b16 %v5858
    %v5967 = vunpack.c.l.b16 %v5859
    %v5968 = vunpack.c.h.b16 %v5859
    %v5969 = vunpack.c.l.b16 %v5860
    %v5970 = vunpack.c.h.b16 %v5860
    %v5971 = vunpack.c.l.b16 %v5861
    %v5972 = vunpack.c.h.b16 %v5861
    %v5973 = vunpack.c.l.b16 %v5862
    %v5974 = vunpack.c.h.b16 %v5862
    %v5975 = vunpack.c.l.b16 %v5863
    %v5976 = vunpack.c.h.b16 %v5863
    %v5977 = vunpack.c.l.b16 %v5864
    %v5978 = vunpack.c.h.b16 %v5864
    %v5979 = vunpack.c.l.b16 %v5865
    %v5980 = vunpack.c.h.b16 %v5865
    %v5981 = vunpack.c.l.b16 %v5866
    %v5982 = vunpack.c.h.b16 %v5866
    %v5983 = vunpack.c.l.b16 %v5867
    %v5984 = vunpack.c.h.b16 %v5867
    %v5985 = vunpack.c.l.b16 %v5868
    %v5986 = vunpack.c.h.b16 %v5868
    %v5987 = vunpack.c.l.b16 %v5869
    %v5988 = vunpack.c.h.b16 %v5869
    %v5989 = vunpack.c.l.b16 %v5870
    %v5990 = vunpack.c.h.b16 %v5870
    %v5991 = vunpack.c.l.b16 %v5871
    %v5992 = vunpack.c.h.b16 %v5871
    %v5993 = vunpack.c.l.b16 %v5872
    %v5994 = vunpack.c.h.b16 %v5872
    %v5995 = vunpack.c.l.b16 %v5873
    %v5996 = vunpack.c.h.b16 %v5873
    %v5997 = vunpack.c.l.b16 %v5874
    %v5998 = vunpack.c.h.b16 %v5874
    %v5999 = vunpack.c.l.b16 %v5875
    %v6000 = vunpack.c.h.b16 %v5875
    %v6001 = vunpack.c.l.b16 %v5876
    %v6002 = vunpack.c.h.b16 %v5876
    %v6003 = vunpack.c.l.b16 %v5877
    %v6004 = vunpack.c.h.b16 %v5877
    %v6005 = vunpack.c.l.b16 %v5878
    %v6006 = vunpack.c.h.b16 %v5878
    %v6007 = vunpack.c.l.b16 %v5879
    %v6008 = vunpack.c.h.b16 %v5879
    %v6009 = vunpack.c.l.b16 %v5880
    %v6010 = vunpack.c.h.b16 %v5880
    %v6011 = vunpack.c.l.b16 %v5881
    %v6012 = vunpack.c.h.b16 %v5881
    %v6013 = vunpack.c.l.b16 %v5882
    %v6014 = vunpack.c.h.b16 %v5882
    %v6015 = vunpack.c.l.b16 %v5883
    %v6016 = vunpack.c.h.b16 %v5883
    %v6017 = vunpack.c.l.b16 %v5884
    %v6018 = vunpack.c.h.b16 %v5884
    %v6019 = vunpack.c.l.b16 %v5885
    %v6020 = vunpack.c.h.b16 %v5885
    %v6021 = vunpack.c.l.b16 %v5886
    %v6022 = vunpack.c.h.b16 %v5886
    %v6023 = vunpack.c.l.b16 %v5887
    %v6024 = vunpack.c.h.b16 %v5887
    %v6025 = vunpack.c.l.b16 %v5888
    %v6026 = vunpack.c.h.b16 %v5888
    %v6027 = vunpack.c.l.b16 %v5889
    %v6028 = vunpack.c.h.b16 %v5889
    %v6029 = vunpack.c.l.b16 %v5890
    %v6030 = vunpack.c.h.b16 %v5890
    %v6031 = vunpack.c.l.b16 %v5891
    %v6032 = vunpack.c.h.b16 %v5891
    %v6033 = vunpack.c.l.b16 %v5892
    %v6034 = vunpack.c.h.b16 %v5892
    %v6035 = vunpack.c.l.b16 %v5893
    %v6036 = vunpack.c.h.b16 %v5893
    %v6037 = vunpack.c.l.b16 %v5894
    %v6038 = vunpack.c.h.b16 %v5894
    %v6039 = vunpack.c.l.b16 %v5895
    %v6040 = vunpack.c.h.b16 %v5895
    %v6041 = vunpack.c.l.b16 %v5896
    %v6042 = vunpack.c.h.b16 %v5896
    %v6043 = vunpack.c.l.b16 %v5897
    %v6044 = vunpack.c.h.b16 %v5897
    %v6045 = vunpack.c.l.b16 %v5898
    %v6046 = vunpack.c.h.b16 %v5898
    %v6047 = vunpack.c.l.b16 %v5899
    %v6048 = vunpack.c.h.b16 %v5899
    %v6049 = vunpack.c.l.b16 %v5900
    %v6050 = vunpack.c.h.b16 %v5900
    %v6051 = vunpack.c.l.b16 %v5901
    %v6052 = vunpack.c.h.b16 %v5901
    %v6053 = vunpack.c.l.b16 %v5902
    %v6054 = vunpack.c.h.b16 %v5902
    %v6055 = vunpack.c.l.b16 %v5903
    %v6056 = vunpack.c.h.b16 %v5903
    %v6057 = vunpack.c.l.b16 %v5904
    %v6058 = vunpack.c.h.b16 %v5904
    %v6059 = vunpack.c.l.b16 %v5905
    %v6060 = vunpack.c.h.b16 %v5905
    %v6061 = vunpack.c.l.b16 %v5906
    %v6062 = vunpack.c.h.b16 %v5906
    %v6063 = vpack.c.b16 %v5967, %v5963
    %v6064 = vpack.c.b16 %v5968, %v5964
    %v6065 = vpack.c.b16 %v5969, %v5965
    %v6066 = vpack.c.b16 %v5970, %v5966
    %v6067 = vpack.c.b16 %v5975, %v5971
    %v6068 = vpack.c.b16 %v5976, %v5972
    %v6069 = vpack.c.b16 %v5977, %v5973
    %v6070 = vpack.c.b16 %v5978, %v5974
    %v6071 = vpack.c.b16 %v5983, %v5979
    %v6072 = vpack.c.b16 %v5984, %v5980
    %v6073 = vpack.c.b16 %v5985, %v5981
    %v6074 = vpack.c.b16 %v5986, %v5982
    %v6075 = vpack.c.b16 %v5991, %v5987
    %v6076 = vpack.c.b16 %v5992, %v5988
    %v6077 = vpack.c.b16 %v5993, %v5989
    %v6078 = vpack.c.b16 %v5994, %v5990
    %v6079 = vpack.c.b16 %v5999, %v5995
    %v6080 = vpack.c.b16 %v6000, %v5996
    %v6081 = vpack.c.b16 %v6001, %v5997
    %v6082 = vpack.c.b16 %v6002, %v5998
    %v6083 = vpack.c.b16 %v6007, %v6003
    %v6084 = vpack.c.b16 %v6008, %v6004
    %v6085 = vpack.c.b16 %v6009, %v6005
    %v6086 = vpack.c.b16 %v6010, %v6006
    %v6087 = vpack.c.b16 %v6015, %v6011
    %v6088 = vpack.c.b16 %v6016, %v6012
    %v6089 = vpack.c.b16 %v6017, %v6013
    %v6090 = vpack.c.b16 %v6018, %v6014
    %v6091 = vpack.c.b16 %v6023, %v6019
    %v6092 = vpack.c.b16 %v6024, %v6020
    %v6093 = vpack.c.b16 %v6025, %v6021
    %v6094 = vpack.c.b16 %v6026, %v6022
    %v6095 = vpack.c.b16 %v6031, %v6027
    %v6096 = vpack.c.b16 %v6032, %v6028
    %v6097 = vpack.c.b16 %v6033, %v6029
    %v6098 = vpack.c.b16 %v6034, %v6030
    %v6099 = vpack.c.b16 %v6039, %v6035
    %v6100 = vpack.c.b16 %v6040, %v6036
    %v6101 = vpack.c.b16 %v6041, %v6037
    %v6102 = vpack.c.b16 %v6042, %v6038
    %v6103 = vpack.c.b16 %v6047, %v6043
    %v6104 = vpack.c.b16 %v6048, %v6044
    %v6105 = vpack.c.b16 %v6049, %v6045
    %v6106 = vpack.c.b16 %v6050, %v6046
    %v6107 = vpack.c.b16 %v6055, %v6051
    %v6108 = vpack.c.b16 %v6056, %v6052
    %v6109 = vpack.c.b16 %v6057, %v6053
    %v6110 = vpack.c.b16 %v6058, %v6054
    %v6111 = vpack.c.b16 %v6059, %v6059
    %v6112 = vpack.c.b16 %v6060, %v6060
    %v6113 = vpack.c.b16 %v6061, %v6061
    %v6114 = vpack.c.b16 %v6062, %v6062
    %v6164 = vsel %vm2781, %v5911, 0
    %v6167 = vsel %vm1931, %v6111, 0
    %v6170 = vsel %vm1931, %v6112, 0
    %v6173 = vsel %vm1931, %v6113, 0
    %v6176 = vsel %vm1931, %v6114, 0
    %6178 = vmatpush.bf16.msra.mxu0 %v6091
    %6179 = vmatpush.bf16.msra.mxu0 %v6087
    %6180 = vmatpush.bf16.msra.mxu0 %v6083
    %6181 = vmatpush.bf16.msra.mxu0 %v6079
    %6182 = vmatpush.bf16.msra.mxu0 %v6075
    %6183 = vmatpush.bf16.msra.mxu0 %v6071
    %6184 = vmatpush.bf16.msra.mxu0 %v6067
    %6185 = vmatpush.bf16.msra.mxu0 %v6063
    %6186 = vmatmul.bf16.gmra.mxu0 %v5910
    %v6187 = vpop.f32.mrf.mxu0
    %v6188 = vadd.f32 0.0, %v6187
    %v6189 = vpop.f32.mrf.mxu0
    %6190 = vdwg.mxu0
    %6191 = vmatpush.bf16.msra.mxu0 0
    %6192 = vmatpush.bf16.msra.mxu0 0
    %6193 = vmatpush.bf16.msra.mxu0 0
    %6194 = vmatpush.bf16.msra.mxu0 %v6167
    %6195 = vmatpush.bf16.msra.mxu0 %v6107
    %6196 = vmatpush.bf16.msra.mxu0 %v6103
    %6197 = vmatpush.bf16.msra.mxu0 %v6099
    %6198 = vmatpush.bf16.msra.mxu0 %v6095
    %6199 = vmatmul.bf16.gmra.mxu0 %v6164
    %v6200 = vpop.f32.mrf.mxu0
    %v6201 = vadd.f32 %v6188, %v6200
    %v6202 = vpop.f32.mrf.mxu0
    %6203 = vdwg.mxu0
    %6204 = vmatpush.bf16.msra.mxu0 %v6092
    %6205 = vmatpush.bf16.msra.mxu0 %v6088
    %6206 = vmatpush.bf16.msra.mxu0 %v6084
    %6207 = vmatpush.bf16.msra.mxu0 %v6080
    %6208 = vmatpush.bf16.msra.mxu0 %v6076
    %6209 = vmatpush.bf16.msra.mxu0 %v6072
    %6210 = vmatpush.bf16.msra.mxu0 %v6068
    %6211 = vmatpush.bf16.msra.mxu0 %v6064
    %6212 = vmatmul.bf16.gmra.mxu0 %v5910
    %v6213 = vpop.f32.mrf.mxu0
    %v6214 = vadd.f32 0.0, %v6213
    %v6215 = vpop.f32.mrf.mxu0
    %6216 = vdwg.mxu0
    %6217 = vmatpush.bf16.msra.mxu0 0
    %6218 = vmatpush.bf16.msra.mxu0 0
    %6219 = vmatpush.bf16.msra.mxu0 0
    %6220 = vmatpush.bf16.msra.mxu0 %v6170
    %6221 = vmatpush.bf16.msra.mxu0 %v6108
    %6222 = vmatpush.bf16.msra.mxu0 %v6104
    %6223 = vmatpush.bf16.msra.mxu0 %v6100
    %6224 = vmatpush.bf16.msra.mxu0 %v6096
    %6225 = vmatmul.bf16.gmra.mxu0 %v6164
    %v6226 = vpop.f32.mrf.mxu0
    %v6227 = vadd.f32 %v6214, %v6226
    %v6228 = vpop.f32.mrf.mxu0
    %6229 = vdwg.mxu0
    %6230 = vmatpush.bf16.msra.mxu0 %v6093
    %6231 = vmatpush.bf16.msra.mxu0 %v6089
    %6232 = vmatpush.bf16.msra.mxu0 %v6085
    %6233 = vmatpush.bf16.msra.mxu0 %v6081
    %6234 = vmatpush.bf16.msra.mxu0 %v6077
    %6235 = vmatpush.bf16.msra.mxu0 %v6073
    %6236 = vmatpush.bf16.msra.mxu0 %v6069
    %6237 = vmatpush.bf16.msra.mxu0 %v6065
    %6238 = vmatmul.bf16.gmra.mxu0 %v5910
    %v6239 = vpop.f32.mrf.mxu0
    %v6240 = vadd.f32 0.0, %v6239
    %v6241 = vpop.f32.mrf.mxu0
    %6242 = vdwg.mxu0
    %6243 = vmatpush.bf16.msra.mxu0 0
    %6244 = vmatpush.bf16.msra.mxu0 0
    %6245 = vmatpush.bf16.msra.mxu0 0
    %6246 = vmatpush.bf16.msra.mxu0 %v6173
    %6247 = vmatpush.bf16.msra.mxu0 %v6109
    %6248 = vmatpush.bf16.msra.mxu0 %v6105
    %6249 = vmatpush.bf16.msra.mxu0 %v6101
    %6250 = vmatpush.bf16.msra.mxu0 %v6097
    %6251 = vmatmul.bf16.gmra.mxu0 %v6164
    %v6252 = vpop.f32.mrf.mxu0
    %v6253 = vadd.f32 %v6240, %v6252
    %v6254 = vpop.f32.mrf.mxu0
    %6255 = vdwg.mxu0
    %6256 = vmatpush.bf16.msra.mxu0 %v6094
    %6257 = vmatpush.bf16.msra.mxu0 %v6090
    %6258 = vmatpush.bf16.msra.mxu0 %v6086
    %6259 = vmatpush.bf16.msra.mxu0 %v6082
    %6260 = vmatpush.bf16.msra.mxu0 %v6078
    %6261 = vmatpush.bf16.msra.mxu0 %v6074
    %6262 = vmatpush.bf16.msra.mxu0 %v6070
    %6263 = vmatpush.bf16.msra.mxu0 %v6066
    %6264 = vmatmul.bf16.gmra.mxu0 %v5910
    %v6265 = vpop.f32.mrf.mxu0
    %v6266 = vadd.f32 0.0, %v6265
    %v6267 = vpop.f32.mrf.mxu0
    %6268 = vdwg.mxu0
    %6269 = vmatpush.bf16.msra.mxu0 0
    %6270 = vmatpush.bf16.msra.mxu0 0
    %6271 = vmatpush.bf16.msra.mxu0 0
    %6272 = vmatpush.bf16.msra.mxu0 %v6176
    %6273 = vmatpush.bf16.msra.mxu0 %v6110
    %6274 = vmatpush.bf16.msra.mxu0 %v6106
    %6275 = vmatpush.bf16.msra.mxu0 %v6102
    %6276 = vmatpush.bf16.msra.mxu0 %v6098
    %6277 = vmatmul.bf16.gmra.mxu0 %v6164
    %v6278 = vpop.f32.mrf.mxu0
    %v6279 = vadd.f32 %v6266, %v6278
    %v6280 = vpop.f32.mrf.mxu0
    %6281 = vdwg.mxu0
    %v6282 = vadd.f32 %v5852, %v6201
    %v6283 = vadd.f32 %v5853, %v6227
    %v6284 = vadd.f32 %v5854, %v6253
    %v6285 = vadd.f32 %v5855, %v6279
    %s6286 = scalar_lea.vmem %s5, 3600
    %v6287 = vld [vmem:[%s6286] sm:$0xff]
    %v6288 = vld [vmem:[%s6286 + $0x8] sm:$0xff]
    %v6289 = vld [vmem:[%s6286 + $0x10] sm:$0xff]
    %v6290 = vld [vmem:[%s6286 + $0x18] sm:$0xff]
    %v6291 = vld [vmem:[%s6286 + $0x20] sm:$0xff]
    %v6292 = vld [vmem:[%s6286 + $0x28] sm:$0xff]
    %v6293 = vld [vmem:[%s6286 + $0x30] sm:$0xff]
    %v6294 = vld [vmem:[%s6286 + $0x38] sm:$0xff]
    %v6295 = vld [vmem:[%s6286 + $0x40] sm:$0xff]
    %v6296 = vld [vmem:[%s6286 + $0x48] sm:$0xff]
    %v6297 = vld [vmem:[%s6286 + $0x50] sm:$0xff]
    %v6298 = vld [vmem:[%s6286 + $0x58] sm:$0xff]
    %v6299 = vld [vmem:[%s6286 + $0x60] sm:$0xff]
    %v6300 = vld [vmem:[%s6286 + $0x68] sm:$0xff]
    %v6301 = vld [vmem:[%s6286 + $0x70] sm:$0xff]
    %v6302 = vld [vmem:[%s6286 + $0x78] sm:$0xff]
    %v6303 = vld [vmem:[%s6286 + $0x80] sm:$0xff]
    %v6304 = vld [vmem:[%s6286 + $0x88] sm:$0xff]
    %v6305 = vld [vmem:[%s6286 + $0x90] sm:$0xff]
    %v6306 = vld [vmem:[%s6286 + $0x98] sm:$0xff]
    %v6307 = vld [vmem:[%s6286 + $0xa0] sm:$0xff]
    %v6308 = vld [vmem:[%s6286 + $0xa8] sm:$0xff]
    %v6309 = vld [vmem:[%s6286 + $0xb0] sm:$0xff]
    %v6310 = vld [vmem:[%s6286 + $0xb8] sm:$0xff]
    %v6311 = vld [vmem:[%s6286 + $0xc0] sm:$0xff]
    %v6312 = vld [vmem:[%s6286 + $0xc8] sm:$0xff]
    %v6313 = vld [vmem:[%s6286 + $0xd0] sm:$0xff]
    %v6314 = vld [vmem:[%s6286 + $0xd8] sm:$0xff]
    %v6315 = vld [vmem:[%s6286 + $0xe0] sm:$0xff]
    %v6316 = vld [vmem:[%s6286 + $0xe8] sm:$0xff]
    %v6317 = vld [vmem:[%s6286 + $0xf0] sm:$0xff]
    %v6318 = vld [vmem:[%s6286 + $0xf8] sm:$0xff]
    %v6319 = vld [vmem:[%s6286 + $0x100] sm:$0xff]
    %v6320 = vld [vmem:[%s6286 + $0x108] sm:$0xff]
    %v6321 = vld [vmem:[%s6286 + $0x110] sm:$0xff]
    %v6322 = vld [vmem:[%s6286 + $0x118] sm:$0xff]
    %v6323 = vld [vmem:[%s6286 + $0x120] sm:$0xff]
    %v6324 = vld [vmem:[%s6286 + $0x128] sm:$0xff]
    %v6325 = vld [vmem:[%s6286 + $0x130] sm:$0xff]
    %v6326 = vld [vmem:[%s6286 + $0x138] sm:$0xff]
    %v6327 = vld [vmem:[%s6286 + $0x140] sm:$0xff]
    %v6328 = vld [vmem:[%s6286 + $0x148] sm:$0xff]
    %v6329 = vld [vmem:[%s6286 + $0x150] sm:$0xff]
    %v6330 = vld [vmem:[%s6286 + $0x158] sm:$0xff]
    %v6331 = vld [vmem:[%s6286 + $0x160] sm:$0xff]
    %v6332 = vld [vmem:[%s6286 + $0x168] sm:$0xff]
    %v6333 = vld [vmem:[%s6286 + $0x170] sm:$0xff]
    %v6334 = vld [vmem:[%s6286 + $0x178] sm:$0xff]
    %v6335 = vld [vmem:[%s6286 + $0x180] sm:$0xff]
    %v6336 = vld [vmem:[%s6286 + $0x188] sm:$0xff]
    %v6338 = vunpack.c.l.b16 %v2423
    %v6339 = vunpack.c.h.b16 %v2423
    %v6340 = vpack.c.b16 %v6338, %v6338
    %v6341 = vpack.c.b16 %v6339, %v6339
    %v6393 = vunpack.c.l.b16 %v6287
    %v6394 = vunpack.c.h.b16 %v6287
    %v6395 = vunpack.c.l.b16 %v6288
    %v6396 = vunpack.c.h.b16 %v6288
    %v6397 = vunpack.c.l.b16 %v6289
    %v6398 = vunpack.c.h.b16 %v6289
    %v6399 = vunpack.c.l.b16 %v6290
    %v6400 = vunpack.c.h.b16 %v6290
    %v6401 = vunpack.c.l.b16 %v6291
    %v6402 = vunpack.c.h.b16 %v6291
    %v6403 = vunpack.c.l.b16 %v6292
    %v6404 = vunpack.c.h.b16 %v6292
    %v6405 = vunpack.c.l.b16 %v6293
    %v6406 = vunpack.c.h.b16 %v6293
    %v6407 = vunpack.c.l.b16 %v6294
    %v6408 = vunpack.c.h.b16 %v6294
    %v6409 = vunpack.c.l.b16 %v6295
    %v6410 = vunpack.c.h.b16 %v6295
    %v6411 = vunpack.c.l.b16 %v6296
    %v6412 = vunpack.c.h.b16 %v6296
    %v6413 = vunpack.c.l.b16 %v6297
    %v6414 = vunpack.c.h.b16 %v6297
    %v6415 = vunpack.c.l.b16 %v6298
    %v6416 = vunpack.c.h.b16 %v6298
    %v6417 = vunpack.c.l.b16 %v6299
    %v6418 = vunpack.c.h.b16 %v6299
    %v6419 = vunpack.c.l.b16 %v6300
    %v6420 = vunpack.c.h.b16 %v6300
    %v6421 = vunpack.c.l.b16 %v6301
    %v6422 = vunpack.c.h.b16 %v6301
    %v6423 = vunpack.c.l.b16 %v6302
    %v6424 = vunpack.c.h.b16 %v6302
    %v6425 = vunpack.c.l.b16 %v6303
    %v6426 = vunpack.c.h.b16 %v6303
    %v6427 = vunpack.c.l.b16 %v6304
    %v6428 = vunpack.c.h.b16 %v6304
    %v6429 = vunpack.c.l.b16 %v6305
    %v6430 = vunpack.c.h.b16 %v6305
    %v6431 = vunpack.c.l.b16 %v6306
    %v6432 = vunpack.c.h.b16 %v6306
    %v6433 = vunpack.c.l.b16 %v6307
    %v6434 = vunpack.c.h.b16 %v6307
    %v6435 = vunpack.c.l.b16 %v6308
    %v6436 = vunpack.c.h.b16 %v6308
    %v6437 = vunpack.c.l.b16 %v6309
    %v6438 = vunpack.c.h.b16 %v6309
    %v6439 = vunpack.c.l.b16 %v6310
    %v6440 = vunpack.c.h.b16 %v6310
    %v6441 = vunpack.c.l.b16 %v6311
    %v6442 = vunpack.c.h.b16 %v6311
    %v6443 = vunpack.c.l.b16 %v6312
    %v6444 = vunpack.c.h.b16 %v6312
    %v6445 = vunpack.c.l.b16 %v6313
    %v6446 = vunpack.c.h.b16 %v6313
    %v6447 = vunpack.c.l.b16 %v6314
    %v6448 = vunpack.c.h.b16 %v6314
    %v6449 = vunpack.c.l.b16 %v6315
    %v6450 = vunpack.c.h.b16 %v6315
    %v6451 = vunpack.c.l.b16 %v6316
    %v6452 = vunpack.c.h.b16 %v6316
    %v6453 = vunpack.c.l.b16 %v6317
    %v6454 = vunpack.c.h.b16 %v6317
    %v6455 = vunpack.c.l.b16 %v6318
    %v6456 = vunpack.c.h.b16 %v6318
    %v6457 = vunpack.c.l.b16 %v6319
    %v6458 = vunpack.c.h.b16 %v6319
    %v6459 = vunpack.c.l.b16 %v6320
    %v6460 = vunpack.c.h.b16 %v6320
    %v6461 = vunpack.c.l.b16 %v6321
    %v6462 = vunpack.c.h.b16 %v6321
    %v6463 = vunpack.c.l.b16 %v6322
    %v6464 = vunpack.c.h.b16 %v6322
    %v6465 = vunpack.c.l.b16 %v6323
    %v6466 = vunpack.c.h.b16 %v6323
    %v6467 = vunpack.c.l.b16 %v6324
    %v6468 = vunpack.c.h.b16 %v6324
    %v6469 = vunpack.c.l.b16 %v6325
    %v6470 = vunpack.c.h.b16 %v6325
    %v6471 = vunpack.c.l.b16 %v6326
    %v6472 = vunpack.c.h.b16 %v6326
    %v6473 = vunpack.c.l.b16 %v6327
    %v6474 = vunpack.c.h.b16 %v6327
    %v6475 = vunpack.c.l.b16 %v6328
    %v6476 = vunpack.c.h.b16 %v6328
    %v6477 = vunpack.c.l.b16 %v6329
    %v6478 = vunpack.c.h.b16 %v6329
    %v6479 = vunpack.c.l.b16 %v6330
    %v6480 = vunpack.c.h.b16 %v6330
    %v6481 = vunpack.c.l.b16 %v6331
    %v6482 = vunpack.c.h.b16 %v6331
    %v6483 = vunpack.c.l.b16 %v6332
    %v6484 = vunpack.c.h.b16 %v6332
    %v6485 = vunpack.c.l.b16 %v6333
    %v6486 = vunpack.c.h.b16 %v6333
    %v6487 = vunpack.c.l.b16 %v6334
    %v6488 = vunpack.c.h.b16 %v6334
    %v6489 = vunpack.c.l.b16 %v6335
    %v6490 = vunpack.c.h.b16 %v6335
    %v6491 = vunpack.c.l.b16 %v6336
    %v6492 = vunpack.c.h.b16 %v6336
    %v6493 = vpack.c.b16 %v6397, %v6393
    %v6494 = vpack.c.b16 %v6398, %v6394
    %v6495 = vpack.c.b16 %v6399, %v6395
    %v6496 = vpack.c.b16 %v6400, %v6396
    %v6497 = vpack.c.b16 %v6405, %v6401
    %v6498 = vpack.c.b16 %v6406, %v6402
    %v6499 = vpack.c.b16 %v6407, %v6403
    %v6500 = vpack.c.b16 %v6408, %v6404
    %v6501 = vpack.c.b16 %v6413, %v6409
    %v6502 = vpack.c.b16 %v6414, %v6410
    %v6503 = vpack.c.b16 %v6415, %v6411
    %v6504 = vpack.c.b16 %v6416, %v6412
    %v6505 = vpack.c.b16 %v6421, %v6417
    %v6506 = vpack.c.b16 %v6422, %v6418
    %v6507 = vpack.c.b16 %v6423, %v6419
    %v6508 = vpack.c.b16 %v6424, %v6420
    %v6509 = vpack.c.b16 %v6429, %v6425
    %v6510 = vpack.c.b16 %v6430, %v6426
    %v6511 = vpack.c.b16 %v6431, %v6427
    %v6512 = vpack.c.b16 %v6432, %v6428
    %v6513 = vpack.c.b16 %v6437, %v6433
    %v6514 = vpack.c.b16 %v6438, %v6434
    %v6515 = vpack.c.b16 %v6439, %v6435
    %v6516 = vpack.c.b16 %v6440, %v6436
    %v6517 = vpack.c.b16 %v6445, %v6441
    %v6518 = vpack.c.b16 %v6446, %v6442
    %v6519 = vpack.c.b16 %v6447, %v6443
    %v6520 = vpack.c.b16 %v6448, %v6444
    %v6521 = vpack.c.b16 %v6453, %v6449
    %v6522 = vpack.c.b16 %v6454, %v6450
    %v6523 = vpack.c.b16 %v6455, %v6451
    %v6524 = vpack.c.b16 %v6456, %v6452
    %v6525 = vpack.c.b16 %v6461, %v6457
    %v6526 = vpack.c.b16 %v6462, %v6458
    %v6527 = vpack.c.b16 %v6463, %v6459
    %v6528 = vpack.c.b16 %v6464, %v6460
    %v6529 = vpack.c.b16 %v6469, %v6465
    %v6530 = vpack.c.b16 %v6470, %v6466
    %v6531 = vpack.c.b16 %v6471, %v6467
    %v6532 = vpack.c.b16 %v6472, %v6468
    %v6533 = vpack.c.b16 %v6477, %v6473
    %v6534 = vpack.c.b16 %v6478, %v6474
    %v6535 = vpack.c.b16 %v6479, %v6475
    %v6536 = vpack.c.b16 %v6480, %v6476
    %v6537 = vpack.c.b16 %v6485, %v6481
    %v6538 = vpack.c.b16 %v6486, %v6482
    %v6539 = vpack.c.b16 %v6487, %v6483
    %v6540 = vpack.c.b16 %v6488, %v6484
    %v6541 = vpack.c.b16 %v6489, %v6489
    %v6542 = vpack.c.b16 %v6490, %v6490
    %v6543 = vpack.c.b16 %v6491, %v6491
    %v6544 = vpack.c.b16 %v6492, %v6492
    %v6594 = vsel %vm2781, %v6341, 0
    %v6597 = vsel %vm1931, %v6541, 0
    %v6600 = vsel %vm1931, %v6542, 0
    %v6603 = vsel %vm1931, %v6543, 0
    %v6606 = vsel %vm1931, %v6544, 0
    %6608 = vmatpush.bf16.msra.mxu0 %v6521
    %6609 = vmatpush.bf16.msra.mxu0 %v6517
    %6610 = vmatpush.bf16.msra.mxu0 %v6513
    %6611 = vmatpush.bf16.msra.mxu0 %v6509
    %6612 = vmatpush.bf16.msra.mxu0 %v6505
    %6613 = vmatpush.bf16.msra.mxu0 %v6501
    %6614 = vmatpush.bf16.msra.mxu0 %v6497
    %6615 = vmatpush.bf16.msra.mxu0 %v6493
    %6616 = vmatmul.bf16.gmra.mxu0 %v6340
    %v6617 = vpop.f32.mrf.mxu0
    %v6618 = vadd.f32 0.0, %v6617
    %v6619 = vpop.f32.mrf.mxu0
    %6620 = vdwg.mxu0
    %6621 = vmatpush.bf16.msra.mxu0 0
    %6622 = vmatpush.bf16.msra.mxu0 0
    %6623 = vmatpush.bf16.msra.mxu0 0
    %6624 = vmatpush.bf16.msra.mxu0 %v6597
    %6625 = vmatpush.bf16.msra.mxu0 %v6537
    %6626 = vmatpush.bf16.msra.mxu0 %v6533
    %6627 = vmatpush.bf16.msra.mxu0 %v6529
    %6628 = vmatpush.bf16.msra.mxu0 %v6525
    %6629 = vmatmul.bf16.gmra.mxu0 %v6594
    %v6630 = vpop.f32.mrf.mxu0
    %v6631 = vadd.f32 %v6618, %v6630
    %v6632 = vpop.f32.mrf.mxu0
    %6633 = vdwg.mxu0
    %6634 = vmatpush.bf16.msra.mxu0 %v6522
    %6635 = vmatpush.bf16.msra.mxu0 %v6518
    %6636 = vmatpush.bf16.msra.mxu0 %v6514
    %6637 = vmatpush.bf16.msra.mxu0 %v6510
    %6638 = vmatpush.bf16.msra.mxu0 %v6506
    %6639 = vmatpush.bf16.msra.mxu0 %v6502
    %6640 = vmatpush.bf16.msra.mxu0 %v6498
    %6641 = vmatpush.bf16.msra.mxu0 %v6494
    %6642 = vmatmul.bf16.gmra.mxu0 %v6340
    %v6643 = vpop.f32.mrf.mxu0
    %v6644 = vadd.f32 0.0, %v6643
    %v6645 = vpop.f32.mrf.mxu0
    %6646 = vdwg.mxu0
    %6647 = vmatpush.bf16.msra.mxu0 0
    %6648 = vmatpush.bf16.msra.mxu0 0
    %6649 = vmatpush.bf16.msra.mxu0 0
    %6650 = vmatpush.bf16.msra.mxu0 %v6600
    %6651 = vmatpush.bf16.msra.mxu0 %v6538
    %6652 = vmatpush.bf16.msra.mxu0 %v6534
    %6653 = vmatpush.bf16.msra.mxu0 %v6530
    %6654 = vmatpush.bf16.msra.mxu0 %v6526
    %6655 = vmatmul.bf16.gmra.mxu0 %v6594
    %v6656 = vpop.f32.mrf.mxu0
    %v6657 = vadd.f32 %v6644, %v6656
    %v6658 = vpop.f32.mrf.mxu0
    %6659 = vdwg.mxu0
    %6660 = vmatpush.bf16.msra.mxu0 %v6523
    %6661 = vmatpush.bf16.msra.mxu0 %v6519
    %6662 = vmatpush.bf16.msra.mxu0 %v6515
    %6663 = vmatpush.bf16.msra.mxu0 %v6511
    %6664 = vmatpush.bf16.msra.mxu0 %v6507
    %6665 = vmatpush.bf16.msra.mxu0 %v6503
    %6666 = vmatpush.bf16.msra.mxu0 %v6499
    %6667 = vmatpush.bf16.msra.mxu0 %v6495
    %6668 = vmatmul.bf16.gmra.mxu0 %v6340
    %v6669 = vpop.f32.mrf.mxu0
    %v6670 = vadd.f32 0.0, %v6669
    %v6671 = vpop.f32.mrf.mxu0
    %6672 = vdwg.mxu0
    %6673 = vmatpush.bf16.msra.mxu0 0
    %6674 = vmatpush.bf16.msra.mxu0 0
    %6675 = vmatpush.bf16.msra.mxu0 0
    %6676 = vmatpush.bf16.msra.mxu0 %v6603
    %6677 = vmatpush.bf16.msra.mxu0 %v6539
    %6678 = vmatpush.bf16.msra.mxu0 %v6535
    %6679 = vmatpush.bf16.msra.mxu0 %v6531
    %6680 = vmatpush.bf16.msra.mxu0 %v6527
    %6681 = vmatmul.bf16.gmra.mxu0 %v6594
    %v6682 = vpop.f32.mrf.mxu0
    %v6683 = vadd.f32 %v6670, %v6682
    %v6684 = vpop.f32.mrf.mxu0
    %6685 = vdwg.mxu0
    %6686 = vmatpush.bf16.msra.mxu0 %v6524
    %6687 = vmatpush.bf16.msra.mxu0 %v6520
    %6688 = vmatpush.bf16.msra.mxu0 %v6516
    %6689 = vmatpush.bf16.msra.mxu0 %v6512
    %6690 = vmatpush.bf16.msra.mxu0 %v6508
    %6691 = vmatpush.bf16.msra.mxu0 %v6504
    %6692 = vmatpush.bf16.msra.mxu0 %v6500
    %6693 = vmatpush.bf16.msra.mxu0 %v6496
    %6694 = vmatmul.bf16.gmra.mxu0 %v6340
    %v6695 = vpop.f32.mrf.mxu0
    %v6696 = vadd.f32 0.0, %v6695
    %v6697 = vpop.f32.mrf.mxu0
    %6698 = vdwg.mxu0
    %6699 = vmatpush.bf16.msra.mxu0 0
    %6700 = vmatpush.bf16.msra.mxu0 0
    %6701 = vmatpush.bf16.msra.mxu0 0
    %6702 = vmatpush.bf16.msra.mxu0 %v6606
    %6703 = vmatpush.bf16.msra.mxu0 %v6540
    %6704 = vmatpush.bf16.msra.mxu0 %v6536
    %6705 = vmatpush.bf16.msra.mxu0 %v6532
    %6706 = vmatpush.bf16.msra.mxu0 %v6528
    %6707 = vmatmul.bf16.gmra.mxu0 %v6594
    %v6708 = vpop.f32.mrf.mxu0
    %v6709 = vadd.f32 %v6696, %v6708
    %v6710 = vpop.f32.mrf.mxu0
    %6711 = vdwg.mxu0
    %v6712 = vadd.f32 %v6282, %v6631
    %v6713 = vadd.f32 %v6283, %v6657
    %v6714 = vadd.f32 %v6284, %v6683
    %v6715 = vadd.f32 %v6285, %v6709
    %v6716 = vld [vmem:[%s6] sm:$0xf]
    %v6718 = vperm.slane %v6716, 0
    %v6719 = vperm.slane %v6716, 1
    %v6720 = vperm.slane %v6716, 2
    %v6721 = vperm.slane %v6716, 3
    %v6726 = vadd.f32 %v6712, %v6718
    %v6727 = vadd.f32 %v6713, %v6719
    %v6728 = vadd.f32 %v6714, %v6720
    %v6729 = vadd.f32 %v6715, %v6721
    %v6730 = vmax.f32 %v6726, 0.0
    %v6731 = vmax.f32 %v6727, 0.0
    %v6732 = vmax.f32 %v6728, 0.0
    %v6733 = vmax.f32 %v6729, 0.0
    %v6734 = vpack.c.bf16 %v6730, %v6730
    %v6735 = vpack.c.bf16 %v6731, %v6731
    %v6736 = vpack.c.bf16 %v6732, %v6732
    %v6737 = vpack.c.bf16 %v6733, %v6733
    %v6738 = vld [vmem:[%s7] sm:$0xf]
    %v6739 = vld [vmem:[%s7 + $0x4] sm:$0xf]
    %v6740 = vld [vmem:[%s7 + $0x8] sm:$0xf]
    %v6741 = vld [vmem:[%s7 + $0xc] sm:$0xf]
    %v6742 = vld [vmem:[%s7 + $0x10] sm:$0xf]
    %v6743 = vld [vmem:[%s7 + $0x14] sm:$0xf]
    %v6744 = vld [vmem:[%s7 + $0x18] sm:$0xf]
    %v6745 = vld [vmem:[%s7 + $0x1c] sm:$0xf]
    %v6746 = vld [vmem:[%s7 + $0x20] sm:$0xf]
    %v6747 = vld [vmem:[%s7 + $0x24] sm:$0xf]
    %v6748 = vld [vmem:[%s7 + $0x28] sm:$0xf]
    %v6749 = vld [vmem:[%s7 + $0x2c] sm:$0xf]
    %v6750 = vld [vmem:[%s7 + $0x30] sm:$0xf]
    %v6751 = vld [vmem:[%s7 + $0x34] sm:$0xf]
    %v6752 = vld [vmem:[%s7 + $0x38] sm:$0xf]
    %v6753 = vld [vmem:[%s7 + $0x3c] sm:$0xf]
    %v6754 = vld [vmem:[%s7 + $0x40] sm:$0xf]
    %v6755 = vld [vmem:[%s7 + $0x44] sm:$0xf]
    %v6756 = vld [vmem:[%s7 + $0x48] sm:$0xf]
    %v6757 = vld [vmem:[%s7 + $0x4c] sm:$0xf]
    %v6758 = vld [vmem:[%s7 + $0x50] sm:$0xf]
    %v6759 = vld [vmem:[%s7 + $0x54] sm:$0xf]
    %v6760 = vld [vmem:[%s7 + $0x58] sm:$0xf]
    %v6761 = vld [vmem:[%s7 + $0x5c] sm:$0xf]
    %v6762 = vld [vmem:[%s7 + $0x60] sm:$0xf]
    %v6763 = vld [vmem:[%s7 + $0x64] sm:$0xf]
    %v6764 = vld [vmem:[%s7 + $0x68] sm:$0xf]
    %v6765 = vld [vmem:[%s7 + $0x6c] sm:$0xf]
    %v6766 = vld [vmem:[%s7 + $0x70] sm:$0xf]
    %v6767 = vld [vmem:[%s7 + $0x74] sm:$0xf]
    %v6768 = vld [vmem:[%s7 + $0x78] sm:$0xf]
    %v6769 = vld [vmem:[%s7 + $0x7c] sm:$0xf]
    %v6770 = vld [vmem:[%s7 + $0x80] sm:$0xf]
    %v6771 = vld [vmem:[%s7 + $0x84] sm:$0xf]
    %v6772 = vld [vmem:[%s7 + $0x88] sm:$0xf]
    %v6773 = vld [vmem:[%s7 + $0x8c] sm:$0xf]
    %v6774 = vld [vmem:[%s7 + $0x90] sm:$0xf]
    %v6775 = vld [vmem:[%s7 + $0x94] sm:$0xf]
    %v6776 = vld [vmem:[%s7 + $0x98] sm:$0xf]
    %v6777 = vld [vmem:[%s7 + $0x9c] sm:$0xf]
    %v6778 = vld [vmem:[%s7 + $0xa0] sm:$0xf]
    %v6779 = vld [vmem:[%s7 + $0xa4] sm:$0xf]
    %v6780 = vld [vmem:[%s7 + $0xa8] sm:$0xf]
    %v6781 = vld [vmem:[%s7 + $0xac] sm:$0xf]
    %v6782 = vld [vmem:[%s7 + $0xb0] sm:$0xf]
    %v6783 = vld [vmem:[%s7 + $0xb4] sm:$0xf]
    %v6784 = vld [vmem:[%s7 + $0xb8] sm:$0xf]
    %v6785 = vld [vmem:[%s7 + $0xbc] sm:$0xf]
    %v6786 = vld [vmem:[%s7 + $0xc0] sm:$0xf]
    %v6787 = vld [vmem:[%s7 + $0xc4] sm:$0xf]
    %v6788 = vld [vmem:[%s7 + $0xc8] sm:$0xf]
    %v6789 = vld [vmem:[%s7 + $0xcc] sm:$0xf]
    %v6790 = vld [vmem:[%s7 + $0xd0] sm:$0xf]
    %v6791 = vld [vmem:[%s7 + $0xd4] sm:$0xf]
    %v6792 = vld [vmem:[%s7 + $0xd8] sm:$0xf]
    %v6793 = vld [vmem:[%s7 + $0xdc] sm:$0xf]
    %v6794 = vld [vmem:[%s7 + $0xe0] sm:$0xf]
    %v6795 = vld [vmem:[%s7 + $0xe4] sm:$0xf]
    %v6796 = vld [vmem:[%s7 + $0xe8] sm:$0xf]
    %v6797 = vld [vmem:[%s7 + $0xec] sm:$0xf]
    %v6798 = vld [vmem:[%s7 + $0xf0] sm:$0xf]
    %v6799 = vld [vmem:[%s7 + $0xf4] sm:$0xf]
    %v6800 = vld [vmem:[%s7 + $0xf8] sm:$0x3]
    %v6801 = vld [vmem:[%s8] sm:$0x1]
    %v6803 = vperm.slane %v6801, 0
    %v6868 = vunpack.c.l.b16 %v6738
    %v6869 = vunpack.c.l.b16 %v6739
    %v6870 = vunpack.c.l.b16 %v6740
    %v6871 = vunpack.c.l.b16 %v6741
    %v6872 = vunpack.c.l.b16 %v6742
    %v6873 = vunpack.c.l.b16 %v6743
    %v6874 = vunpack.c.l.b16 %v6744
    %v6875 = vunpack.c.l.b16 %v6745
    %v6876 = vunpack.c.l.b16 %v6746
    %v6877 = vunpack.c.l.b16 %v6747
    %v6878 = vunpack.c.l.b16 %v6748
    %v6879 = vunpack.c.l.b16 %v6749
    %v6880 = vunpack.c.l.b16 %v6750
    %v6881 = vunpack.c.l.b16 %v6751
    %v6882 = vunpack.c.l.b16 %v6752
    %v6883 = vunpack.c.l.b16 %v6753
    %v6884 = vunpack.c.l.b16 %v6754
    %v6885 = vunpack.c.l.b16 %v6755
    %v6886 = vunpack.c.l.b16 %v6756
    %v6887 = vunpack.c.l.b16 %v6757
    %v6888 = vunpack.c.l.b16 %v6758
    %v6889 = vunpack.c.l.b16 %v6759
    %v6890 = vunpack.c.l.b16 %v6760
    %v6891 = vunpack.c.l.b16 %v6761
    %v6892 = vunpack.c.l.b16 %v6762
    %v6893 = vunpack.c.l.b16 %v6763
    %v6894 = vunpack.c.l.b16 %v6764
    %v6895 = vunpack.c.l.b16 %v6765
    %v6896 = vunpack.c.l.b16 %v6766
    %v6897 = vunpack.c.l.b16 %v6767
    %v6898 = vunpack.c.l.b16 %v6768
    %v6899 = vunpack.c.l.b16 %v6769
    %v6900 = vunpack.c.l.b16 %v6770
    %v6901 = vunpack.c.l.b16 %v6771
    %v6902 = vunpack.c.l.b16 %v6772
    %v6903 = vunpack.c.l.b16 %v6773
    %v6904 = vunpack.c.l.b16 %v6774
    %v6905 = vunpack.c.l.b16 %v6775
    %v6906 = vunpack.c.l.b16 %v6776
    %v6907 = vunpack.c.l.b16 %v6777
    %v6908 = vunpack.c.l.b16 %v6778
    %v6909 = vunpack.c.l.b16 %v6779
    %v6910 = vunpack.c.l.b16 %v6780
    %v6911 = vunpack.c.l.b16 %v6781
    %v6912 = vunpack.c.l.b16 %v6782
    %v6913 = vunpack.c.l.b16 %v6783
    %v6914 = vunpack.c.l.b16 %v6784
    %v6915 = vunpack.c.l.b16 %v6785
    %v6916 = vunpack.c.l.b16 %v6786
    %v6917 = vunpack.c.l.b16 %v6787
    %v6918 = vunpack.c.l.b16 %v6788
    %v6919 = vunpack.c.l.b16 %v6789
    %v6920 = vunpack.c.l.b16 %v6790
    %v6921 = vunpack.c.l.b16 %v6791
    %v6922 = vunpack.c.l.b16 %v6792
    %v6923 = vunpack.c.l.b16 %v6793
    %v6924 = vunpack.c.l.b16 %v6794
    %v6925 = vunpack.c.l.b16 %v6795
    %v6926 = vunpack.c.l.b16 %v6796
    %v6927 = vunpack.c.l.b16 %v6797
    %v6928 = vunpack.c.l.b16 %v6798
    %v6929 = vunpack.c.l.b16 %v6799
    %v6930 = vunpack.c.l.b16 %v6800
    %v6931 = vpack.c.b16 %v6869, %v6868
    %v6932 = vpack.c.b16 %v6871, %v6870
    %v6933 = vpack.c.b16 %v6873, %v6872
    %v6934 = vpack.c.b16 %v6875, %v6874
    %v6935 = vpack.c.b16 %v6877, %v6876
    %v6936 = vpack.c.b16 %v6879, %v6878
    %v6937 = vpack.c.b16 %v6881, %v6880
    %v6938 = vpack.c.b16 %v6883, %v6882
    %v6939 = vpack.c.b16 %v6885, %v6884
    %v6940 = vpack.c.b16 %v6887, %v6886
    %v6941 = vpack.c.b16 %v6889, %v6888
    %v6942 = vpack.c.b16 %v6891, %v6890
    %v6943 = vpack.c.b16 %v6893, %v6892
    %v6944 = vpack.c.b16 %v6895, %v6894
    %v6945 = vpack.c.b16 %v6897, %v6896
    %v6946 = vpack.c.b16 %v6899, %v6898
    %v6947 = vpack.c.b16 %v6901, %v6900
    %v6948 = vpack.c.b16 %v6903, %v6902
    %v6949 = vpack.c.b16 %v6905, %v6904
    %v6950 = vpack.c.b16 %v6907, %v6906
    %v6951 = vpack.c.b16 %v6909, %v6908
    %v6952 = vpack.c.b16 %v6911, %v6910
    %v6953 = vpack.c.b16 %v6913, %v6912
    %v6954 = vpack.c.b16 %v6915, %v6914
    %v6955 = vpack.c.b16 %v6917, %v6916
    %v6956 = vpack.c.b16 %v6919, %v6918
    %v6957 = vpack.c.b16 %v6921, %v6920
    %v6958 = vpack.c.b16 %v6923, %v6922
    %v6959 = vpack.c.b16 %v6925, %v6924
    %v6960 = vpack.c.b16 %v6927, %v6926
    %v6961 = vpack.c.b16 %v6929, %v6928
    %v6962 = vpack.c.b16 %v6930, %v6930
    %vm6994 = vcmask 949248
    %v6996 = vsel %vm6994, %v6737, 0
    %vm6998 = vcmask 1041408
    %v7000 = vsel %vm6998, %v6962, 0
    %7002 = vmatpush.bf16.msra.mxu0 %v6938
    %7003 = vmatpush.bf16.msra.mxu0 %v6937
    %7004 = vmatpush.bf16.msra.mxu0 %v6936
    %7005 = vmatpush.bf16.msra.mxu0 %v6935
    %7006 = vmatpush.bf16.msra.mxu0 %v6934
    %7007 = vmatpush.bf16.msra.mxu0 %v6933
    %7008 = vmatpush.bf16.msra.mxu0 %v6932
    %7009 = vmatpush.bf16.msra.mxu0 %v6931
    %7010 = vmatmul.bf16.gmra.mxu0 %v6734
    %v7011 = vpop.f32.mrf.mxu0
    %v7012 = vadd.f32 %v6803, %v7011
    %v7013 = vpop.f32.mrf.mxu0
    %7014 = vdwg.mxu0
    %7015 = vmatpush.bf16.msra.mxu0 %v6946
    %7016 = vmatpush.bf16.msra.mxu0 %v6945
    %7017 = vmatpush.bf16.msra.mxu0 %v6944
    %7018 = vmatpush.bf16.msra.mxu0 %v6943
    %7019 = vmatpush.bf16.msra.mxu0 %v6942
    %7020 = vmatpush.bf16.msra.mxu0 %v6941
    %7021 = vmatpush.bf16.msra.mxu0 %v6940
    %7022 = vmatpush.bf16.msra.mxu0 %v6939
    %7023 = vmatmul.bf16.gmra.mxu0 %v6735
    %v7024 = vpop.f32.mrf.mxu0
    %v7025 = vadd.f32 %v7012, %v7024
    %v7026 = vpop.f32.mrf.mxu0
    %7027 = vdwg.mxu0
    %7028 = vmatpush.bf16.msra.mxu0 %v6954
    %7029 = vmatpush.bf16.msra.mxu0 %v6953
    %7030 = vmatpush.bf16.msra.mxu0 %v6952
    %7031 = vmatpush.bf16.msra.mxu0 %v6951
    %7032 = vmatpush.bf16.msra.mxu0 %v6950
    %7033 = vmatpush.bf16.msra.mxu0 %v6949
    %7034 = vmatpush.bf16.msra.mxu0 %v6948
    %7035 = vmatpush.bf16.msra.mxu0 %v6947
    %7036 = vmatmul.bf16.gmra.mxu0 %v6736
    %v7037 = vpop.f32.mrf.mxu0
    %v7038 = vadd.f32 %v7025, %v7037
    %v7039 = vpop.f32.mrf.mxu0
    %7040 = vdwg.mxu0
    %7041 = vmatpush.bf16.msra.mxu0 %v7000
    %7042 = vmatpush.bf16.msra.mxu0 %v6961
    %7043 = vmatpush.bf16.msra.mxu0 %v6960
    %7044 = vmatpush.bf16.msra.mxu0 %v6959
    %7045 = vmatpush.bf16.msra.mxu0 %v6958
    %7046 = vmatpush.bf16.msra.mxu0 %v6957
    %7047 = vmatpush.bf16.msra.mxu0 %v6956
    %7048 = vmatpush.bf16.msra.mxu0 %v6955
    %7049 = vmatmul.bf16.gmra.mxu0 %v6996
    %v7050 = vpop.f32.mrf.mxu0
    %v7051 = vadd.f32 %v7038, %v7050
    %v7052 = vpop.f32.mrf.mxu0
    %7053 = vdwg.mxu0
    %vm7054 = vcmask 80896
    %v7055 = vsel %vm7054, %v7051, -inf
    %7056 = vmax.xlane.f32.xlu0 %v7055
    %v7057 = vpop.xlane.xlu0 %7056
    %v7058 = vsub.f32 %v7051, %v7057
    %v7059 = vmul.f32 %v7058, 1.442695
    %v7060 = vpow.pop %v7059
    %v7061 = vsel %vm7054, %v7060, 0.0
    %7062 = vadd.xlane.f32.xlu0 %v7061
    %v7063 = vpop.xlane.xlu0 %7062
    %v7064 = vlog2.pop %v7063
    %v7065 = vmul.f32 %v7064, 0.6931472
    %v7066 = vadd.f32 %v7057, %v7065
    %v7067 = vsub.f32 %v7051, %v7066
    %7068 = vst.msk [vmem:[%s9] sm:$0xff] %vm7054, %v7067
    // Predicated region
    $region42: #{convnet_forward.1} parent=1 // pred_check
      _
    $region43: #{convnet_forward.1} parent=1 // pred_check_branch
      %7070 = sbr.rel (0) target = $region45
    $region44: #{convnet_forward.1} parent=1 // pred_region
      _
    $region45: #{convnet_forward.1} parent=1 // pred_fallthru
      _
    // Predicated region
    $region46: #{convnet_forward.1} parent=1 // pred_check
      _
    $region47: #{convnet_forward.1} parent=1 // pred_check_branch
      %7072 = sbr.rel (0) target = $region49
    $region48: #{convnet_forward.1} parent=1 // pred_region
      _
    $region49: #{convnet_forward.1} parent=1 // pred_fallthru
      _
    %7073 = vsyncpa [#allocation3], 1

</llo_original>
